<compile_context>
chip_gen: v7x
topology: tpu7x:2x2x1
jax: 0.10.0
libtpu: 0.0.40
codegen_flags: <defaults>
</compile_context>

<pallas_src>
import functools

import jax
import jax.numpy as jnp
from jax.experimental import pallas as pl
from jax.experimental.pallas import tpu as pltpu

LN_EPS = 1e-5          # nn.LayerNorm default
NEG_INF_BIAS = -1e9    # additive mask value
KV_BLOCK = 512         # key/value block for online-softmax attention
ROW_TARGET = 256       # packed matmul rows per grid step (MXU M-dim target)


# ---------------------------------------------------------------------------
# one-time capability / hardware helpers (run OUTSIDE jit)
# ---------------------------------------------------------------------------
@functools.lru_cache(maxsize=None)
def _buffered_weights_supported():
  """One-time probe: does this jax/Mosaic accept pipeline_mode=pl.Buffered(1)?

  Resident weights have a constant index_map, so single-buffering them halves
  weight VMEM (mandatory headroom on v7x's 64 MiB).  The result is decided
  once; the real kernel is then built without any try/except around it.
  """
  if not hasattr(pl, "Buffered"):
    return False

  def _probe(x_ref, o_ref):
    o_ref[...] = x_ref[...]

  try:
    x = jnp.zeros((8, 128), jnp.float32)
    out = pl.pallas_call(
        _probe,
        out_shape=jax.ShapeDtypeStruct((16, 128), jnp.float32),
        grid=(2,),
        in_specs=[pl.BlockSpec((8, 128), lambda i: (0, 0),
                               pipeline_mode=pl.Buffered(1))],
        out_specs=pl.BlockSpec((8, 128), lambda i: (i, 0)),
    )(x)
    jax.block_until_ready(out)
    return True
  except Exception:   # narrow in effect: probe kernel only, decided once
    return False


def _vmem_limit_bytes():
  """Generation-dependent VMEM budget: ~75% of physical, capped at 100 MiB.

  -> ~48 MiB on 64 MiB parts (v7x), ~96 MiB on 128 MiB parts (v5e/v6e).
  """
  cap = 64 * 1024 * 1024
  try:
    info = pltpu.get_tpu_info()
    cap = int(getattr(info, "vmem_capacity_bytes", cap) or cap)
  except Exception:
    pass
  return min((cap * 3) // 4, 100 * 1024 * 1024)


def _choose_batch_block(batch, seq, row_target=ROW_TARGET, row_cap=2048):
  """Smallest divisor of `batch` whose packed row count reaches row_target.

  Packing batch rows gives the dense matmuls an M-dim of Bblk*seq (fills the
  256-wide MXU on v6e/v7x, 128 on v5e) while keeping as many grid steps as
  possible (megacore parallelism on v7x) and bounding the activation block.
  """
  chosen = 1
  for d in range(1, batch + 1):
    if batch % d != 0:
      continue
    if d > 1 and d * seq > row_cap:
      break
    chosen = d
    if d * seq >= row_target:
      break
  return chosen


# ---------------------------------------------------------------------------
# kernel
# ---------------------------------------------------------------------------
def _decoder_layer_kernel(
    dec_ref, enc_ref, pad_bias_ref, causal_ref,
    sa_wqkv, sa_bqkv, sa_wo, sa_bo,
    ca_wq, ca_bq, ca_wkv, ca_bkv, ca_wo, ca_bo,
    ln1_g, ln1_b, ln2_g, ln2_b,
    fc1_w, fc1_b, fc2_w, fc2_b,
    ln3_g, ln3_b,
    out_ref, attn_scratch,
    *, num_heads, kv_block):
  Bblk, S, H = dec_ref.shape
  T = enc_ref.shape[1]
  hd = H // num_heads
  rows = Bblk * S

  dec16 = dec_ref[...].reshape(rows, H)           # bf16 (Bblk*S, H)
  enc16 = enc_ref[...].reshape(Bblk * T, H)       # bf16 (Bblk*T, H)
  x = dec16.astype(jnp.float32)                   # f32 residual

  def linear(v16, w_ref, b_ref):
    # bf16 x bf16 MXU matmul, f32 accumulation + f32 bias.
    return jnp.dot(v16, w_ref[...],
                   preferred_element_type=jnp.float32) + b_ref[...]

  def layer_norm(v, g_ref, b_ref):
    # Single-pass statistics: E[x] and E[x^2] together.
    mu = jnp.mean(v, axis=-1, keepdims=True)
    var = jnp.mean(v * v, axis=-1, keepdims=True) - mu * mu
    return (v - mu) * jax.lax.rsqrt(var + LN_EPS) * g_ref[...] + b_ref[...]

  def attention(q16, k16, v16, bias_fn, q_row0, kv_row0, kv_len):
    """Online-softmax attention for one batch element, all heads.

    Each head's (S, hd) output is written into `attn_scratch` at its static
    lane offset (no concatenate / lane shuffle, short live ranges).
    bias_fn(k0, k1) returns an additive f32 bias broadcastable to (S, k1-k0).
    """
    qb = q16[q_row0:q_row0 + S, :]
    kb = k16[kv_row0:kv_row0 + kv_len, :]
    vb = v16[kv_row0:kv_row0 + kv_len, :]
    n_kb = -(-kv_len // kv_block)
    for h in range(num_heads):
      hs = slice(h * hd, (h + 1) * hd)
      qh = qb[:, hs]
      m = jnp.full((S, 1), -jnp.inf, jnp.float32)
      l = jnp.zeros((S, 1), jnp.float32)
      acc = jnp.zeros((S, hd), jnp.float32)
      for kbi in range(n_kb):                      # key-block loop
        k0 = kbi * kv_block
        k1 = min(kv_len, k0 + kv_block)
        s = jax.lax.dot_general(qh, kb[k0:k1, hs],
                                (((1,), (1,)), ((), ())),
                                preferred_element_type=jnp.float32)
        s = s + bias_fn(k0, k1)
        m_new = jnp.maximum(m, jnp.max(s, axis=-1, keepdims=True))
        alpha = jnp.exp(m - m_new)
        e = jnp.exp(s - m_new)
        l = alpha * l + jnp.sum(e, axis=-1, keepdims=True)
        acc = alpha * acc + jnp.dot(e.astype(jnp.bfloat16), vb[k0:k1, hs],
                                    preferred_element_type=jnp.float32)
        m = m_new
      o = acc * pl.reciprocal(l, approx=True)
      attn_scratch[q_row0:q_row0 + S, hs] = o

  # ---- self attention (causal, no key padding) + residual + LN ------------
  # 1/sqrt(head_dim) is pre-folded into the Q columns of sa_wqkv (wrapper).
  qkv16 = linear(dec16, sa_wqkv, sa_bqkv).astype(jnp.bfloat16)      # (rows, 3H)
  q16, k16, v16 = qkv16[:, :H], qkv16[:, H:2 * H], qkv16[:, 2 * H:]
  causal = causal_ref[...]                                          # (S, S) f32
  for b in range(Bblk):
    attention(q16, k16, v16, lambda k0, k1: causal[:, k0:k1],
              b * S, b * S, S)
  attn16 = attn_scratch[...].astype(jnp.bfloat16)
  out = layer_norm(x + linear(attn16, sa_wo, sa_bo), ln1_g, ln1_b)

  # ---- cross attention (encoder K/V, key-padding bias) + residual + LN ----
  res2 = out
  q16 = linear(out.astype(jnp.bfloat16), ca_wq, ca_bq).astype(jnp.bfloat16)
  kv16 = linear(enc16, ca_wkv, ca_bkv).astype(jnp.bfloat16)         # (Bblk*T, 2H)
  k16, v16 = kv16[:, :H], kv16[:, H:]
  for b in range(Bblk):
    pad_b = pad_bias_ref[b]                                         # (1, T) f32
    attention(q16, k16, v16,
              lambda k0, k1, pb=pad_b: pb[:, k0:k1],
              b * S, b * T, T)
  attn16 = attn_scratch[...].astype(jnp.bfloat16)
  out = layer_norm(res2 + linear(attn16, ca_wo, ca_bo), ln2_g, ln2_b)

  # ---- position-wise FFN: Linear -> ReLU -> Linear ------------------------
  h1 = jnp.maximum(linear(out.astype(jnp.bfloat16), fc1_w, fc1_b), 0.0)
  h1 = h1.astype(jnp.bfloat16)          # shrink the (rows, fcn_hidden) buffer
  out = linear(h1, fc2_w, fc2_b)
  # dropout(p=0.0) is the identity.
  # Reference quirk: residual_3 = fcn(out)  ->  LN sees 2 * fcn_out.
  out = layer_norm(out + out, ln3_g, ln3_b)

  out_ref[...] = out.astype(out_ref.dtype).reshape(Bblk, S, H)


# ---------------------------------------------------------------------------
# wrapper
# ---------------------------------------------------------------------------
def transformer_decoder_layer(dec, enc, key_padding_mask, params, *,
                              num_heads, single_buffer_weights):
  """Fused decoder layer.

  dec: (B, S, H), enc: (B, T, H), key_padding_mask: (B, T) with 1.0/True
  marking PAD encoder positions.  Returns (B, S, H) in dec.dtype.
  """
  B, S, H = dec.shape
  T = enc.shape[1]
  assert H % num_heads == 0
  hd = H // num_heads

  Bblk = _choose_batch_block(B, S)
  grid = (B // Bblk,)

  # Fold the 1/sqrt(hd) attention scale into the Q projections (removes an
  # (rows, H) VPU multiply per attention call; done once at trace time).
  scale = float(hd) ** -0.5
  params = list(params)

  def _fold_scale(w, b, cols):
    w32 = w.astype(jnp.float32).at[:, cols].multiply(scale)
    b32 = b.astype(jnp.float32).at[:, cols].multiply(scale)
    return w32.astype(w.dtype), b32.astype(b.dtype)

  params[0], params[1] = _fold_scale(params[0], params[1], slice(0, H))  # sa_wqkv/bqkv (Q cols)
  params[4], params[5] = _fold_scale(params[4], params[5], slice(0, H))  # ca_wq/bq

  # bf16 activations across the pallas_call boundary (halves activation DMA).
  dec16 = dec.astype(jnp.bfloat16)
  enc16 = enc.astype(jnp.bfloat16)
  # Additive key-padding bias, precomputed once in the wrapper.
  pad_bias = (key_padding_mask.astype(jnp.float32)
              * jnp.float32(NEG_INF_BIAS)).reshape(B, 1, T)
  # Causal additive bias, hoisted out of the kernel (resident input).
  idx = jnp.arange(S)
  causal = jnp.where(idx[None, :] <= idx[:, None],
                     0.0, NEG_INF_BIAS).astype(jnp.float32)

  wmode = pl.Buffered(1) if single_buffer_weights else None

  def resident_spec(shape):
    # Constant index_map -> block stays resident across the whole grid.
    if wmode is not None:
      return pl.BlockSpec(shape, lambda i: (0, 0), pipeline_mode=wmode)
    return pl.BlockSpec(shape, lambda i: (0, 0))

  in_specs = [
      pl.BlockSpec((Bblk, S, H), lambda i: (i, 0, 0)),   # decoder block (bf16)
      pl.BlockSpec((Bblk, T, H), lambda i: (i, 0, 0)),   # encoder block (bf16)
      pl.BlockSpec((Bblk, 1, T), lambda i: (i, 0, 0)),   # key-padding bias
      resident_spec((S, S)),                             # causal bias
  ] + [resident_spec(p.shape) for p in params]

  kernel = functools.partial(_decoder_layer_kernel,
                             num_heads=num_heads, kv_block=KV_BLOCK)

  out = pl.pallas_call(
      kernel,
      out_shape=jax.ShapeDtypeStruct((B, S, H), dec16.dtype),
      grid=grid,
      in_specs=in_specs,
      out_specs=pl.BlockSpec((Bblk, S, H), lambda i: (i, 0, 0)),
      scratch_shapes=[pltpu.VMEM((Bblk * S, H), jnp.float32)],  # attention out
      compiler_params=pltpu.CompilerParams(
          dimension_semantics=("parallel",),
          vmem_limit_bytes=_vmem_limit_bytes()),
  )(dec16, enc16, pad_bias, causal, *params)
  return out


# ---------------------------------------------------------------------------
# synthetic params & pure-JAX reference
# ---------------------------------------------------------------------------
def init_params(key, hidden, num_heads, fcn_hidden):
  """Deterministic synthetic parameters (fused-QKV layout, bf16 matmul weights)."""
  del num_heads
  ks = iter(jax.random.split(key, 32))
  f32, bf16 = jnp.float32, jnp.bfloat16

  def w(i, o):
    return (0.02 * jax.random.normal(next(ks), (i, o), f32)).astype(bf16)

  def b(o):
    return 0.01 * jax.random.normal(next(ks), (1, o), f32)

  params = [
      w(hidden, 3 * hidden), b(3 * hidden),            # self-attn fused QKV
      w(hidden, hidden), b(hidden),                    # self-attn out proj
      w(hidden, hidden), b(hidden),                    # cross-attn Q
      w(hidden, 2 * hidden), b(2 * hidden),            # cross-attn fused KV
      w(hidden, hidden), b(hidden),                    # cross-attn out proj
      jnp.ones((1, hidden), f32), jnp.zeros((1, hidden), f32),  # self_att_layer_norm
      jnp.ones((1, hidden), f32), jnp.zeros((1, hidden), f32),  # cross_att_layer_norm
      w(hidden, fcn_hidden), b(fcn_hidden),            # fcn[0]
      w(fcn_hidden, hidden), b(hidden),                # fcn[2]
      jnp.ones((1, hidden), f32), jnp.zeros((1, hidden), f32),  # fcn_layer_norm
  ]
  return params


def reference(dec, enc, kpm, params, num_heads):
  """Pure-JAX f32 reference with the exact same forward semantics."""
  (sa_wqkv, sa_bqkv, sa_wo, sa_bo,
   ca_wq, ca_bq, ca_wkv, ca_bkv, ca_wo, ca_bo,
   ln1_g, ln1_b, ln2_g, ln2_b,
   fc1_w, fc1_b, fc2_w, fc2_b,
   ln3_g, ln3_b) = [p.astype(jnp.float32) for p in params]
  B, S, H = dec.shape
  T = enc.shape[1]
  hd = H // num_heads

  def ln(x, g, b_):
    mu = x.mean(-1, keepdims=True)
    var = ((x - mu) ** 2).mean(-1, keepdims=True)
    return (x - mu) / jnp.sqrt(var + LN_EPS) * g + b_

  def attn(q, k, v, bias):
    s_len, t_len = q.shape[1], k.shape[1]
    qh = q.reshape(B, s_len, num_heads, hd)
    kh = k.reshape(B, t_len, num_heads, hd)
    vh = v.reshape(B, t_len, num_heads, hd)
    scores = jnp.einsum('bshd,bthd->bhst', qh, kh) / jnp.sqrt(jnp.float32(hd))
    scores = scores + bias
    p = jax.nn.softmax(scores, axis=-1)
    return jnp.einsum('bhst,bthd->bshd', p, vh).reshape(B, s_len, H)

  causal = jnp.where(jnp.arange(S)[None, :] <= jnp.arange(S)[:, None], 0.0, -1e9)

  qkv = dec @ sa_wqkv + sa_bqkv
  q, k, v = qkv[..., :H], qkv[..., H:2 * H], qkv[..., 2 * H:]
  out = attn(q, k, v, causal[None, None]) @ sa_wo + sa_bo
  out = ln(dec + out, ln1_g, ln1_b)

  res2 = out
  q = out @ ca_wq + ca_bq
  kv = enc @ ca_wkv + ca_bkv
  k, v = kv[..., :H], kv[..., H:]
  pad_bias = (kpm.astype(jnp.float32) * -1e9)[:, None, None, :]
  out = attn(q, k, v, pad_bias) @ ca_wo + ca_bo
  out = ln(out + res2, ln2_g, ln2_b)

  h = jnp.maximum(out @ fc1_w + fc1_b, 0.0)
  out = h @ fc2_w + fc2_b
  out = ln(out + out, ln3_g, ln3_b)
  return out


if __name__ == "__main__":
  B, S, T = 2, 8, 8
  hidden, num_heads, fcn_hidden = 32, 4, 64

  key = jax.random.PRNGKey(0)
  k_dec, k_enc, k_par = jax.random.split(key, 3)
  dec = jax.random.normal(k_dec, (B, S, hidden), jnp.float32)
  enc = jax.random.normal(k_enc, (B, T, hidden), jnp.float32)
  # key_padding_mask: 1.0 (True) marks PAD encoder positions; pad the last two
  # positions of batch element 1.
  kpm = jnp.zeros((B, T), jnp.float32).at[1, T - 2:].set(1.0)

  params = init_params(k_par, hidden, num_heads, fcn_hidden)

  # One-time capability probe (outside jit), then a jitted wrapper with no
  # per-call host sync.
  sbw = _buffered_weights_supported()
  layer_fn = jax.jit(functools.partial(transformer_decoder_layer,
                                       num_heads=num_heads,
                                       single_buffer_weights=sbw))

  out = jax.block_until_ready(layer_fn(dec, enc, kpm, params))

  # f32 reference consuming the same bf16-quantized activations the kernel sees.
  dec_q = dec.astype(jnp.bfloat16).astype(jnp.float32)
  enc_q = enc.astype(jnp.bfloat16).astype(jnp.float32)
  with jax.default_matmul_precision("highest"):
    ref = jax.block_until_ready(reference(dec_q, enc_q, kpm, params, num_heads))

  assert out.shape == (B, S, hidden)
  out32 = out.astype(jnp.float32)
  max_err = float(jnp.max(jnp.abs(out32 - ref)))
  # bf16 matmul inputs + bf16 activation I/O vs. an f32 reference.
  assert jnp.allclose(out32, ref, atol=6e-2, rtol=6e-2), f"max_err={max_err}"
  print("KERNEL_OK")
</pallas_src>

<mosaic_0001>
module attributes {stable_mosaic.version = 11 : i64} {
  func.func @_probe(%arg0: i32, %arg1: memref<8x128xf32, #tpu.memory_space<vmem>>, %arg2: memref<8x128xf32, #tpu.memory_space<vmem>>) attributes {dimension_semantics = [#tpu.dimension_semantics<arbitrary>], iteration_bounds = array<i64: 2>, scalar_prefetch = 0 : i64, scratch_operands = 0 : i64, tpu.core_type = #tpu.core_type<tc>, window_params = [{pipeline_mode = #tpu.pipeline_mode<synchronous>, transform_indices = @transform_0, window_bounds = array<i64: 8, 128>}, {transform_indices = @transform_1, window_bounds = array<i64: 8, 128>}]} {
    %c0 = arith.constant 0 : index
    %c0_0 = arith.constant 0 : index
    %0 = vector.load %arg1[%c0, %c0_0] : memref<8x128xf32, #tpu.memory_space<vmem>>, vector<8x128xf32>
    %c0_1 = arith.constant 0 : index
    %c0_2 = arith.constant 0 : index
    %1 = vector.load %arg2[%c0_1, %c0_2] : memref<8x128xf32, #tpu.memory_space<vmem>>, vector<8x128xf32>
    tpu.vector_store %arg2[%c0_1, %c0_2], %0 {strides = array<i32>} : memref<8x128xf32, #tpu.memory_space<vmem>>, vector<8x128xf32>,
    return
  }
  func.func @transform_0(%arg0: i32) -> (i32, i32) {
    %c0_i32 = arith.constant 0 : i32
    %c0_i32_0 = arith.constant 0 : i32
    %c0_i32_1 = arith.constant 0 : i32
    return %c0_i32, %c0_i32_0 : i32, i32
  }
  func.func @transform_1(%arg0: i32) -> (i32, i32) {
    %c0_i32 = arith.constant 0 : i32
    %c0_i32_0 = arith.constant 0 : i32
    return %arg0, %c0_i32 : i32, i32
  }
}

module attributes {stable_mosaic.version = 11 : i64} {
  func.func @_decoder_layer_kernel(%arg0: i32, %arg1: memref<2x8x32xbf16, #tpu.memory_space<vmem>>, %arg2: memref<2x8x32xbf16, #tpu.memory_space<vmem>>, %arg3: memref<2x1x8xf32, #tpu.memory_space<vmem>>, %arg4: memref<8x8xf32, #tpu.memory_space<vmem>>, %arg5: memref<32x96xbf16, #tpu.memory_space<vmem>>, %arg6: memref<1x96xf32, #tpu.memory_space<vmem>>, %arg7: memref<32x32xbf16, #tpu.memory_space<vmem>>, %arg8: memref<1x32xf32, #tpu.memory_space<vmem>>, %arg9: memref<32x32xbf16, #tpu.memory_space<vmem>>, %arg10: memref<1x32xf32, #tpu.memory_space<vmem>>, %arg11: memref<32x64xbf16, #tpu.memory_space<vmem>>, %arg12: memref<1x64xf32, #tpu.memory_space<vmem>>, %arg13: memref<32x32xbf16, #tpu.memory_space<vmem>>, %arg14: memref<1x32xf32, #tpu.memory_space<vmem>>, %arg15: memref<1x32xf32, #tpu.memory_space<vmem>>, %arg16: memref<1x32xf32, #tpu.memory_space<vmem>>, %arg17: memref<1x32xf32, #tpu.memory_space<vmem>>, %arg18: memref<1x32xf32, #tpu.memory_space<vmem>>, %arg19: memref<32x64xbf16, #tpu.memory_space<vmem>>, %arg20: memref<1x64xf32, #tpu.memory_space<vmem>>, %arg21: memref<64x32xbf16, #tpu.memory_space<vmem>>, %arg22: memref<1x32xf32, #tpu.memory_space<vmem>>, %arg23: memref<1x32xf32, #tpu.memory_space<vmem>>, %arg24: memref<1x32xf32, #tpu.memory_space<vmem>>, %arg25: memref<2x8x32xbf16, #tpu.memory_space<vmem>>, %arg26: memref<16x32xf32, #tpu.memory_space<vmem>>) attributes {dimension_semantics = [#tpu.dimension_semantics<parallel>], iteration_bounds = array<i64: 1>, scalar_prefetch = 0 : i64, scratch_operands = 1 : i64, tpu.core_type = #tpu.core_type<tc>, window_params = [{transform_indices = @transform_0, window_bounds = array<i64: 2, 8, 32>}, {transform_indices = @transform_1, window_bounds = array<i64: 2, 8, 32>}, {transform_indices = @transform_2, window_bounds = array<i64: 2, 1, 8>}, {pipeline_mode = #tpu.pipeline_mode<synchronous>, transform_indices = @transform_3, window_bounds = array<i64: 8, 8>}, {pipeline_mode = #tpu.pipeline_mode<synchronous>, transform_indices = @transform_4, window_bounds = array<i64: 32, 96>}, {pipeline_mode = #tpu.pipeline_mode<synchronous>, transform_indices = @transform_5, window_bounds = array<i64: 1, 96>}, {pipeline_mode = #tpu.pipeline_mode<synchronous>, transform_indices = @transform_6, window_bounds = array<i64: 32, 32>}, {pipeline_mode = #tpu.pipeline_mode<synchronous>, transform_indices = @transform_7, window_bounds = array<i64: 1, 32>}, {pipeline_mode = #tpu.pipeline_mode<synchronous>, transform_indices = @transform_8, window_bounds = array<i64: 32, 32>}, {pipeline_mode = #tpu.pipeline_mode<synchronous>, transform_indices = @transform_9, window_bounds = array<i64: 1, 32>}, {pipeline_mode = #tpu.pipeline_mode<synchronous>, transform_indices = @transform_10, window_bounds = array<i64: 32, 64>}, {pipeline_mode = #tpu.pipeline_mode<synchronous>, transform_indices = @transform_11, window_bounds = array<i64: 1, 64>}, {pipeline_mode = #tpu.pipeline_mode<synchronous>, transform_indices = @transform_12, window_bounds = array<i64: 32, 32>}, {pipeline_mode = #tpu.pipeline_mode<synchronous>, transform_indices = @transform_13, window_bounds = array<i64: 1, 32>}, {pipeline_mode = #tpu.pipeline_mode<synchronous>, transform_indices = @transform_14, window_bounds = array<i64: 1, 32>}, {pipeline_mode = #tpu.pipeline_mode<synchronous>, transform_indices = @transform_15, window_bounds = array<i64: 1, 32>}, {pipeline_mode = #tpu.pipeline_mode<synchronous>, transform_indices = @transform_16, window_bounds = array<i64: 1, 32>}, {pipeline_mode = #tpu.pipeline_mode<synchronous>, transform_indices = @transform_17, window_bounds = array<i64: 1, 32>}, {pipeline_mode = #tpu.pipeline_mode<synchronous>, transform_indices = @transform_18, window_bounds = array<i64: 32, 64>}, {pipeline_mode = #tpu.pipeline_mode<synchronous>, transform_indices = @transform_19, window_bounds = array<i64: 1, 64>}, {pipeline_mode = #tpu.pipeline_mode<synchronous>, transform_indices = @transform_20, window_bounds = array<i64: 64, 32>}, {pipeline_mode = #tpu.pipeline_mode<synchronous>, transform_indices = @transform_21, window_bounds = array<i64: 1, 32>}, {pipeline_mode = #tpu.pipeline_mode<synchronous>, transform_indices = @transform_22, window_bounds = array<i64: 1, 32>}, {pipeline_mode = #tpu.pipeline_mode<synchronous>, transform_indices = @transform_23, window_bounds = array<i64: 1, 32>}, {transform_indices = @transform_24, window_bounds = array<i64: 2, 8, 32>}]} {
    %c0 = arith.constant 0 : index
    %c0_0 = arith.constant 0 : index
    %c0_1 = arith.constant 0 : index
    %0 = vector.load %arg1[%c0, %c0_0, %c0_1] : memref<2x8x32xbf16, #tpu.memory_space<vmem>>, vector<2x8x32xbf16>
    %1 = vector.shape_cast %0 : vector<2x8x32xbf16> to vector<16x32xbf16>
    %c0_2 = arith.constant 0 : index
    %c0_3 = arith.constant 0 : index
    %c0_4 = arith.constant 0 : index
    %2 = vector.load %arg2[%c0_2, %c0_3, %c0_4] : memref<2x8x32xbf16, #tpu.memory_space<vmem>>, vector<2x8x32xbf16>
    %3 = vector.shape_cast %2 : vector<2x8x32xbf16> to vector<16x32xbf16>
    %4 = arith.extf %1 : vector<16x32xbf16> to vector<16x32xf32>
    %c0_5 = arith.constant 0 : index
    %c0_6 = arith.constant 0 : index
    %5 = vector.load %arg5[%c0_5, %c0_6] : memref<32x96xbf16, #tpu.memory_space<vmem>>, vector<32x96xbf16>
    %cst = arith.constant dense<0.000000e+00> : vector<16x96xf32>
    %6 = tpu.matmul %1, %5, %cst {dimension_numbers = #tpu.dot_dimension_numbers<[1], [0], [0], [1], [0, 0, 1, 1], [], []>} : vector<16x32xbf16>, vector<32x96xbf16>, vector<16x96xf32> -> vector<16x96xf32>
    %c0_7 = arith.constant 0 : index
    %c0_8 = arith.constant 0 : index
    %7 = vector.load %arg6[%c0_7, %c0_8] : memref<1x96xf32, #tpu.memory_space<vmem>>, vector<1x96xf32>
    %8 = vector.broadcast %7 : vector<1x96xf32> to vector<16x96xf32>
    %9 = arith.addf %6, %8 : vector<16x96xf32>
    %10 = arith.truncf %9 : vector<16x96xf32> to vector<16x96xbf16>
    %11 = vector.extract_strided_slice %10 {offsets = [0, 0], sizes = [16, 32], strides = [1, 1]} : vector<16x96xbf16> to vector<16x32xbf16>
    %12 = vector.extract_strided_slice %10 {offsets = [0, 32], sizes = [16, 32], strides = [1, 1]} : vector<16x96xbf16> to vector<16x32xbf16>
    %13 = vector.extract_strided_slice %10 {offsets = [0, 64], sizes = [16, 32], strides = [1, 1]} : vector<16x96xbf16> to vector<16x32xbf16>
    %c0_9 = arith.constant 0 : index
    %c0_10 = arith.constant 0 : index
    %14 = vector.load %arg4[%c0_9, %c0_10] : memref<8x8xf32, #tpu.memory_space<vmem>>, vector<8x8xf32>
    %15 = vector.extract_strided_slice %11 {offsets = [0, 0], sizes = [8, 32], strides = [1, 1]} : vector<16x32xbf16> to vector<8x32xbf16>
    %16 = vector.extract_strided_slice %12 {offsets = [0, 0], sizes = [8, 32], strides = [1, 1]} : vector<16x32xbf16> to vector<8x32xbf16>
    %17 = vector.extract_strided_slice %13 {offsets = [0, 0], sizes = [8, 32], strides = [1, 1]} : vector<16x32xbf16> to vector<8x32xbf16>
    %18 = vector.extract_strided_slice %15 {offsets = [0, 0], sizes = [8, 8], strides = [1, 1]} : vector<8x32xbf16> to vector<8x8xbf16>
    %cst_11 = arith.constant 0xFF800000 : f32
    %19 = vector.broadcast %cst_11 : f32 to vector<8x1xf32>
    %cst_12 = arith.constant 0.000000e+00 : f32
    %20 = vector.broadcast %cst_12 : f32 to vector<8x1xf32>
    %cst_13 = arith.constant 0.000000e+00 : f32
    %21 = vector.broadcast %cst_13 : f32 to vector<8x8xf32>
    %22 = vector.extract_strided_slice %16 {offsets = [0, 0], sizes = [8, 8], strides = [1, 1]} : vector<8x32xbf16> to vector<8x8xbf16>
    %cst_14 = arith.constant dense<0.000000e+00> : vector<8x8xf32>
    %23 = tpu.matmul %18, %22, %cst_14 {dimension_numbers = #tpu.dot_dimension_numbers<[1], [1], [0], [0], [0, 0, 1, 0], [], []>} : vector<8x8xbf16>, vector<8x8xbf16>, vector<8x8xf32> -> vector<8x8xf32>
    %24 = arith.addf %23, %14 : vector<8x8xf32>
    %cst_15 = arith.constant dense<0xFF800000> : vector<8xf32>
    %25 = vector.multi_reduction <maximumf>, %24, %cst_15 [1] : vector<8x8xf32> to vector<8xf32>
    %26 = vector.shape_cast %25 : vector<8xf32> to vector<8x1xf32>
    %27 = arith.maximumf %19, %26 : vector<8x1xf32>
    %28 = arith.subf %19, %27 : vector<8x1xf32>
    %29 = math.exp %28 : vector<8x1xf32>
    %30 = vector.broadcast %27 : vector<8x1xf32> to vector<8x8xf32>
    %31 = arith.subf %24, %30 : vector<8x8xf32>
    %32 = math.exp %31 : vector<8x8xf32>
    %33 = arith.mulf %29, %20 : vector<8x1xf32>
    %cst_16 = arith.constant dense<0.000000e+00> : vector<8xf32>
    %34 = vector.multi_reduction <add>, %32, %cst_16 [1] : vector<8x8xf32> to vector<8xf32>
    %35 = vector.shape_cast %34 : vector<8xf32> to vector<8x1xf32>
    %36 = arith.addf %33, %35 : vector<8x1xf32>
    %37 = vector.broadcast %29 : vector<8x1xf32> to vector<8x8xf32>
    %38 = arith.mulf %37, %21 : vector<8x8xf32>
    %39 = arith.truncf %32 : vector<8x8xf32> to vector<8x8xbf16>
    %40 = vector.extract_strided_slice %17 {offsets = [0, 0], sizes = [8, 8], strides = [1, 1]} : vector<8x32xbf16> to vector<8x8xbf16>
    %cst_17 = arith.constant dense<0.000000e+00> : vector<8x8xf32>
    %41 = tpu.matmul %39, %40, %cst_17 {dimension_numbers = #tpu.dot_dimension_numbers<[1], [0], [0], [1], [0, 0, 1, 1], [], []>} : vector<8x8xbf16>, vector<8x8xbf16>, vector<8x8xf32> -> vector<8x8xf32>
    %42 = arith.addf %38, %41 : vector<8x8xf32>
    %43 = tpu.reciprocal %36 {approx = true} : vector<8x1xf32> -> vector<8x1xf32>
    %44 = vector.broadcast %43 : vector<8x1xf32> to vector<8x8xf32>
    %45 = arith.mulf %42, %44 : vector<8x8xf32>
    %c0_18 = arith.constant 0 : index
    %c0_19 = arith.constant 0 : index
    %46 = vector.load %arg26[%c0_18, %c0_19] : memref<16x32xf32, #tpu.memory_space<vmem>>, vector<8x8xf32>
    tpu.vector_store %arg26[%c0_18, %c0_19], %45 {strides = array<i32>} : memref<16x32xf32, #tpu.memory_space<vmem>>, vector<8x8xf32>,
    %47 = vector.extract_strided_slice %15 {offsets = [0, 8], sizes = [8, 8], strides = [1, 1]} : vector<8x32xbf16> to vector<8x8xbf16>
    %cst_20 = arith.constant 0xFF800000 : f32
    %48 = vector.broadcast %cst_20 : f32 to vector<8x1xf32>
    %cst_21 = arith.constant 0.000000e+00 : f32
    %49 = vector.broadcast %cst_21 : f32 to vector<8x1xf32>
    %cst_22 = arith.constant 0.000000e+00 : f32
    %50 = vector.broadcast %cst_22 : f32 to vector<8x8xf32>
    %51 = vector.extract_strided_slice %16 {offsets = [0, 8], sizes = [8, 8], strides = [1, 1]} : vector<8x32xbf16> to vector<8x8xbf16>
    %cst_23 = arith.constant dense<0.000000e+00> : vector<8x8xf32>
    %52 = tpu.matmul %47, %51, %cst_23 {dimension_numbers = #tpu.dot_dimension_numbers<[1], [1], [0], [0], [0, 0, 1, 0], [], []>} : vector<8x8xbf16>, vector<8x8xbf16>, vector<8x8xf32> -> vector<8x8xf32>
    %53 = arith.addf %52, %14 : vector<8x8xf32>
    %cst_24 = arith.constant dense<0xFF800000> : vector<8xf32>
    %54 = vector.multi_reduction <maximumf>, %53, %cst_24 [1] : vector<8x8xf32> to vector<8xf32>
    %55 = vector.shape_cast %54 : vector<8xf32> to vector<8x1xf32>
    %56 = arith.maximumf %48, %55 : vector<8x1xf32>
    %57 = arith.subf %48, %56 : vector<8x1xf32>
    %58 = math.exp %57 : vector<8x1xf32>
    %59 = vector.broadcast %56 : vector<8x1xf32> to vector<8x8xf32>
    %60 = arith.subf %53, %59 : vector<8x8xf32>
    %61 = math.exp %60 : vector<8x8xf32>
    %62 = arith.mulf %58, %49 : vector<8x1xf32>
    %cst_25 = arith.constant dense<0.000000e+00> : vector<8xf32>
    %63 = vector.multi_reduction <add>, %61, %cst_25 [1] : vector<8x8xf32> to vector<8xf32>
    %64 = vector.shape_cast %63 : vector<8xf32> to vector<8x1xf32>
    %65 = arith.addf %62, %64 : vector<8x1xf32>
    %66 = vector.broadcast %58 : vector<8x1xf32> to vector<8x8xf32>
    %67 = arith.mulf %66, %50 : vector<8x8xf32>
    %68 = arith.truncf %61 : vector<8x8xf32> to vector<8x8xbf16>
    %69 = vector.extract_strided_slice %17 {offsets = [0, 8], sizes = [8, 8], strides = [1, 1]} : vector<8x32xbf16> to vector<8x8xbf16>
    %cst_26 = arith.constant dense<0.000000e+00> : vector<8x8xf32>
    %70 = tpu.matmul %68, %69, %cst_26 {dimension_numbers = #tpu.dot_dimension_numbers<[1], [0], [0], [1], [0, 0, 1, 1], [], []>} : vector<8x8xbf16>, vector<8x8xbf16>, vector<8x8xf32> -> vector<8x8xf32>
    %71 = arith.addf %67, %70 : vector<8x8xf32>
    %72 = tpu.reciprocal %65 {approx = true} : vector<8x1xf32> -> vector<8x1xf32>
    %73 = vector.broadcast %72 : vector<8x1xf32> to vector<8x8xf32>
    %74 = arith.mulf %71, %73 : vector<8x8xf32>
    %c0_27 = arith.constant 0 : index
    %c8 = arith.constant 8 : index
    %75 = vector.load %arg26[%c0_27, %c8] : memref<16x32xf32, #tpu.memory_space<vmem>>, vector<8x8xf32>
    tpu.vector_store %arg26[%c0_27, %c8], %74 {strides = array<i32>} : memref<16x32xf32, #tpu.memory_space<vmem>>, vector<8x8xf32>,
    %76 = vector.extract_strided_slice %15 {offsets = [0, 16], sizes = [8, 8], strides = [1, 1]} : vector<8x32xbf16> to vector<8x8xbf16>
    %cst_28 = arith.constant 0xFF800000 : f32
    %77 = vector.broadcast %cst_28 : f32 to vector<8x1xf32>
    %cst_29 = arith.constant 0.000000e+00 : f32
    %78 = vector.broadcast %cst_29 : f32 to vector<8x1xf32>
    %cst_30 = arith.constant 0.000000e+00 : f32
    %79 = vector.broadcast %cst_30 : f32 to vector<8x8xf32>
    %80 = vector.extract_strided_slice %16 {offsets = [0, 16], sizes = [8, 8], strides = [1, 1]} : vector<8x32xbf16> to vector<8x8xbf16>
    %cst_31 = arith.constant dense<0.000000e+00> : vector<8x8xf32>
    %81 = tpu.matmul %76, %80, %cst_31 {dimension_numbers = #tpu.dot_dimension_numbers<[1], [1], [0], [0], [0, 0, 1, 0], [], []>} : vector<8x8xbf16>, vector<8x8xbf16>, vector<8x8xf32> -> vector<8x8xf32>
    %82 = arith.addf %81, %14 : vector<8x8xf32>
    %cst_32 = arith.constant dense<0xFF800000> : vector<8xf32>
    %83 = vector.multi_reduction <maximumf>, %82, %cst_32 [1] : vector<8x8xf32> to vector<8xf32>
    %84 = vector.shape_cast %83 : vector<8xf32> to vector<8x1xf32>
    %85 = arith.maximumf %77, %84 : vector<8x1xf32>
    %86 = arith.subf %77, %85 : vector<8x1xf32>
    %87 = math.exp %86 : vector<8x1xf32>
    %88 = vector.broadcast %85 : vector<8x1xf32> to vector<8x8xf32>
    %89 = arith.subf %82, %88 : vector<8x8xf32>
    %90 = math.exp %89 : vector<8x8xf32>
    %91 = arith.mulf %87, %78 : vector<8x1xf32>
    %cst_33 = arith.constant dense<0.000000e+00> : vector<8xf32>
    %92 = vector.multi_reduction <add>, %90, %cst_33 [1] : vector<8x8xf32> to vector<8xf32>
    %93 = vector.shape_cast %92 : vector<8xf32> to vector<8x1xf32>
    %94 = arith.addf %91, %93 : vector<8x1xf32>
    %95 = vector.broadcast %87 : vector<8x1xf32> to vector<8x8xf32>
    %96 = arith.mulf %95, %79 : vector<8x8xf32>
    %97 = arith.truncf %90 : vector<8x8xf32> to vector<8x8xbf16>
    %98 = vector.extract_strided_slice %17 {offsets = [0, 16], sizes = [8, 8], strides = [1, 1]} : vector<8x32xbf16> to vector<8x8xbf16>
    %cst_34 = arith.constant dense<0.000000e+00> : vector<8x8xf32>
    %99 = tpu.matmul %97, %98, %cst_34 {dimension_numbers = #tpu.dot_dimension_numbers<[1], [0], [0], [1], [0, 0, 1, 1], [], []>} : vector<8x8xbf16>, vector<8x8xbf16>, vector<8x8xf32> -> vector<8x8xf32>
    %100 = arith.addf %96, %99 : vector<8x8xf32>
    %101 = tpu.reciprocal %94 {approx = true} : vector<8x1xf32> -> vector<8x1xf32>
    %102 = vector.broadcast %101 : vector<8x1xf32> to vector<8x8xf32>
    %103 = arith.mulf %100, %102 : vector<8x8xf32>
    %c0_35 = arith.constant 0 : index
    %c16 = arith.constant 16 : index
    %104 = vector.load %arg26[%c0_35, %c16] : memref<16x32xf32, #tpu.memory_space<vmem>>, vector<8x8xf32>
    tpu.vector_store %arg26[%c0_35, %c16], %103 {strides = array<i32>} : memref<16x32xf32, #tpu.memory_space<vmem>>, vector<8x8xf32>,
    %105 = vector.extract_strided_slice %15 {offsets = [0, 24], sizes = [8, 8], strides = [1, 1]} : vector<8x32xbf16> to vector<8x8xbf16>
    %cst_36 = arith.constant 0xFF800000 : f32
    %106 = vector.broadcast %cst_36 : f32 to vector<8x1xf32>
    %cst_37 = arith.constant 0.000000e+00 : f32
    %107 = vector.broadcast %cst_37 : f32 to vector<8x1xf32>
    %cst_38 = arith.constant 0.000000e+00 : f32
    %108 = vector.broadcast %cst_38 : f32 to vector<8x8xf32>
    %109 = vector.extract_strided_slice %16 {offsets = [0, 24], sizes = [8, 8], strides = [1, 1]} : vector<8x32xbf16> to vector<8x8xbf16>
    %cst_39 = arith.constant dense<0.000000e+00> : vector<8x8xf32>
    %110 = tpu.matmul %105, %109, %cst_39 {dimension_numbers = #tpu.dot_dimension_numbers<[1], [1], [0], [0], [0, 0, 1, 0], [], []>} : vector<8x8xbf16>, vector<8x8xbf16>, vector<8x8xf32> -> vector<8x8xf32>
    %111 = arith.addf %110, %14 : vector<8x8xf32>
    %cst_40 = arith.constant dense<0xFF800000> : vector<8xf32>
    %112 = vector.multi_reduction <maximumf>, %111, %cst_40 [1] : vector<8x8xf32> to vector<8xf32>
    %113 = vector.shape_cast %112 : vector<8xf32> to vector<8x1xf32>
    %114 = arith.maximumf %106, %113 : vector<8x1xf32>
    %115 = arith.subf %106, %114 : vector<8x1xf32>
    %116 = math.exp %115 : vector<8x1xf32>
    %117 = vector.broadcast %114 : vector<8x1xf32> to vector<8x8xf32>
    %118 = arith.subf %111, %117 : vector<8x8xf32>
    %119 = math.exp %118 : vector<8x8xf32>
    %120 = arith.mulf %116, %107 : vector<8x1xf32>
    %cst_41 = arith.constant dense<0.000000e+00> : vector<8xf32>
    %121 = vector.multi_reduction <add>, %119, %cst_41 [1] : vector<8x8xf32> to vector<8xf32>
    %122 = vector.shape_cast %121 : vector<8xf32> to vector<8x1xf32>
    %123 = arith.addf %120, %122 : vector<8x1xf32>
    %124 = vector.broadcast %116 : vector<8x1xf32> to vector<8x8xf32>
    %125 = arith.mulf %124, %108 : vector<8x8xf32>
    %126 = arith.truncf %119 : vector<8x8xf32> to vector<8x8xbf16>
    %127 = vector.extract_strided_slice %17 {offsets = [0, 24], sizes = [8, 8], strides = [1, 1]} : vector<8x32xbf16> to vector<8x8xbf16>
    %cst_42 = arith.constant dense<0.000000e+00> : vector<8x8xf32>
    %128 = tpu.matmul %126, %127, %cst_42 {dimension_numbers = #tpu.dot_dimension_numbers<[1], [0], [0], [1], [0, 0, 1, 1], [], []>} : vector<8x8xbf16>, vector<8x8xbf16>, vector<8x8xf32> -> vector<8x8xf32>
    %129 = arith.addf %125, %128 : vector<8x8xf32>
    %130 = tpu.reciprocal %123 {approx = true} : vector<8x1xf32> -> vector<8x1xf32>
    %131 = vector.broadcast %130 : vector<8x1xf32> to vector<8x8xf32>
    %132 = arith.mulf %129, %131 : vector<8x8xf32>
    %c0_43 = arith.constant 0 : index
    %c24 = arith.constant 24 : index
    %133 = vector.load %arg26[%c0_43, %c24] : memref<16x32xf32, #tpu.memory_space<vmem>>, vector<8x8xf32>
    tpu.vector_store %arg26[%c0_43, %c24], %132 {strides = array<i32>} : memref<16x32xf32, #tpu.memory_space<vmem>>, vector<8x8xf32>,
    %134 = vector.extract_strided_slice %11 {offsets = [8, 0], sizes = [8, 32], strides = [1, 1]} : vector<16x32xbf16> to vector<8x32xbf16>
    %135 = vector.extract_strided_slice %12 {offsets = [8, 0], sizes = [8, 32], strides = [1, 1]} : vector<16x32xbf16> to vector<8x32xbf16>
    %136 = vector.extract_strided_slice %13 {offsets = [8, 0], sizes = [8, 32], strides = [1, 1]} : vector<16x32xbf16> to vector<8x32xbf16>
    %137 = vector.extract_strided_slice %134 {offsets = [0, 0], sizes = [8, 8], strides = [1, 1]} : vector<8x32xbf16> to vector<8x8xbf16>
    %cst_44 = arith.constant 0xFF800000 : f32
    %138 = vector.broadcast %cst_44 : f32 to vector<8x1xf32>
    %cst_45 = arith.constant 0.000000e+00 : f32
    %139 = vector.broadcast %cst_45 : f32 to vector<8x1xf32>
    %cst_46 = arith.constant 0.000000e+00 : f32
    %140 = vector.broadcast %cst_46 : f32 to vector<8x8xf32>
    %141 = vector.extract_strided_slice %135 {offsets = [0, 0], sizes = [8, 8], strides = [1, 1]} : vector<8x32xbf16> to vector<8x8xbf16>
    %cst_47 = arith.constant dense<0.000000e+00> : vector<8x8xf32>
    %142 = tpu.matmul %137, %141, %cst_47 {dimension_numbers = #tpu.dot_dimension_numbers<[1], [1], [0], [0], [0, 0, 1, 0], [], []>} : vector<8x8xbf16>, vector<8x8xbf16>, vector<8x8xf32> -> vector<8x8xf32>
    %143 = arith.addf %142, %14 : vector<8x8xf32>
    %cst_48 = arith.constant dense<0xFF800000> : vector<8xf32>
    %144 = vector.multi_reduction <maximumf>, %143, %cst_48 [1] : vector<8x8xf32> to vector<8xf32>
    %145 = vector.shape_cast %144 : vector<8xf32> to vector<8x1xf32>
    %146 = arith.maximumf %138, %145 : vector<8x1xf32>
    %147 = arith.subf %138, %146 : vector<8x1xf32>
    %148 = math.exp %147 : vector<8x1xf32>
    %149 = vector.broadcast %146 : vector<8x1xf32> to vector<8x8xf32>
    %150 = arith.subf %143, %149 : vector<8x8xf32>
    %151 = math.exp %150 : vector<8x8xf32>
    %152 = arith.mulf %148, %139 : vector<8x1xf32>
    %cst_49 = arith.constant dense<0.000000e+00> : vector<8xf32>
    %153 = vector.multi_reduction <add>, %151, %cst_49 [1] : vector<8x8xf32> to vector<8xf32>
    %154 = vector.shape_cast %153 : vector<8xf32> to vector<8x1xf32>
    %155 = arith.addf %152, %154 : vector<8x1xf32>
    %156 = vector.broadcast %148 : vector<8x1xf32> to vector<8x8xf32>
    %157 = arith.mulf %156, %140 : vector<8x8xf32>
    %158 = arith.truncf %151 : vector<8x8xf32> to vector<8x8xbf16>
    %159 = vector.extract_strided_slice %136 {offsets = [0, 0], sizes = [8, 8], strides = [1, 1]} : vector<8x32xbf16> to vector<8x8xbf16>
    %cst_50 = arith.constant dense<0.000000e+00> : vector<8x8xf32>
    %160 = tpu.matmul %158, %159, %cst_50 {dimension_numbers = #tpu.dot_dimension_numbers<[1], [0], [0], [1], [0, 0, 1, 1], [], []>} : vector<8x8xbf16>, vector<8x8xbf16>, vector<8x8xf32> -> vector<8x8xf32>
    %161 = arith.addf %157, %160 : vector<8x8xf32>
    %162 = tpu.reciprocal %155 {approx = true} : vector<8x1xf32> -> vector<8x1xf32>
    %163 = vector.broadcast %162 : vector<8x1xf32> to vector<8x8xf32>
    %164 = arith.mulf %161, %163 : vector<8x8xf32>
    %c8_51 = arith.constant 8 : index
    %c0_52 = arith.constant 0 : index
    %165 = vector.load %arg26[%c8_51, %c0_52] : memref<16x32xf32, #tpu.memory_space<vmem>>, vector<8x8xf32>
    tpu.vector_store %arg26[%c8_51, %c0_52], %164 {strides = array<i32>} : memref<16x32xf32, #tpu.memory_space<vmem>>, vector<8x8xf32>,
    %166 = vector.extract_strided_slice %134 {offsets = [0, 8], sizes = [8, 8], strides = [1, 1]} : vector<8x32xbf16> to vector<8x8xbf16>
    %cst_53 = arith.constant 0xFF800000 : f32
    %167 = vector.broadcast %cst_53 : f32 to vector<8x1xf32>
    %cst_54 = arith.constant 0.000000e+00 : f32
    %168 = vector.broadcast %cst_54 : f32 to vector<8x1xf32>
    %cst_55 = arith.constant 0.000000e+00 : f32
    %169 = vector.broadcast %cst_55 : f32 to vector<8x8xf32>
    %170 = vector.extract_strided_slice %135 {offsets = [0, 8], sizes = [8, 8], strides = [1, 1]} : vector<8x32xbf16> to vector<8x8xbf16>
    %cst_56 = arith.constant dense<0.000000e+00> : vector<8x8xf32>
    %171 = tpu.matmul %166, %170, %cst_56 {dimension_numbers = #tpu.dot_dimension_numbers<[1], [1], [0], [0], [0, 0, 1, 0], [], []>} : vector<8x8xbf16>, vector<8x8xbf16>, vector<8x8xf32> -> vector<8x8xf32>
    %172 = arith.addf %171, %14 : vector<8x8xf32>
    %cst_57 = arith.constant dense<0xFF800000> : vector<8xf32>
    %173 = vector.multi_reduction <maximumf>, %172, %cst_57 [1] : vector<8x8xf32> to vector<8xf32>
    %174 = vector.shape_cast %173 : vector<8xf32> to vector<8x1xf32>
    %175 = arith.maximumf %167, %174 : vector<8x1xf32>
    %176 = arith.subf %167, %175 : vector<8x1xf32>
    %177 = math.exp %176 : vector<8x1xf32>
    %178 = vector.broadcast %175 : vector<8x1xf32> to vector<8x8xf32>
    %179 = arith.subf %172, %178 : vector<8x8xf32>
    %180 = math.exp %179 : vector<8x8xf32>
    %181 = arith.mulf %177, %168 : vector<8x1xf32>
    %cst_58 = arith.constant dense<0.000000e+00> : vector<8xf32>
    %182 = vector.multi_reduction <add>, %180, %cst_58 [1] : vector<8x8xf32> to vector<8xf32>
    %183 = vector.shape_cast %182 : vector<8xf32> to vector<8x1xf32>
    %184 = arith.addf %181, %183 : vector<8x1xf32>
    %185 = vector.broadcast %177 : vector<8x1xf32> to vector<8x8xf32>
    %186 = arith.mulf %185, %169 : vector<8x8xf32>
    %187 = arith.truncf %180 : vector<8x8xf32> to vector<8x8xbf16>
    %188 = vector.extract_strided_slice %136 {offsets = [0, 8], sizes = [8, 8], strides = [1, 1]} : vector<8x32xbf16> to vector<8x8xbf16>
    %cst_59 = arith.constant dense<0.000000e+00> : vector<8x8xf32>
    %189 = tpu.matmul %187, %188, %cst_59 {dimension_numbers = #tpu.dot_dimension_numbers<[1], [0], [0], [1], [0, 0, 1, 1], [], []>} : vector<8x8xbf16>, vector<8x8xbf16>, vector<8x8xf32> -> vector<8x8xf32>
    %190 = arith.addf %186, %189 : vector<8x8xf32>
    %191 = tpu.reciprocal %184 {approx = true} : vector<8x1xf32> -> vector<8x1xf32>
    %192 = vector.broadcast %191 : vector<8x1xf32> to vector<8x8xf32>
    %193 = arith.mulf %190, %192 : vector<8x8xf32>
    %c8_60 = arith.constant 8 : index
    %c8_61 = arith.constant 8 : index
    %194 = vector.load %arg26[%c8_60, %c8_61] : memref<16x32xf32, #tpu.memory_space<vmem>>, vector<8x8xf32>
    tpu.vector_store %arg26[%c8_60, %c8_61], %193 {strides = array<i32>} : memref<16x32xf32, #tpu.memory_space<vmem>>, vector<8x8xf32>,
    %195 = vector.extract_strided_slice %134 {offsets = [0, 16], sizes = [8, 8], strides = [1, 1]} : vector<8x32xbf16> to vector<8x8xbf16>
    %cst_62 = arith.constant 0xFF800000 : f32
    %196 = vector.broadcast %cst_62 : f32 to vector<8x1xf32>
    %cst_63 = arith.constant 0.000000e+00 : f32
    %197 = vector.broadcast %cst_63 : f32 to vector<8x1xf32>
    %cst_64 = arith.constant 0.000000e+00 : f32
    %198 = vector.broadcast %cst_64 : f32 to vector<8x8xf32>
    %199 = vector.extract_strided_slice %135 {offsets = [0, 16], sizes = [8, 8], strides = [1, 1]} : vector<8x32xbf16> to vector<8x8xbf16>
    %cst_65 = arith.constant dense<0.000000e+00> : vector<8x8xf32>
    %200 = tpu.matmul %195, %199, %cst_65 {dimension_numbers = #tpu.dot_dimension_numbers<[1], [1], [0], [0], [0, 0, 1, 0], [], []>} : vector<8x8xbf16>, vector<8x8xbf16>, vector<8x8xf32> -> vector<8x8xf32>
    %201 = arith.addf %200, %14 : vector<8x8xf32>
    %cst_66 = arith.constant dense<0xFF800000> : vector<8xf32>
    %202 = vector.multi_reduction <maximumf>, %201, %cst_66 [1] : vector<8x8xf32> to vector<8xf32>
    %203 = vector.shape_cast %202 : vector<8xf32> to vector<8x1xf32>
    %204 = arith.maximumf %196, %203 : vector<8x1xf32>
    %205 = arith.subf %196, %204 : vector<8x1xf32>
    %206 = math.exp %205 : vector<8x1xf32>
    %207 = vector.broadcast %204 : vector<8x1xf32> to vector<8x8xf32>
    %208 = arith.subf %201, %207 : vector<8x8xf32>
    %209 = math.exp %208 : vector<8x8xf32>
    %210 = arith.mulf %206, %197 : vector<8x1xf32>
    %cst_67 = arith.constant dense<0.000000e+00> : vector<8xf32>
    %211 = vector.multi_reduction <add>, %209, %cst_67 [1] : vector<8x8xf32> to vector<8xf32>
    %212 = vector.shape_cast %211 : vector<8xf32> to vector<8x1xf32>
    %213 = arith.addf %210, %212 : vector<8x1xf32>
    %214 = vector.broadcast %206 : vector<8x1xf32> to vector<8x8xf32>
    %215 = arith.mulf %214, %198 : vector<8x8xf32>
    %216 = arith.truncf %209 : vector<8x8xf32> to vector<8x8xbf16>
    %217 = vector.extract_strided_slice %136 {offsets = [0, 16], sizes = [8, 8], strides = [1, 1]} : vector<8x32xbf16> to vector<8x8xbf16>
    %cst_68 = arith.constant dense<0.000000e+00> : vector<8x8xf32>
    %218 = tpu.matmul %216, %217, %cst_68 {dimension_numbers = #tpu.dot_dimension_numbers<[1], [0], [0], [1], [0, 0, 1, 1], [], []>} : vector<8x8xbf16>, vector<8x8xbf16>, vector<8x8xf32> -> vector<8x8xf32>
    %219 = arith.addf %215, %218 : vector<8x8xf32>
    %220 = tpu.reciprocal %213 {approx = true} : vector<8x1xf32> -> vector<8x1xf32>
    %221 = vector.broadcast %220 : vector<8x1xf32> to vector<8x8xf32>
    %222 = arith.mulf %219, %221 : vector<8x8xf32>
    %c8_69 = arith.constant 8 : index
    %c16_70 = arith.constant 16 : index
    %223 = vector.load %arg26[%c8_69, %c16_70] : memref<16x32xf32, #tpu.memory_space<vmem>>, vector<8x8xf32>
    tpu.vector_store %arg26[%c8_69, %c16_70], %222 {strides = array<i32>} : memref<16x32xf32, #tpu.memory_space<vmem>>, vector<8x8xf32>,
    %224 = vector.extract_strided_slice %134 {offsets = [0, 24], sizes = [8, 8], strides = [1, 1]} : vector<8x32xbf16> to vector<8x8xbf16>
    %cst_71 = arith.constant 0xFF800000 : f32
    %225 = vector.broadcast %cst_71 : f32 to vector<8x1xf32>
    %cst_72 = arith.constant 0.000000e+00 : f32
    %226 = vector.broadcast %cst_72 : f32 to vector<8x1xf32>
    %cst_73 = arith.constant 0.000000e+00 : f32
    %227 = vector.broadcast %cst_73 : f32 to vector<8x8xf32>
    %228 = vector.extract_strided_slice %135 {offsets = [0, 24], sizes = [8, 8], strides = [1, 1]} : vector<8x32xbf16> to vector<8x8xbf16>
    %cst_74 = arith.constant dense<0.000000e+00> : vector<8x8xf32>
    %229 = tpu.matmul %224, %228, %cst_74 {dimension_numbers = #tpu.dot_dimension_numbers<[1], [1], [0], [0], [0, 0, 1, 0], [], []>} : vector<8x8xbf16>, vector<8x8xbf16>, vector<8x8xf32> -> vector<8x8xf32>
    %230 = arith.addf %229, %14 : vector<8x8xf32>
    %cst_75 = arith.constant dense<0xFF800000> : vector<8xf32>
    %231 = vector.multi_reduction <maximumf>, %230, %cst_75 [1] : vector<8x8xf32> to vector<8xf32>
    %232 = vector.shape_cast %231 : vector<8xf32> to vector<8x1xf32>
    %233 = arith.maximumf %225, %232 : vector<8x1xf32>
    %234 = arith.subf %225, %233 : vector<8x1xf32>
    %235 = math.exp %234 : vector<8x1xf32>
    %236 = vector.broadcast %233 : vector<8x1xf32> to vector<8x8xf32>
    %237 = arith.subf %230, %236 : vector<8x8xf32>
    %238 = math.exp %237 : vector<8x8xf32>
    %239 = arith.mulf %235, %226 : vector<8x1xf32>
    %cst_76 = arith.constant dense<0.000000e+00> : vector<8xf32>
    %240 = vector.multi_reduction <add>, %238, %cst_76 [1] : vector<8x8xf32> to vector<8xf32>
    %241 = vector.shape_cast %240 : vector<8xf32> to vector<8x1xf32>
    %242 = arith.addf %239, %241 : vector<8x1xf32>
    %243 = vector.broadcast %235 : vector<8x1xf32> to vector<8x8xf32>
    %244 = arith.mulf %243, %227 : vector<8x8xf32>
    %245 = arith.truncf %238 : vector<8x8xf32> to vector<8x8xbf16>
    %246 = vector.extract_strided_slice %136 {offsets = [0, 24], sizes = [8, 8], strides = [1, 1]} : vector<8x32xbf16> to vector<8x8xbf16>
    %cst_77 = arith.constant dense<0.000000e+00> : vector<8x8xf32>
    %247 = tpu.matmul %245, %246, %cst_77 {dimension_numbers = #tpu.dot_dimension_numbers<[1], [0], [0], [1], [0, 0, 1, 1], [], []>} : vector<8x8xbf16>, vector<8x8xbf16>, vector<8x8xf32> -> vector<8x8xf32>
    %248 = arith.addf %244, %247 : vector<8x8xf32>
    %249 = tpu.reciprocal %242 {approx = true} : vector<8x1xf32> -> vector<8x1xf32>
    %250 = vector.broadcast %249 : vector<8x1xf32> to vector<8x8xf32>
    %251 = arith.mulf %248, %250 : vector<8x8xf32>
    %c8_78 = arith.constant 8 : index
    %c24_79 = arith.constant 24 : index
    %252 = vector.load %arg26[%c8_78, %c24_79] : memref<16x32xf32, #tpu.memory_space<vmem>>, vector<8x8xf32>
    tpu.vector_store %arg26[%c8_78, %c24_79], %251 {strides = array<i32>} : memref<16x32xf32, #tpu.memory_space<vmem>>, vector<8x8xf32>,
    %c0_80 = arith.constant 0 : index
    %c0_81 = arith.constant 0 : index
    %253 = vector.load %arg26[%c0_80, %c0_81] : memref<16x32xf32, #tpu.memory_space<vmem>>, vector<16x32xf32>
    %254 = arith.truncf %253 : vector<16x32xf32> to vector<16x32xbf16>
    %c0_82 = arith.constant 0 : index
    %c0_83 = arith.constant 0 : index
    %255 = vector.load %arg7[%c0_82, %c0_83] : memref<32x32xbf16, #tpu.memory_space<vmem>>, vector<32x32xbf16>
    %cst_84 = arith.constant dense<0.000000e+00> : vector<16x32xf32>
    %256 = tpu.matmul %254, %255, %cst_84 {dimension_numbers = #tpu.dot_dimension_numbers<[1], [0], [0], [1], [0, 0, 1, 1], [], []>} : vector<16x32xbf16>, vector<32x32xbf16>, vector<16x32xf32> -> vector<16x32xf32>
    %c0_85 = arith.constant 0 : index
    %c0_86 = arith.constant 0 : index
    %257 = vector.load %arg8[%c0_85, %c0_86] : memref<1x32xf32, #tpu.memory_space<vmem>>, vector<1x32xf32>
    %258 = vector.broadcast %257 : vector<1x32xf32> to vector<16x32xf32>
    %259 = arith.addf %256, %258 : vector<16x32xf32>
    %260 = arith.addf %4, %259 : vector<16x32xf32>
    %cst_87 = arith.constant dense<0.000000e+00> : vector<16xf32>
    %261 = vector.multi_reduction <add>, %260, %cst_87 [1] : vector<16x32xf32> to vector<16xf32>
    %262 = vector.shape_cast %261 : vector<16xf32> to vector<16x1xf32>
    %cst_88 = arith.constant 3.200000e+01 : f32
    %263 = vector.broadcast %cst_88 : f32 to vector<16x1xf32>
    %264 = arith.divf %262, %263 : vector<16x1xf32>
    %265 = arith.mulf %260, %260 : vector<16x32xf32>
    %cst_89 = arith.constant dense<0.000000e+00> : vector<16xf32>
    %266 = vector.multi_reduction <add>, %265, %cst_89 [1] : vector<16x32xf32> to vector<16xf32>
    %267 = vector.shape_cast %266 : vector<16xf32> to vector<16x1xf32>
    %cst_90 = arith.constant 3.200000e+01 : f32
    %268 = vector.broadcast %cst_90 : f32 to vector<16x1xf32>
    %269 = arith.divf %267, %268 : vector<16x1xf32>
    %270 = arith.mulf %264, %264 : vector<16x1xf32>
    %271 = arith.subf %269, %270 : vector<16x1xf32>
    %272 = vector.broadcast %264 : vector<16x1xf32> to vector<16x32xf32>
    %273 = arith.subf %260, %272 : vector<16x32xf32>
    %cst_91 = arith.constant 9.99999974E-6 : f32
    %274 = vector.broadcast %cst_91 : f32 to vector<16x1xf32>
    %275 = arith.addf %271, %274 : vector<16x1xf32>
    %276 = math.rsqrt %275 : vector<16x1xf32>
    %277 = vector.broadcast %276 : vector<16x1xf32> to vector<16x32xf32>
    %278 = arith.mulf %273, %277 : vector<16x32xf32>
    %c0_92 = arith.constant 0 : index
    %c0_93 = arith.constant 0 : index
    %279 = vector.load %arg15[%c0_92, %c0_93] : memref<1x32xf32, #tpu.memory_space<vmem>>, vector<1x32xf32>
    %280 = vector.broadcast %279 : vector<1x32xf32> to vector<16x32xf32>
    %281 = arith.mulf %278, %280 : vector<16x32xf32>
    %c0_94 = arith.constant 0 : index
    %c0_95 = arith.constant 0 : index
    %282 = vector.load %arg16[%c0_94, %c0_95] : memref<1x32xf32, #tpu.memory_space<vmem>>, vector<1x32xf32>
    %283 = vector.broadcast %282 : vector<1x32xf32> to vector<16x32xf32>
    %284 = arith.addf %281, %283 : vector<16x32xf32>
    %285 = arith.truncf %284 : vector<16x32xf32> to vector<16x32xbf16>
    %c0_96 = arith.constant 0 : index
    %c0_97 = arith.constant 0 : index
    %286 = vector.load %arg9[%c0_96, %c0_97] : memref<32x32xbf16, #tpu.memory_space<vmem>>, vector<32x32xbf16>
    %cst_98 = arith.constant dense<0.000000e+00> : vector<16x32xf32>
    %287 = tpu.matmul %285, %286, %cst_98 {dimension_numbers = #tpu.dot_dimension_numbers<[1], [0], [0], [1], [0, 0, 1, 1], [], []>} : vector<16x32xbf16>, vector<32x32xbf16>, vector<16x32xf32> -> vector<16x32xf32>
    %c0_99 = arith.constant 0 : index
    %c0_100 = arith.constant 0 : index
    %288 = vector.load %arg10[%c0_99, %c0_100] : memref<1x32xf32, #tpu.memory_space<vmem>>, vector<1x32xf32>
    %289 = vector.broadcast %288 : vector<1x32xf32> to vector<16x32xf32>
    %290 = arith.addf %287, %289 : vector<16x32xf32>
    %291 = arith.truncf %290 : vector<16x32xf32> to vector<16x32xbf16>
    %c0_101 = arith.constant 0 : index
    %c0_102 = arith.constant 0 : index
    %292 = vector.load %arg11[%c0_101, %c0_102] : memref<32x64xbf16, #tpu.memory_space<vmem>>, vector<32x64xbf16>
    %cst_103 = arith.constant dense<0.000000e+00> : vector<16x64xf32>
    %293 = tpu.matmul %3, %292, %cst_103 {dimension_numbers = #tpu.dot_dimension_numbers<[1], [0], [0], [1], [0, 0, 1, 1], [], []>} : vector<16x32xbf16>, vector<32x64xbf16>, vector<16x64xf32> -> vector<16x64xf32>
    %c0_104 = arith.constant 0 : index
    %c0_105 = arith.constant 0 : index
    %294 = vector.load %arg12[%c0_104, %c0_105] : memref<1x64xf32, #tpu.memory_space<vmem>>, vector<1x64xf32>
    %295 = vector.broadcast %294 : vector<1x64xf32> to vector<16x64xf32>
    %296 = arith.addf %293, %295 : vector<16x64xf32>
    %297 = arith.truncf %296 : vector<16x64xf32> to vector<16x64xbf16>
    %298 = vector.extract_strided_slice %297 {offsets = [0, 0], sizes = [16, 32], strides = [1, 1]} : vector<16x64xbf16> to vector<16x32xbf16>
    %299 = vector.extract_strided_slice %297 {offsets = [0, 32], sizes = [16, 32], strides = [1, 1]} : vector<16x64xbf16> to vector<16x32xbf16>
    %c0_106 = arith.constant 0 : index
    %c0_107 = arith.constant 0 : index
    %c0_108 = arith.constant 0 : index
    %300 = vector.load %arg3[%c0_106, %c0_107, %c0_108] : memref<2x1x8xf32, #tpu.memory_space<vmem>>, vector<1x1x8xf32>
    %301 = vector.shape_cast %300 : vector<1x1x8xf32> to vector<1x8xf32>
    %302 = vector.extract_strided_slice %291 {offsets = [0, 0], sizes = [8, 32], strides = [1, 1]} : vector<16x32xbf16> to vector<8x32xbf16>
    %303 = vector.extract_strided_slice %298 {offsets = [0, 0], sizes = [8, 32], strides = [1, 1]} : vector<16x32xbf16> to vector<8x32xbf16>
    %304 = vector.extract_strided_slice %299 {offsets = [0, 0], sizes = [8, 32], strides = [1, 1]} : vector<16x32xbf16> to vector<8x32xbf16>
    %305 = vector.extract_strided_slice %302 {offsets = [0, 0], sizes = [8, 8], strides = [1, 1]} : vector<8x32xbf16> to vector<8x8xbf16>
    %cst_109 = arith.constant 0xFF800000 : f32
    %306 = vector.broadcast %cst_109 : f32 to vector<8x1xf32>
    %cst_110 = arith.constant 0.000000e+00 : f32
    %307 = vector.broadcast %cst_110 : f32 to vector<8x1xf32>
    %cst_111 = arith.constant 0.000000e+00 : f32
    %308 = vector.broadcast %cst_111 : f32 to vector<8x8xf32>
    %309 = vector.extract_strided_slice %303 {offsets = [0, 0], sizes = [8, 8], strides = [1, 1]} : vector<8x32xbf16> to vector<8x8xbf16>
    %cst_112 = arith.constant dense<0.000000e+00> : vector<8x8xf32>
    %310 = tpu.matmul %305, %309, %cst_112 {dimension_numbers = #tpu.dot_dimension_numbers<[1], [1], [0], [0], [0, 0, 1, 0], [], []>} : vector<8x8xbf16>, vector<8x8xbf16>, vector<8x8xf32> -> vector<8x8xf32>
    %311 = vector.broadcast %301 : vector<1x8xf32> to vector<8x8xf32>
    %312 = arith.addf %310, %311 : vector<8x8xf32>
    %cst_113 = arith.constant dense<0xFF800000> : vector<8xf32>
    %313 = vector.multi_reduction <maximumf>, %312, %cst_113 [1] : vector<8x8xf32> to vector<8xf32>
    %314 = vector.shape_cast %313 : vector<8xf32> to vector<8x1xf32>
    %315 = arith.maximumf %306, %314 : vector<8x1xf32>
    %316 = arith.subf %306, %315 : vector<8x1xf32>
    %317 = math.exp %316 : vector<8x1xf32>
    %318 = vector.broadcast %315 : vector<8x1xf32> to vector<8x8xf32>
    %319 = arith.subf %312, %318 : vector<8x8xf32>
    %320 = math.exp %319 : vector<8x8xf32>
    %321 = arith.mulf %317, %307 : vector<8x1xf32>
    %cst_114 = arith.constant dense<0.000000e+00> : vector<8xf32>
    %322 = vector.multi_reduction <add>, %320, %cst_114 [1] : vector<8x8xf32> to vector<8xf32>
    %323 = vector.shape_cast %322 : vector<8xf32> to vector<8x1xf32>
    %324 = arith.addf %321, %323 : vector<8x1xf32>
    %325 = vector.broadcast %317 : vector<8x1xf32> to vector<8x8xf32>
    %326 = arith.mulf %325, %308 : vector<8x8xf32>
    %327 = arith.truncf %320 : vector<8x8xf32> to vector<8x8xbf16>
    %328 = vector.extract_strided_slice %304 {offsets = [0, 0], sizes = [8, 8], strides = [1, 1]} : vector<8x32xbf16> to vector<8x8xbf16>
    %cst_115 = arith.constant dense<0.000000e+00> : vector<8x8xf32>
    %329 = tpu.matmul %327, %328, %cst_115 {dimension_numbers = #tpu.dot_dimension_numbers<[1], [0], [0], [1], [0, 0, 1, 1], [], []>} : vector<8x8xbf16>, vector<8x8xbf16>, vector<8x8xf32> -> vector<8x8xf32>
    %330 = arith.addf %326, %329 : vector<8x8xf32>
    %331 = tpu.reciprocal %324 {approx = true} : vector<8x1xf32> -> vector<8x1xf32>
    %332 = vector.broadcast %331 : vector<8x1xf32> to vector<8x8xf32>
    %333 = arith.mulf %330, %332 : vector<8x8xf32>
    %c0_116 = arith.constant 0 : index
    %c0_117 = arith.constant 0 : index
    %334 = vector.load %arg26[%c0_116, %c0_117] : memref<16x32xf32, #tpu.memory_space<vmem>>, vector<8x8xf32>
    tpu.vector_store %arg26[%c0_116, %c0_117], %333 {strides = array<i32>} : memref<16x32xf32, #tpu.memory_space<vmem>>, vector<8x8xf32>,
    %335 = vector.extract_strided_slice %302 {offsets = [0, 8], sizes = [8, 8], strides = [1, 1]} : vector<8x32xbf16> to vector<8x8xbf16>
    %cst_118 = arith.constant 0xFF800000 : f32
    %336 = vector.broadcast %cst_118 : f32 to vector<8x1xf32>
    %cst_119 = arith.constant 0.000000e+00 : f32
    %337 = vector.broadcast %cst_119 : f32 to vector<8x1xf32>
    %cst_120 = arith.constant 0.000000e+00 : f32
    %338 = vector.broadcast %cst_120 : f32 to vector<8x8xf32>
    %339 = vector.extract_strided_slice %303 {offsets = [0, 8], sizes = [8, 8], strides = [1, 1]} : vector<8x32xbf16> to vector<8x8xbf16>
    %cst_121 = arith.constant dense<0.000000e+00> : vector<8x8xf32>
    %340 = tpu.matmul %335, %339, %cst_121 {dimension_numbers = #tpu.dot_dimension_numbers<[1], [1], [0], [0], [0, 0, 1, 0], [], []>} : vector<8x8xbf16>, vector<8x8xbf16>, vector<8x8xf32> -> vector<8x8xf32>
    %341 = vector.broadcast %301 : vector<1x8xf32> to vector<8x8xf32>
    %342 = arith.addf %340, %341 : vector<8x8xf32>
    %cst_122 = arith.constant dense<0xFF800000> : vector<8xf32>
    %343 = vector.multi_reduction <maximumf>, %342, %cst_122 [1] : vector<8x8xf32> to vector<8xf32>
    %344 = vector.shape_cast %343 : vector<8xf32> to vector<8x1xf32>
    %345 = arith.maximumf %336, %344 : vector<8x1xf32>
    %346 = arith.subf %336, %345 : vector<8x1xf32>
    %347 = math.exp %346 : vector<8x1xf32>
    %348 = vector.broadcast %345 : vector<8x1xf32> to vector<8x8xf32>
    %349 = arith.subf %342, %348 : vector<8x8xf32>
    %350 = math.exp %349 : vector<8x8xf32>
    %351 = arith.mulf %347, %337 : vector<8x1xf32>
    %cst_123 = arith.constant dense<0.000000e+00> : vector<8xf32>
    %352 = vector.multi_reduction <add>, %350, %cst_123 [1] : vector<8x8xf32> to vector<8xf32>
    %353 = vector.shape_cast %352 : vector<8xf32> to vector<8x1xf32>
    %354 = arith.addf %351, %353 : vector<8x1xf32>
    %355 = vector.broadcast %347 : vector<8x1xf32> to vector<8x8xf32>
    %356 = arith.mulf %355, %338 : vector<8x8xf32>
    %357 = arith.truncf %350 : vector<8x8xf32> to vector<8x8xbf16>
    %358 = vector.extract_strided_slice %304 {offsets = [0, 8], sizes = [8, 8], strides = [1, 1]} : vector<8x32xbf16> to vector<8x8xbf16>
    %cst_124 = arith.constant dense<0.000000e+00> : vector<8x8xf32>
    %359 = tpu.matmul %357, %358, %cst_124 {dimension_numbers = #tpu.dot_dimension_numbers<[1], [0], [0], [1], [0, 0, 1, 1], [], []>} : vector<8x8xbf16>, vector<8x8xbf16>, vector<8x8xf32> -> vector<8x8xf32>
    %360 = arith.addf %356, %359 : vector<8x8xf32>
    %361 = tpu.reciprocal %354 {approx = true} : vector<8x1xf32> -> vector<8x1xf32>
    %362 = vector.broadcast %361 : vector<8x1xf32> to vector<8x8xf32>
    %363 = arith.mulf %360, %362 : vector<8x8xf32>
    %c0_125 = arith.constant 0 : index
    %c8_126 = arith.constant 8 : index
    %364 = vector.load %arg26[%c0_125, %c8_126] : memref<16x32xf32, #tpu.memory_space<vmem>>, vector<8x8xf32>
    tpu.vector_store %arg26[%c0_125, %c8_126], %363 {strides = array<i32>} : memref<16x32xf32, #tpu.memory_space<vmem>>, vector<8x8xf32>,
    %365 = vector.extract_strided_slice %302 {offsets = [0, 16], sizes = [8, 8], strides = [1, 1]} : vector<8x32xbf16> to vector<8x8xbf16>
    %cst_127 = arith.constant 0xFF800000 : f32
    %366 = vector.broadcast %cst_127 : f32 to vector<8x1xf32>
    %cst_128 = arith.constant 0.000000e+00 : f32
    %367 = vector.broadcast %cst_128 : f32 to vector<8x1xf32>
    %cst_129 = arith.constant 0.000000e+00 : f32
    %368 = vector.broadcast %cst_129 : f32 to vector<8x8xf32>
    %369 = vector.extract_strided_slice %303 {offsets = [0, 16], sizes = [8, 8], strides = [1, 1]} : vector<8x32xbf16> to vector<8x8xbf16>
    %cst_130 = arith.constant dense<0.000000e+00> : vector<8x8xf32>
    %370 = tpu.matmul %365, %369, %cst_130 {dimension_numbers = #tpu.dot_dimension_numbers<[1], [1], [0], [0], [0, 0, 1, 0], [], []>} : vector<8x8xbf16>, vector<8x8xbf16>, vector<8x8xf32> -> vector<8x8xf32>
    %371 = vector.broadcast %301 : vector<1x8xf32> to vector<8x8xf32>
    %372 = arith.addf %370, %371 : vector<8x8xf32>
    %cst_131 = arith.constant dense<0xFF800000> : vector<8xf32>
    %373 = vector.multi_reduction <maximumf>, %372, %cst_131 [1] : vector<8x8xf32> to vector<8xf32>
    %374 = vector.shape_cast %373 : vector<8xf32> to vector<8x1xf32>
    %375 = arith.maximumf %366, %374 : vector<8x1xf32>
    %376 = arith.subf %366, %375 : vector<8x1xf32>
    %377 = math.exp %376 : vector<8x1xf32>
    %378 = vector.broadcast %375 : vector<8x1xf32> to vector<8x8xf32>
    %379 = arith.subf %372, %378 : vector<8x8xf32>
    %380 = math.exp %379 : vector<8x8xf32>
    %381 = arith.mulf %377, %367 : vector<8x1xf32>
    %cst_132 = arith.constant dense<0.000000e+00> : vector<8xf32>
    %382 = vector.multi_reduction <add>, %380, %cst_132 [1] : vector<8x8xf32> to vector<8xf32>
    %383 = vector.shape_cast %382 : vector<8xf32> to vector<8x1xf32>
    %384 = arith.addf %381, %383 : vector<8x1xf32>
    %385 = vector.broadcast %377 : vector<8x1xf32> to vector<8x8xf32>
    %386 = arith.mulf %385, %368 : vector<8x8xf32>
    %387 = arith.truncf %380 : vector<8x8xf32> to vector<8x8xbf16>
    %388 = vector.extract_strided_slice %304 {offsets = [0, 16], sizes = [8, 8], strides = [1, 1]} : vector<8x32xbf16> to vector<8x8xbf16>
    %cst_133 = arith.constant dense<0.000000e+00> : vector<8x8xf32>
    %389 = tpu.matmul %387, %388, %cst_133 {dimension_numbers = #tpu.dot_dimension_numbers<[1], [0], [0], [1], [0, 0, 1, 1], [], []>} : vector<8x8xbf16>, vector<8x8xbf16>, vector<8x8xf32> -> vector<8x8xf32>
    %390 = arith.addf %386, %389 : vector<8x8xf32>
    %391 = tpu.reciprocal %384 {approx = true} : vector<8x1xf32> -> vector<8x1xf32>
    %392 = vector.broadcast %391 : vector<8x1xf32> to vector<8x8xf32>
    %393 = arith.mulf %390, %392 : vector<8x8xf32>
    %c0_134 = arith.constant 0 : index
    %c16_135 = arith.constant 16 : index
    %394 = vector.load %arg26[%c0_134, %c16_135] : memref<16x32xf32, #tpu.memory_space<vmem>>, vector<8x8xf32>
    tpu.vector_store %arg26[%c0_134, %c16_135], %393 {strides = array<i32>} : memref<16x32xf32, #tpu.memory_space<vmem>>, vector<8x8xf32>,
    %395 = vector.extract_strided_slice %302 {offsets = [0, 24], sizes = [8, 8], strides = [1, 1]} : vector<8x32xbf16> to vector<8x8xbf16>
    %cst_136 = arith.constant 0xFF800000 : f32
    %396 = vector.broadcast %cst_136 : f32 to vector<8x1xf32>
    %cst_137 = arith.constant 0.000000e+00 : f32
    %397 = vector.broadcast %cst_137 : f32 to vector<8x1xf32>
    %cst_138 = arith.constant 0.000000e+00 : f32
    %398 = vector.broadcast %cst_138 : f32 to vector<8x8xf32>
    %399 = vector.extract_strided_slice %303 {offsets = [0, 24], sizes = [8, 8], strides = [1, 1]} : vector<8x32xbf16> to vector<8x8xbf16>
    %cst_139 = arith.constant dense<0.000000e+00> : vector<8x8xf32>
    %400 = tpu.matmul %395, %399, %cst_139 {dimension_numbers = #tpu.dot_dimension_numbers<[1], [1], [0], [0], [0, 0, 1, 0], [], []>} : vector<8x8xbf16>, vector<8x8xbf16>, vector<8x8xf32> -> vector<8x8xf32>
    %401 = vector.broadcast %301 : vector<1x8xf32> to vector<8x8xf32>
    %402 = arith.addf %400, %401 : vector<8x8xf32>
    %cst_140 = arith.constant dense<0xFF800000> : vector<8xf32>
    %403 = vector.multi_reduction <maximumf>, %402, %cst_140 [1] : vector<8x8xf32> to vector<8xf32>
    %404 = vector.shape_cast %403 : vector<8xf32> to vector<8x1xf32>
    %405 = arith.maximumf %396, %404 : vector<8x1xf32>
    %406 = arith.subf %396, %405 : vector<8x1xf32>
    %407 = math.exp %406 : vector<8x1xf32>
    %408 = vector.broadcast %405 : vector<8x1xf32> to vector<8x8xf32>
    %409 = arith.subf %402, %408 : vector<8x8xf32>
    %410 = math.exp %409 : vector<8x8xf32>
    %411 = arith.mulf %407, %397 : vector<8x1xf32>
    %cst_141 = arith.constant dense<0.000000e+00> : vector<8xf32>
    %412 = vector.multi_reduction <add>, %410, %cst_141 [1] : vector<8x8xf32> to vector<8xf32>
    %413 = vector.shape_cast %412 : vector<8xf32> to vector<8x1xf32>
    %414 = arith.addf %411, %413 : vector<8x1xf32>
    %415 = vector.broadcast %407 : vector<8x1xf32> to vector<8x8xf32>
    %416 = arith.mulf %415, %398 : vector<8x8xf32>
    %417 = arith.truncf %410 : vector<8x8xf32> to vector<8x8xbf16>
    %418 = vector.extract_strided_slice %304 {offsets = [0, 24], sizes = [8, 8], strides = [1, 1]} : vector<8x32xbf16> to vector<8x8xbf16>
    %cst_142 = arith.constant dense<0.000000e+00> : vector<8x8xf32>
    %419 = tpu.matmul %417, %418, %cst_142 {dimension_numbers = #tpu.dot_dimension_numbers<[1], [0], [0], [1], [0, 0, 1, 1], [], []>} : vector<8x8xbf16>, vector<8x8xbf16>, vector<8x8xf32> -> vector<8x8xf32>
    %420 = arith.addf %416, %419 : vector<8x8xf32>
    %421 = tpu.reciprocal %414 {approx = true} : vector<8x1xf32> -> vector<8x1xf32>
    %422 = vector.broadcast %421 : vector<8x1xf32> to vector<8x8xf32>
    %423 = arith.mulf %420, %422 : vector<8x8xf32>
    %c0_143 = arith.constant 0 : index
    %c24_144 = arith.constant 24 : index
    %424 = vector.load %arg26[%c0_143, %c24_144] : memref<16x32xf32, #tpu.memory_space<vmem>>, vector<8x8xf32>
    tpu.vector_store %arg26[%c0_143, %c24_144], %423 {strides = array<i32>} : memref<16x32xf32, #tpu.memory_space<vmem>>, vector<8x8xf32>,
    %c1 = arith.constant 1 : index
    %c0_145 = arith.constant 0 : index
    %c0_146 = arith.constant 0 : index
    %425 = vector.load %arg3[%c1, %c0_145, %c0_146] : memref<2x1x8xf32, #tpu.memory_space<vmem>>, vector<1x1x8xf32>
    %426 = vector.shape_cast %425 : vector<1x1x8xf32> to vector<1x8xf32>
    %427 = vector.extract_strided_slice %291 {offsets = [8, 0], sizes = [8, 32], strides = [1, 1]} : vector<16x32xbf16> to vector<8x32xbf16>
    %428 = vector.extract_strided_slice %298 {offsets = [8, 0], sizes = [8, 32], strides = [1, 1]} : vector<16x32xbf16> to vector<8x32xbf16>
    %429 = vector.extract_strided_slice %299 {offsets = [8, 0], sizes = [8, 32], strides = [1, 1]} : vector<16x32xbf16> to vector<8x32xbf16>
    %430 = vector.extract_strided_slice %427 {offsets = [0, 0], sizes = [8, 8], strides = [1, 1]} : vector<8x32xbf16> to vector<8x8xbf16>
    %cst_147 = arith.constant 0xFF800000 : f32
    %431 = vector.broadcast %cst_147 : f32 to vector<8x1xf32>
    %cst_148 = arith.constant 0.000000e+00 : f32
    %432 = vector.broadcast %cst_148 : f32 to vector<8x1xf32>
    %cst_149 = arith.constant 0.000000e+00 : f32
    %433 = vector.broadcast %cst_149 : f32 to vector<8x8xf32>
    %434 = vector.extract_strided_slice %428 {offsets = [0, 0], sizes = [8, 8], strides = [1, 1]} : vector<8x32xbf16> to vector<8x8xbf16>
    %cst_150 = arith.constant dense<0.000000e+00> : vector<8x8xf32>
    %435 = tpu.matmul %430, %434, %cst_150 {dimension_numbers = #tpu.dot_dimension_numbers<[1], [1], [0], [0], [0, 0, 1, 0], [], []>} : vector<8x8xbf16>, vector<8x8xbf16>, vector<8x8xf32> -> vector<8x8xf32>
    %436 = vector.broadcast %426 : vector<1x8xf32> to vector<8x8xf32>
    %437 = arith.addf %435, %436 : vector<8x8xf32>
    %cst_151 = arith.constant dense<0xFF800000> : vector<8xf32>
    %438 = vector.multi_reduction <maximumf>, %437, %cst_151 [1] : vector<8x8xf32> to vector<8xf32>
    %439 = vector.shape_cast %438 : vector<8xf32> to vector<8x1xf32>
    %440 = arith.maximumf %431, %439 : vector<8x1xf32>
    %441 = arith.subf %431, %440 : vector<8x1xf32>
    %442 = math.exp %441 : vector<8x1xf32>
    %443 = vector.broadcast %440 : vector<8x1xf32> to vector<8x8xf32>
    %444 = arith.subf %437, %443 : vector<8x8xf32>
    %445 = math.exp %444 : vector<8x8xf32>
    %446 = arith.mulf %442, %432 : vector<8x1xf32>
    %cst_152 = arith.constant dense<0.000000e+00> : vector<8xf32>
    %447 = vector.multi_reduction <add>, %445, %cst_152 [1] : vector<8x8xf32> to vector<8xf32>
    %448 = vector.shape_cast %447 : vector<8xf32> to vector<8x1xf32>
    %449 = arith.addf %446, %448 : vector<8x1xf32>
    %450 = vector.broadcast %442 : vector<8x1xf32> to vector<8x8xf32>
    %451 = arith.mulf %450, %433 : vector<8x8xf32>
    %452 = arith.truncf %445 : vector<8x8xf32> to vector<8x8xbf16>
    %453 = vector.extract_strided_slice %429 {offsets = [0, 0], sizes = [8, 8], strides = [1, 1]} : vector<8x32xbf16> to vector<8x8xbf16>
    %cst_153 = arith.constant dense<0.000000e+00> : vector<8x8xf32>
    %454 = tpu.matmul %452, %453, %cst_153 {dimension_numbers = #tpu.dot_dimension_numbers<[1], [0], [0], [1], [0, 0, 1, 1], [], []>} : vector<8x8xbf16>, vector<8x8xbf16>, vector<8x8xf32> -> vector<8x8xf32>
    %455 = arith.addf %451, %454 : vector<8x8xf32>
    %456 = tpu.reciprocal %449 {approx = true} : vector<8x1xf32> -> vector<8x1xf32>
    %457 = vector.broadcast %456 : vector<8x1xf32> to vector<8x8xf32>
    %458 = arith.mulf %455, %457 : vector<8x8xf32>
    %c8_154 = arith.constant 8 : index
    %c0_155 = arith.constant 0 : index
    %459 = vector.load %arg26[%c8_154, %c0_155] : memref<16x32xf32, #tpu.memory_space<vmem>>, vector<8x8xf32>
    tpu.vector_store %arg26[%c8_154, %c0_155], %458 {strides = array<i32>} : memref<16x32xf32, #tpu.memory_space<vmem>>, vector<8x8xf32>,
    %460 = vector.extract_strided_slice %427 {offsets = [0, 8], sizes = [8, 8], strides = [1, 1]} : vector<8x32xbf16> to vector<8x8xbf16>
    %cst_156 = arith.constant 0xFF800000 : f32
    %461 = vector.broadcast %cst_156 : f32 to vector<8x1xf32>
    %cst_157 = arith.constant 0.000000e+00 : f32
    %462 = vector.broadcast %cst_157 : f32 to vector<8x1xf32>
    %cst_158 = arith.constant 0.000000e+00 : f32
    %463 = vector.broadcast %cst_158 : f32 to vector<8x8xf32>
    %464 = vector.extract_strided_slice %428 {offsets = [0, 8], sizes = [8, 8], strides = [1, 1]} : vector<8x32xbf16> to vector<8x8xbf16>
    %cst_159 = arith.constant dense<0.000000e+00> : vector<8x8xf32>
    %465 = tpu.matmul %460, %464, %cst_159 {dimension_numbers = #tpu.dot_dimension_numbers<[1], [1], [0], [0], [0, 0, 1, 0], [], []>} : vector<8x8xbf16>, vector<8x8xbf16>, vector<8x8xf32> -> vector<8x8xf32>
    %466 = vector.broadcast %426 : vector<1x8xf32> to vector<8x8xf32>
    %467 = arith.addf %465, %466 : vector<8x8xf32>
    %cst_160 = arith.constant dense<0xFF800000> : vector<8xf32>
    %468 = vector.multi_reduction <maximumf>, %467, %cst_160 [1] : vector<8x8xf32> to vector<8xf32>
    %469 = vector.shape_cast %468 : vector<8xf32> to vector<8x1xf32>
    %470 = arith.maximumf %461, %469 : vector<8x1xf32>
    %471 = arith.subf %461, %470 : vector<8x1xf32>
    %472 = math.exp %471 : vector<8x1xf32>
    %473 = vector.broadcast %470 : vector<8x1xf32> to vector<8x8xf32>
    %474 = arith.subf %467, %473 : vector<8x8xf32>
    %475 = math.exp %474 : vector<8x8xf32>
    %476 = arith.mulf %472, %462 : vector<8x1xf32>
    %cst_161 = arith.constant dense<0.000000e+00> : vector<8xf32>
    %477 = vector.multi_reduction <add>, %475, %cst_161 [1] : vector<8x8xf32> to vector<8xf32>
    %478 = vector.shape_cast %477 : vector<8xf32> to vector<8x1xf32>
    %479 = arith.addf %476, %478 : vector<8x1xf32>
    %480 = vector.broadcast %472 : vector<8x1xf32> to vector<8x8xf32>
    %481 = arith.mulf %480, %463 : vector<8x8xf32>
    %482 = arith.truncf %475 : vector<8x8xf32> to vector<8x8xbf16>
    %483 = vector.extract_strided_slice %429 {offsets = [0, 8], sizes = [8, 8], strides = [1, 1]} : vector<8x32xbf16> to vector<8x8xbf16>
    %cst_162 = arith.constant dense<0.000000e+00> : vector<8x8xf32>
    %484 = tpu.matmul %482, %483, %cst_162 {dimension_numbers = #tpu.dot_dimension_numbers<[1], [0], [0], [1], [0, 0, 1, 1], [], []>} : vector<8x8xbf16>, vector<8x8xbf16>, vector<8x8xf32> -> vector<8x8xf32>
    %485 = arith.addf %481, %484 : vector<8x8xf32>
    %486 = tpu.reciprocal %479 {approx = true} : vector<8x1xf32> -> vector<8x1xf32>
    %487 = vector.broadcast %486 : vector<8x1xf32> to vector<8x8xf32>
    %488 = arith.mulf %485, %487 : vector<8x8xf32>
    %c8_163 = arith.constant 8 : index
    %c8_164 = arith.constant 8 : index
    %489 = vector.load %arg26[%c8_163, %c8_164] : memref<16x32xf32, #tpu.memory_space<vmem>>, vector<8x8xf32>
    tpu.vector_store %arg26[%c8_163, %c8_164], %488 {strides = array<i32>} : memref<16x32xf32, #tpu.memory_space<vmem>>, vector<8x8xf32>,
    %490 = vector.extract_strided_slice %427 {offsets = [0, 16], sizes = [8, 8], strides = [1, 1]} : vector<8x32xbf16> to vector<8x8xbf16>
    %cst_165 = arith.constant 0xFF800000 : f32
    %491 = vector.broadcast %cst_165 : f32 to vector<8x1xf32>
    %cst_166 = arith.constant 0.000000e+00 : f32
    %492 = vector.broadcast %cst_166 : f32 to vector<8x1xf32>
    %cst_167 = arith.constant 0.000000e+00 : f32
    %493 = vector.broadcast %cst_167 : f32 to vector<8x8xf32>
    %494 = vector.extract_strided_slice %428 {offsets = [0, 16], sizes = [8, 8], strides = [1, 1]} : vector<8x32xbf16> to vector<8x8xbf16>
    %cst_168 = arith.constant dense<0.000000e+00> : vector<8x8xf32>
    %495 = tpu.matmul %490, %494, %cst_168 {dimension_numbers = #tpu.dot_dimension_numbers<[1], [1], [0], [0], [0, 0, 1, 0], [], []>} : vector<8x8xbf16>, vector<8x8xbf16>, vector<8x8xf32> -> vector<8x8xf32>
    %496 = vector.broadcast %426 : vector<1x8xf32> to vector<8x8xf32>
    %497 = arith.addf %495, %496 : vector<8x8xf32>
    %cst_169 = arith.constant dense<0xFF800000> : vector<8xf32>
    %498 = vector.multi_reduction <maximumf>, %497, %cst_169 [1] : vector<8x8xf32> to vector<8xf32>
    %499 = vector.shape_cast %498 : vector<8xf32> to vector<8x1xf32>
    %500 = arith.maximumf %491, %499 : vector<8x1xf32>
    %501 = arith.subf %491, %500 : vector<8x1xf32>
    %502 = math.exp %501 : vector<8x1xf32>
    %503 = vector.broadcast %500 : vector<8x1xf32> to vector<8x8xf32>
    %504 = arith.subf %497, %503 : vector<8x8xf32>
    %505 = math.exp %504 : vector<8x8xf32>
    %506 = arith.mulf %502, %492 : vector<8x1xf32>
    %cst_170 = arith.constant dense<0.000000e+00> : vector<8xf32>
    %507 = vector.multi_reduction <add>, %505, %cst_170 [1] : vector<8x8xf32> to vector<8xf32>
    %508 = vector.shape_cast %507 : vector<8xf32> to vector<8x1xf32>
    %509 = arith.addf %506, %508 : vector<8x1xf32>
    %510 = vector.broadcast %502 : vector<8x1xf32> to vector<8x8xf32>
    %511 = arith.mulf %510, %493 : vector<8x8xf32>
    %512 = arith.truncf %505 : vector<8x8xf32> to vector<8x8xbf16>
    %513 = vector.extract_strided_slice %429 {offsets = [0, 16], sizes = [8, 8], strides = [1, 1]} : vector<8x32xbf16> to vector<8x8xbf16>
    %cst_171 = arith.constant dense<0.000000e+00> : vector<8x8xf32>
    %514 = tpu.matmul %512, %513, %cst_171 {dimension_numbers = #tpu.dot_dimension_numbers<[1], [0], [0], [1], [0, 0, 1, 1], [], []>} : vector<8x8xbf16>, vector<8x8xbf16>, vector<8x8xf32> -> vector<8x8xf32>
    %515 = arith.addf %511, %514 : vector<8x8xf32>
    %516 = tpu.reciprocal %509 {approx = true} : vector<8x1xf32> -> vector<8x1xf32>
    %517 = vector.broadcast %516 : vector<8x1xf32> to vector<8x8xf32>
    %518 = arith.mulf %515, %517 : vector<8x8xf32>
    %c8_172 = arith.constant 8 : index
    %c16_173 = arith.constant 16 : index
    %519 = vector.load %arg26[%c8_172, %c16_173] : memref<16x32xf32, #tpu.memory_space<vmem>>, vector<8x8xf32>
    tpu.vector_store %arg26[%c8_172, %c16_173], %518 {strides = array<i32>} : memref<16x32xf32, #tpu.memory_space<vmem>>, vector<8x8xf32>,
    %520 = vector.extract_strided_slice %427 {offsets = [0, 24], sizes = [8, 8], strides = [1, 1]} : vector<8x32xbf16> to vector<8x8xbf16>
    %cst_174 = arith.constant 0xFF800000 : f32
    %521 = vector.broadcast %cst_174 : f32 to vector<8x1xf32>
    %cst_175 = arith.constant 0.000000e+00 : f32
    %522 = vector.broadcast %cst_175 : f32 to vector<8x1xf32>
    %cst_176 = arith.constant 0.000000e+00 : f32
    %523 = vector.broadcast %cst_176 : f32 to vector<8x8xf32>
    %524 = vector.extract_strided_slice %428 {offsets = [0, 24], sizes = [8, 8], strides = [1, 1]} : vector<8x32xbf16> to vector<8x8xbf16>
    %cst_177 = arith.constant dense<0.000000e+00> : vector<8x8xf32>
    %525 = tpu.matmul %520, %524, %cst_177 {dimension_numbers = #tpu.dot_dimension_numbers<[1], [1], [0], [0], [0, 0, 1, 0], [], []>} : vector<8x8xbf16>, vector<8x8xbf16>, vector<8x8xf32> -> vector<8x8xf32>
    %526 = vector.broadcast %426 : vector<1x8xf32> to vector<8x8xf32>
    %527 = arith.addf %525, %526 : vector<8x8xf32>
    %cst_178 = arith.constant dense<0xFF800000> : vector<8xf32>
    %528 = vector.multi_reduction <maximumf>, %527, %cst_178 [1] : vector<8x8xf32> to vector<8xf32>
    %529 = vector.shape_cast %528 : vector<8xf32> to vector<8x1xf32>
    %530 = arith.maximumf %521, %529 : vector<8x1xf32>
    %531 = arith.subf %521, %530 : vector<8x1xf32>
    %532 = math.exp %531 : vector<8x1xf32>
    %533 = vector.broadcast %530 : vector<8x1xf32> to vector<8x8xf32>
    %534 = arith.subf %527, %533 : vector<8x8xf32>
    %535 = math.exp %534 : vector<8x8xf32>
    %536 = arith.mulf %532, %522 : vector<8x1xf32>
    %cst_179 = arith.constant dense<0.000000e+00> : vector<8xf32>
    %537 = vector.multi_reduction <add>, %535, %cst_179 [1] : vector<8x8xf32> to vector<8xf32>
    %538 = vector.shape_cast %537 : vector<8xf32> to vector<8x1xf32>
    %539 = arith.addf %536, %538 : vector<8x1xf32>
    %540 = vector.broadcast %532 : vector<8x1xf32> to vector<8x8xf32>
    %541 = arith.mulf %540, %523 : vector<8x8xf32>
    %542 = arith.truncf %535 : vector<8x8xf32> to vector<8x8xbf16>
    %543 = vector.extract_strided_slice %429 {offsets = [0, 24], sizes = [8, 8], strides = [1, 1]} : vector<8x32xbf16> to vector<8x8xbf16>
    %cst_180 = arith.constant dense<0.000000e+00> : vector<8x8xf32>
    %544 = tpu.matmul %542, %543, %cst_180 {dimension_numbers = #tpu.dot_dimension_numbers<[1], [0], [0], [1], [0, 0, 1, 1], [], []>} : vector<8x8xbf16>, vector<8x8xbf16>, vector<8x8xf32> -> vector<8x8xf32>
    %545 = arith.addf %541, %544 : vector<8x8xf32>
    %546 = tpu.reciprocal %539 {approx = true} : vector<8x1xf32> -> vector<8x1xf32>
    %547 = vector.broadcast %546 : vector<8x1xf32> to vector<8x8xf32>
    %548 = arith.mulf %545, %547 : vector<8x8xf32>
    %c8_181 = arith.constant 8 : index
    %c24_182 = arith.constant 24 : index
    %549 = vector.load %arg26[%c8_181, %c24_182] : memref<16x32xf32, #tpu.memory_space<vmem>>, vector<8x8xf32>
    tpu.vector_store %arg26[%c8_181, %c24_182], %548 {strides = array<i32>} : memref<16x32xf32, #tpu.memory_space<vmem>>, vector<8x8xf32>,
    %c0_183 = arith.constant 0 : index
    %c0_184 = arith.constant 0 : index
    %550 = vector.load %arg26[%c0_183, %c0_184] : memref<16x32xf32, #tpu.memory_space<vmem>>, vector<16x32xf32>
    %551 = arith.truncf %550 : vector<16x32xf32> to vector<16x32xbf16>
    %c0_185 = arith.constant 0 : index
    %c0_186 = arith.constant 0 : index
    %552 = vector.load %arg13[%c0_185, %c0_186] : memref<32x32xbf16, #tpu.memory_space<vmem>>, vector<32x32xbf16>
    %cst_187 = arith.constant dense<0.000000e+00> : vector<16x32xf32>
    %553 = tpu.matmul %551, %552, %cst_187 {dimension_numbers = #tpu.dot_dimension_numbers<[1], [0], [0], [1], [0, 0, 1, 1], [], []>} : vector<16x32xbf16>, vector<32x32xbf16>, vector<16x32xf32> -> vector<16x32xf32>
    %c0_188 = arith.constant 0 : index
    %c0_189 = arith.constant 0 : index
    %554 = vector.load %arg14[%c0_188, %c0_189] : memref<1x32xf32, #tpu.memory_space<vmem>>, vector<1x32xf32>
    %555 = vector.broadcast %554 : vector<1x32xf32> to vector<16x32xf32>
    %556 = arith.addf %553, %555 : vector<16x32xf32>
    %557 = arith.addf %284, %556 : vector<16x32xf32>
    %cst_190 = arith.constant dense<0.000000e+00> : vector<16xf32>
    %558 = vector.multi_reduction <add>, %557, %cst_190 [1] : vector<16x32xf32> to vector<16xf32>
    %559 = vector.shape_cast %558 : vector<16xf32> to vector<16x1xf32>
    %cst_191 = arith.constant 3.200000e+01 : f32
    %560 = vector.broadcast %cst_191 : f32 to vector<16x1xf32>
    %561 = arith.divf %559, %560 : vector<16x1xf32>
    %562 = arith.mulf %557, %557 : vector<16x32xf32>
    %cst_192 = arith.constant dense<0.000000e+00> : vector<16xf32>
    %563 = vector.multi_reduction <add>, %562, %cst_192 [1] : vector<16x32xf32> to vector<16xf32>
    %564 = vector.shape_cast %563 : vector<16xf32> to vector<16x1xf32>
    %cst_193 = arith.constant 3.200000e+01 : f32
    %565 = vector.broadcast %cst_193 : f32 to vector<16x1xf32>
    %566 = arith.divf %564, %565 : vector<16x1xf32>
    %567 = arith.mulf %561, %561 : vector<16x1xf32>
    %568 = arith.subf %566, %567 : vector<16x1xf32>
    %569 = vector.broadcast %561 : vector<16x1xf32> to vector<16x32xf32>
    %570 = arith.subf %557, %569 : vector<16x32xf32>
    %cst_194 = arith.constant 9.99999974E-6 : f32
    %571 = vector.broadcast %cst_194 : f32 to vector<16x1xf32>
    %572 = arith.addf %568, %571 : vector<16x1xf32>
    %573 = math.rsqrt %572 : vector<16x1xf32>
    %574 = vector.broadcast %573 : vector<16x1xf32> to vector<16x32xf32>
    %575 = arith.mulf %570, %574 : vector<16x32xf32>
    %c0_195 = arith.constant 0 : index
    %c0_196 = arith.constant 0 : index
    %576 = vector.load %arg17[%c0_195, %c0_196] : memref<1x32xf32, #tpu.memory_space<vmem>>, vector<1x32xf32>
    %577 = vector.broadcast %576 : vector<1x32xf32> to vector<16x32xf32>
    %578 = arith.mulf %575, %577 : vector<16x32xf32>
    %c0_197 = arith.constant 0 : index
    %c0_198 = arith.constant 0 : index
    %579 = vector.load %arg18[%c0_197, %c0_198] : memref<1x32xf32, #tpu.memory_space<vmem>>, vector<1x32xf32>
    %580 = vector.broadcast %579 : vector<1x32xf32> to vector<16x32xf32>
    %581 = arith.addf %578, %580 : vector<16x32xf32>
    %582 = arith.truncf %581 : vector<16x32xf32> to vector<16x32xbf16>
    %c0_199 = arith.constant 0 : index
    %c0_200 = arith.constant 0 : index
    %583 = vector.load %arg19[%c0_199, %c0_200] : memref<32x64xbf16, #tpu.memory_space<vmem>>, vector<32x64xbf16>
    %cst_201 = arith.constant dense<0.000000e+00> : vector<16x64xf32>
    %584 = tpu.matmul %582, %583, %cst_201 {dimension_numbers = #tpu.dot_dimension_numbers<[1], [0], [0], [1], [0, 0, 1, 1], [], []>} : vector<16x32xbf16>, vector<32x64xbf16>, vector<16x64xf32> -> vector<16x64xf32>
    %c0_202 = arith.constant 0 : index
    %c0_203 = arith.constant 0 : index
    %585 = vector.load %arg20[%c0_202, %c0_203] : memref<1x64xf32, #tpu.memory_space<vmem>>, vector<1x64xf32>
    %586 = vector.broadcast %585 : vector<1x64xf32> to vector<16x64xf32>
    %587 = arith.addf %584, %586 : vector<16x64xf32>
    %cst_204 = arith.constant 0.000000e+00 : f32
    %588 = vector.broadcast %cst_204 : f32 to vector<16x64xf32>
    %589 = arith.maximumf %587, %588 : vector<16x64xf32>
    %590 = arith.truncf %589 : vector<16x64xf32> to vector<16x64xbf16>
    %c0_205 = arith.constant 0 : index
    %c0_206 = arith.constant 0 : index
    %591 = vector.load %arg21[%c0_205, %c0_206] : memref<64x32xbf16, #tpu.memory_space<vmem>>, vector<64x32xbf16>
    %cst_207 = arith.constant dense<0.000000e+00> : vector<16x32xf32>
    %592 = tpu.matmul %590, %591, %cst_207 {dimension_numbers = #tpu.dot_dimension_numbers<[1], [0], [0], [1], [0, 0, 1, 1], [], []>} : vector<16x64xbf16>, vector<64x32xbf16>, vector<16x32xf32> -> vector<16x32xf32>
    %c0_208 = arith.constant 0 : index
    %c0_209 = arith.constant 0 : index
    %593 = vector.load %arg22[%c0_208, %c0_209] : memref<1x32xf32, #tpu.memory_space<vmem>>, vector<1x32xf32>
    %594 = vector.broadcast %593 : vector<1x32xf32> to vector<16x32xf32>
    %595 = arith.addf %592, %594 : vector<16x32xf32>
    %596 = arith.addf %595, %595 : vector<16x32xf32>
    %cst_210 = arith.constant dense<0.000000e+00> : vector<16xf32>
    %597 = vector.multi_reduction <add>, %596, %cst_210 [1] : vector<16x32xf32> to vector<16xf32>
    %598 = vector.shape_cast %597 : vector<16xf32> to vector<16x1xf32>
    %cst_211 = arith.constant 3.200000e+01 : f32
    %599 = vector.broadcast %cst_211 : f32 to vector<16x1xf32>
    %600 = arith.divf %598, %599 : vector<16x1xf32>
    %601 = arith.mulf %596, %596 : vector<16x32xf32>
    %cst_212 = arith.constant dense<0.000000e+00> : vector<16xf32>
    %602 = vector.multi_reduction <add>, %601, %cst_212 [1] : vector<16x32xf32> to vector<16xf32>
    %603 = vector.shape_cast %602 : vector<16xf32> to vector<16x1xf32>
    %cst_213 = arith.constant 3.200000e+01 : f32
    %604 = vector.broadcast %cst_213 : f32 to vector<16x1xf32>
    %605 = arith.divf %603, %604 : vector<16x1xf32>
    %606 = arith.mulf %600, %600 : vector<16x1xf32>
    %607 = arith.subf %605, %606 : vector<16x1xf32>
    %608 = vector.broadcast %600 : vector<16x1xf32> to vector<16x32xf32>
    %609 = arith.subf %596, %608 : vector<16x32xf32>
    %cst_214 = arith.constant 9.99999974E-6 : f32
    %610 = vector.broadcast %cst_214 : f32 to vector<16x1xf32>
    %611 = arith.addf %607, %610 : vector<16x1xf32>
    %612 = math.rsqrt %611 : vector<16x1xf32>
    %613 = vector.broadcast %612 : vector<16x1xf32> to vector<16x32xf32>
    %614 = arith.mulf %609, %613 : vector<16x32xf32>
    %c0_215 = arith.constant 0 : index
    %c0_216 = arith.constant 0 : index
    %615 = vector.load %arg23[%c0_215, %c0_216] : memref<1x32xf32, #tpu.memory_space<vmem>>, vector<1x32xf32>
    %616 = vector.broadcast %615 : vector<1x32xf32> to vector<16x32xf32>
    %617 = arith.mulf %614, %616 : vector<16x32xf32>
    %c0_217 = arith.constant 0 : index
    %c0_218 = arith.constant 0 : index
    %618 = vector.load %arg24[%c0_217, %c0_218] : memref<1x32xf32, #tpu.memory_space<vmem>>, vector<1x32xf32>
    %619 = vector.broadcast %618 : vector<1x32xf32> to vector<16x32xf32>
    %620 = arith.addf %617, %619 : vector<16x32xf32>
    %621 = arith.truncf %620 : vector<16x32xf32> to vector<16x32xbf16>
    %622 = vector.shape_cast %621 : vector<16x32xbf16> to vector<2x8x32xbf16>
    %c0_219 = arith.constant 0 : index
    %c0_220 = arith.constant 0 : index
    %c0_221 = arith.constant 0 : index
    %623 = vector.load %arg25[%c0_219, %c0_220, %c0_221] : memref<2x8x32xbf16, #tpu.memory_space<vmem>>, vector<2x8x32xbf16>
    tpu.vector_store %arg25[%c0_219, %c0_220, %c0_221], %622 {strides = array<i32>} : memref<2x8x32xbf16, #tpu.memory_space<vmem>>, vector<2x8x32xbf16>,
    return
  }
  func.func @transform_0(%arg0: i32) -> (i32, i32, i32) {
    %c0_i32 = arith.constant 0 : i32
    %c0_i32_0 = arith.constant 0 : i32
    %c0_i32_1 = arith.constant 0 : i32
    return %arg0, %c0_i32, %c0_i32_0 : i32, i32, i32
  }
  func.func @transform_1(%arg0: i32) -> (i32, i32, i32) {
    %c0_i32 = arith.constant 0 : i32
    %c0_i32_0 = arith.constant 0 : i32
    %c0_i32_1 = arith.constant 0 : i32
    return %arg0, %c0_i32, %c0_i32_0 : i32, i32, i32
  }
  func.func @transform_2(%arg0: i32) -> (i32, i32, i32) {
    %c0_i32 = arith.constant 0 : i32
    %c0_i32_0 = arith.constant 0 : i32
    %c0_i32_1 = arith.constant 0 : i32
    return %arg0, %c0_i32, %c0_i32_0 : i32, i32, i32
  }
  func.func @transform_3(%arg0: i32) -> (i32, i32) {
    %c0_i32 = arith.constant 0 : i32
    %c0_i32_0 = arith.constant 0 : i32
    %c0_i32_1 = arith.constant 0 : i32
    return %c0_i32, %c0_i32_0 : i32, i32
  }
  func.func @transform_4(%arg0: i32) -> (i32, i32) {
    %c0_i32 = arith.constant 0 : i32
    %c0_i32_0 = arith.constant 0 : i32
    %c0_i32_1 = arith.constant 0 : i32
    return %c0_i32, %c0_i32_0 : i32, i32
  }
  func.func @transform_5(%arg0: i32) -> (i32, i32) {
    %c0_i32 = arith.constant 0 : i32
    %c0_i32_0 = arith.constant 0 : i32
    %c0_i32_1 = arith.constant 0 : i32
    return %c0_i32, %c0_i32_0 : i32, i32
  }
  func.func @transform_6(%arg0: i32) -> (i32, i32) {
    %c0_i32 = arith.constant 0 : i32
    %c0_i32_0 = arith.constant 0 : i32
    %c0_i32_1 = arith.constant 0 : i32
    return %c0_i32, %c0_i32_0 : i32, i32
  }
  func.func @transform_7(%arg0: i32) -> (i32, i32) {
    %c0_i32 = arith.constant 0 : i32
    %c0_i32_0 = arith.constant 0 : i32
    %c0_i32_1 = arith.constant 0 : i32
    return %c0_i32, %c0_i32_0 : i32, i32
  }
  func.func @transform_8(%arg0: i32) -> (i32, i32) {
    %c0_i32 = arith.constant 0 : i32
    %c0_i32_0 = arith.constant 0 : i32
    %c0_i32_1 = arith.constant 0 : i32
    return %c0_i32, %c0_i32_0 : i32, i32
  }
  func.func @transform_9(%arg0: i32) -> (i32, i32) {
    %c0_i32 = arith.constant 0 : i32
    %c0_i32_0 = arith.constant 0 : i32
    %c0_i32_1 = arith.constant 0 : i32
    return %c0_i32, %c0_i32_0 : i32, i32
  }
  func.func @transform_10(%arg0: i32) -> (i32, i32) {
    %c0_i32 = arith.constant 0 : i32
    %c0_i32_0 = arith.constant 0 : i32
    %c0_i32_1 = arith.constant 0 : i32
    return %c0_i32, %c0_i32_0 : i32, i32
  }
  func.func @transform_11(%arg0: i32) -> (i32, i32) {
    %c0_i32 = arith.constant 0 : i32
    %c0_i32_0 = arith.constant 0 : i32
    %c0_i32_1 = arith.constant 0 : i32
    return %c0_i32, %c0_i32_0 : i32, i32
  }
  func.func @transform_12(%arg0: i32) -> (i32, i32) {
    %c0_i32 = arith.constant 0 : i32
    %c0_i32_0 = arith.constant 0 : i32
    %c0_i32_1 = arith.constant 0 : i32
    return %c0_i32, %c0_i32_0 : i32, i32
  }
  func.func @transform_13(%arg0: i32) -> (i32, i32) {
    %c0_i32 = arith.constant 0 : i32
    %c0_i32_0 = arith.constant 0 : i32
    %c0_i32_1 = arith.constant 0 : i32
    return %c0_i32, %c0_i32_0 : i32, i32
  }
  func.func @transform_14(%arg0: i32) -> (i32, i32) {
    %c0_i32 = arith.constant 0 : i32
    %c0_i32_0 = arith.constant 0 : i32
    %c0_i32_1 = arith.constant 0 : i32
    return %c0_i32, %c0_i32_0 : i32, i32
  }
  func.func @transform_15(%arg0: i32) -> (i32, i32) {
    %c0_i32 = arith.constant 0 : i32
    %c0_i32_0 = arith.constant 0 : i32
    %c0_i32_1 = arith.constant 0 : i32
    return %c0_i32, %c0_i32_0 : i32, i32
  }
  func.func @transform_16(%arg0: i32) -> (i32, i32) {
    %c0_i32 = arith.constant 0 : i32
    %c0_i32_0 = arith.constant 0 : i32
    %c0_i32_1 = arith.constant 0 : i32
    return %c0_i32, %c0_i32_0 : i32, i32
  }
  func.func @transform_17(%arg0: i32) -> (i32, i32) {
    %c0_i32 = arith.constant 0 : i32
    %c0_i32_0 = arith.constant 0 : i32
    %c0_i32_1 = arith.constant 0 : i32
    return %c0_i32, %c0_i32_0 : i32, i32
  }
  func.func @transform_18(%arg0: i32) -> (i32, i32) {
    %c0_i32 = arith.constant 0 : i32
    %c0_i32_0 = arith.constant 0 : i32
    %c0_i32_1 = arith.constant 0 : i32
    return %c0_i32, %c0_i32_0 : i32, i32
  }
  func.func @transform_19(%arg0: i32) -> (i32, i32) {
    %c0_i32 = arith.constant 0 : i32
    %c0_i32_0 = arith.constant 0 : i32
    %c0_i32_1 = arith.constant 0 : i32
    return %c0_i32, %c0_i32_0 : i32, i32
  }
  func.func @transform_20(%arg0: i32) -> (i32, i32) {
    %c0_i32 = arith.constant 0 : i32
    %c0_i32_0 = arith.constant 0 : i32
    %c0_i32_1 = arith.constant 0 : i32
    return %c0_i32, %c0_i32_0 : i32, i32
  }
  func.func @transform_21(%arg0: i32) -> (i32, i32) {
    %c0_i32 = arith.constant 0 : i32
    %c0_i32_0 = arith.constant 0 : i32
    %c0_i32_1 = arith.constant 0 : i32
    return %c0_i32, %c0_i32_0 : i32, i32
  }
  func.func @transform_22(%arg0: i32) -> (i32, i32) {
    %c0_i32 = arith.constant 0 : i32
    %c0_i32_0 = arith.constant 0 : i32
    %c0_i32_1 = arith.constant 0 : i32
    return %c0_i32, %c0_i32_0 : i32, i32
  }
  func.func @transform_23(%arg0: i32) -> (i32, i32) {
    %c0_i32 = arith.constant 0 : i32
    %c0_i32_0 = arith.constant 0 : i32
    %c0_i32_1 = arith.constant 0 : i32
    return %c0_i32, %c0_i32_0 : i32, i32
  }
  func.func @transform_24(%arg0: i32) -> (i32, i32, i32) {
    %c0_i32 = arith.constant 0 : i32
    %c0_i32_0 = arith.constant 0 : i32
    %c0_i32_1 = arith.constant 0 : i32
    return %arg0, %c0_i32, %c0_i32_0 : i32, i32, i32
  }
}

</mosaic_0001>

<llo_original>
// kernel: tpu_custom_call.1
$region0: #{tpu_custom_call.1}
  #allocation0 [shape = 'u32[]', space=smem, size = 0x4, offset = 0x4, fixed_abs, tag = 'smem constant byte address 0x4 - core index']
  #allocation1 [shape = 'u32[144,128]{1,0:T(1,128)}', space=vmem, size = 0x12000, scoped, tag = 'internal scratch']
  %s0 = inlined_call_operand.hbm [shape: f32[8,128], index: 0, kind: input, shape index: {}]
  %s1 = inlined_call_operand.hbm [shape: f32[16,128], index: 1, kind: output, shape index: {}]
  %s2 = sld [smem:[#allocation0]]
  $region41: #{tpu_custom_call.1} parent=0
    _
  %s4 = ssub.s32 1, %s2
  %s5 = scalar_select 0, %s4, %s2
  $region1: #{tpu_custom_call.1} parent=0
    #allocation2 [shape = 'u8[4096]{0}', space=vmem, size = 0x1000, scoped, tag = 'input window, operand 0, single buffered']
    #allocation3 [shape = 's32[2]{0}', space=sflag, size = 0x8, scoped, tag = 'scoped memory for tpu_custom_call.1']
    #allocation4 [shape = 's32[2]{0}', space=sflag, size = 0x8, scoped, tag = 'scoped memory for tpu_custom_call.1']
    #allocation5 [shape = 'u8[8192]{0}', space=vmem, size = 0x2000, scoped, tag = 'output window, operand 0']
    %6 = vsyncpa [#allocation3], 0
    %7 = vsyncpa [#allocation4], 0
    %s8 = scalar_lea.sflag [#allocation4], 1
    %9 = vsyncpa %s8, 0
    loop: start=0, step=1, limit=4
    $region2: #{tpu_custom_call.1} parent=1 // loop_pre_header
      _
    $region3: #{tpu_custom_call.1} parent=1 // loop_header
      %s11 = sphi 0, %s15
      %p12 = scmp.ge.s32.totalorder %s11, 4
      %s19 = sphi 0, %s19
      %s21 = sphi 0, %s19
      %s22 = sphi 0, %s21
      %s36 = sphi 0, %s22
      %s42 = sphi 0, %s44
      %s45 = sphi 0, %s42
      %s46 = sphi 0, %s45
      %s62 = sphi 0, %s46
    $region4: #{tpu_custom_call.1} parent=1 // loop_header_branch
      %14 = sbr.rel (%p12) target = $region8
    $region5: #{tpu_custom_call.1} parent=1 // loop_body
      %s16 = ssub.s32 %s11, 1
      %s17 = ssub.s32 %s11, 2
      %s18 = sadd.s32 %s11, 1
      %s20 = sadd.s32 %s19, 1
      %p23 = scmp.eq.s32.totalorder %s11, 1
      %p24 = scmp.ne.s32.totalorder %s19, %s21
      %p25 = scmp.eq.s32.totalorder %s11, 0
      %p26 = por %p24, %p25
      %p27 = scmp.ne.s32.totalorder %s19, %s21
      %p28 = scmp.eq.s32.totalorder %s16, 1
      %p29 = por %p27, %p28
      %p30 = scmp.ne.s32.totalorder %s21, %s22
      %p31 = scmp.eq.s32.totalorder %s16, 0
      %p32 = por %p30, %p31
      %p33 = scmp.ne.s32.totalorder %s21, %s22
      %p34 = scmp.eq.s32.totalorder %s17, 1
      %p35 = por %p33, %p34
      %p37 = scmp.ne.s32.totalorder %s22, %s36
      %p38 = scmp.eq.s32.totalorder %s17, 0
      %p39 = por %p37, %p38
      %s40 = ssub.s32 %s11, %s18
      %p41 = scmp.eq.s32.totalorder %s40, 0
      %s43 = sadd.s32 %s42, 1
      %s44 = scalar_select %p41, %s42, %s43
      %p47 = pneg %p41
      %p48 = scmp.eq.s32.totalorder %s11, 1
      %p49 = por %p47, %p48
      %p50 = scmp.ne.s32.totalorder %s42, %s45
      %p51 = scmp.eq.s32.totalorder %s11, 0
      %p52 = por %p50, %p51
      %p53 = scmp.ne.s32.totalorder %s42, %s45
      %p54 = scmp.eq.s32.totalorder %s16, 1
      %p55 = por %p53, %p54
      %p56 = scmp.ne.s32.totalorder %s45, %s46
      %p57 = scmp.eq.s32.totalorder %s16, 0
      %p58 = por %p56, %p57
      %p59 = scmp.ne.s32.totalorder %s45, %s46
      %p60 = scmp.eq.s32.totalorder %s17, 1
      %p61 = por %p59, %p60
      %p63 = scmp.ne.s32.totalorder %s46, %s62
      %p64 = scmp.eq.s32.totalorder %s17, 0
      %p65 = por %p63, %p64
      %p66 = scmp.le.s32.totalorder 1, %s11
      %p67 = scmp.lt.s32.totalorder %s11, 3
      %p68 = pnand %p66, %p67
      %p69 = pneg %p68
      // Predicated region
      $region9: #{tpu_custom_call.1} parent=5 // pred_check
        _
      $region10: #{tpu_custom_call.1} parent=5 // pred_check_branch
        %71 = sbr.rel (%p68) target = $region12
      $region11: #{tpu_custom_call.1} parent=5 // pred_region
        %s72 = ssub.s32 %s11, 1
        // Predicated region
        $region13: #{tpu_custom_call.1} parent=11 // pred_check
          %p73 = pneg %p32
        $region14: #{tpu_custom_call.1} parent=11 // pred_check_branch
          %75 = sbr.rel (%p73) target = $region16
        $region15: #{tpu_custom_call.1} parent=11 // pred_region
          %s77 = ssub.s32 128, 128
          %78 = vsyncadd [#allocation3], %s77
          %s80 = sshll.u32 [#allocation2], 4
          %s81 = int_to_ptr.vmem [resolvable:$true] %s80
          %83 = dma.hbm_to_vmem [thread:$0]  %s0, 128, %s81, [#allocation3]
        $region16: #{tpu_custom_call.1} parent=11 // pred_fallthru
          _
      $region12: #{tpu_custom_call.1} parent=5 // pred_fallthru
        _
      %p84 = scmp.lt.s32.totalorder %s11, 2
      // Predicated region
      $region17: #{tpu_custom_call.1} parent=5 // pred_check
        %p85 = pneg %p84
      $region18: #{tpu_custom_call.1} parent=5 // pred_check_branch
        %87 = sbr.rel (%p85) target = $region20
      $region19: #{tpu_custom_call.1} parent=5 // pred_region
        _
      $region20: #{tpu_custom_call.1} parent=5 // pred_fallthru
        _
      %p88 = scmp.le.s32.totalorder 1, %s11
      %p89 = scmp.lt.s32.totalorder %s11, 3
      %p90 = pnand %p88, %p89
      %p91 = pneg %p90
      // Predicated region
      $region21: #{tpu_custom_call.1} parent=5 // pred_check
        _
      $region22: #{tpu_custom_call.1} parent=5 // pred_check_branch
        %93 = sbr.rel (%p90) target = $region24
      $region23: #{tpu_custom_call.1} parent=5 // pred_region
        %s94 = ssub.s32 %s11, 1
        // Predicated region
        $region25: #{tpu_custom_call.1} parent=23 // pred_check
          %p95 = pneg %p32
        $region26: #{tpu_custom_call.1} parent=23 // pred_check_branch
          %97 = sbr.rel (%p95) target = $region28
        $region27: #{tpu_custom_call.1} parent=23 // pred_region
          %98 = dma.done [#allocation3], 128
        $region28: #{tpu_custom_call.1} parent=23 // pred_fallthru
          _
        %p99 = pneg %p32
        %p100 = pneg %p29
        %p101 = pneg %p58
        %p102 = pneg %p55
        %s103 = sand.u32 %s45, 1
        %s104 = scalar_lea.sflag [#allocation4], %s103
        %s105 = sand.u32 %s45, 1
        %s106 = smul.addr %s105, 8
        %s107 = scalar_lea.vmem [#allocation5], %s106
        %v108 = vld [vmem:[#allocation2] sm:$0xff]
        %109 = vst [vmem:[%s107] sm:$0xff] %v108
        %s110 = sand.u32 %s45, 1
        %s111 = scalar_lea.sflag [#allocation4], %s110
        %s112 = sand.u32 %s45, 1
        %s113 = smul.addr %s112, 8
        %s114 = scalar_lea.vmem [#allocation5], %s113
        // Predicated region
        $region29: #{tpu_custom_call.1} parent=23 // pred_check
          %p115 = pneg %p55
        $region30: #{tpu_custom_call.1} parent=23 // pred_check_branch
          %117 = sbr.rel (%p115) target = $region32
        $region31: #{tpu_custom_call.1} parent=23 // pred_region
          %s119 = ssub.s32 128, 128
          %120 = vsyncadd %s111, %s119
          %s121 = smul.addr %s16, 128
          %s122 = scalar_lea.hbm %s1, %s121
          %s124 = sshll.u32 %s114, 4
          %s125 = int_to_ptr.vmem [resolvable:$true] %s124
          %127 = dma.vmem_to_hbm [thread:$0]  %s125, 128, %s122, %s111
        $region32: #{tpu_custom_call.1} parent=23 // pred_fallthru
          _
      $region24: #{tpu_custom_call.1} parent=5 // pred_fallthru
        _
      %p128 = scmp.le.s32.totalorder 2, %s11
      // Predicated region
      $region33: #{tpu_custom_call.1} parent=5 // pred_check
        %p129 = pneg %p128
      $region34: #{tpu_custom_call.1} parent=5 // pred_check_branch
        %131 = sbr.rel (%p129) target = $region36
      $region35: #{tpu_custom_call.1} parent=5 // pred_region
        %s132 = ssub.s32 %s11, 2
        // Predicated region
        $region37: #{tpu_custom_call.1} parent=35 // pred_check
          %p133 = pneg %p61
        $region38: #{tpu_custom_call.1} parent=35 // pred_check_branch
          %135 = sbr.rel (%p133) target = $region40
        $region39: #{tpu_custom_call.1} parent=35 // pred_region
          %s136 = sand.u32 %s46, 1
          %s137 = scalar_lea.sflag [#allocation4], %s136
          %s138 = sand.u32 %s46, 1
          %s139 = smul.addr %s138, 8
          %s140 = scalar_lea.vmem [#allocation5], %s139
          %141 = dma.done %s137, 128
        $region40: #{tpu_custom_call.1} parent=35 // pred_fallthru
          _
      $region36: #{tpu_custom_call.1} parent=5 // pred_fallthru
        _
    $region6: #{tpu_custom_call.1} parent=1 // loop_footer
      %s15 = sadd.s32 1, %s11
    $region7: #{tpu_custom_call.1} parent=1 // loop_footer_branch
      %10 = sbr.rel target = $region3
    $region8: #{tpu_custom_call.1} parent=1 // loop_exit
      _
    %142 = vsyncpa [#allocation3], 1
    %s143 = scalar_lea.sflag [#allocation3], 1
    %144 = vsyncpa %s143, 1
    %145 = vsyncpa [#allocation4], 1
    %s146 = scalar_lea.sflag [#allocation4], 1
    %147 = vsyncpa %s146, 1

// kernel: transformer_decoder_layer.1
$region0: #{transformer_decoder_layer.1}
  #allocation0 [shape = 'u32[]', space=smem, size = 0x4, offset = 0x4, fixed_abs, tag = 'smem constant byte address 0x4 - core index']
  #allocation1 [shape = 'u32[144,128]{1,0:T(1,128)}', space=vmem, size = 0x12000, scoped, tag = 'internal scratch']
  #allocation2 [shape = 'f32[16,32]{1,0:T(8,128)}', space=vmem, size = 0x2000, scoped, tag = 'scratch operand']
  %s0 = inlined_call_operand.vmem [shape: bf16[2,8,32], index: 0, kind: input, shape index: {}]
  %s1 = inlined_call_operand.vmem [shape: bf16[2,8,32], index: 1, kind: input, shape index: {}]
  %s2 = inlined_call_operand.vmem [shape: f32[2,1,8], index: 2, kind: input, shape index: {}]
  %s3 = inlined_call_operand.vmem [shape: f32[8,8], index: 3, kind: input, shape index: {}]
  %s4 = inlined_call_operand.vmem [shape: bf16[32,96], index: 4, kind: input, shape index: {}]
  %s5 = inlined_call_operand.vmem [shape: f32[1,96], index: 5, kind: input, shape index: {}]
  %s6 = inlined_call_operand.vmem [shape: bf16[32,32], index: 6, kind: input, shape index: {}]
  %s7 = inlined_call_operand.vmem [shape: f32[1,32], index: 7, kind: input, shape index: {}]
  %s8 = inlined_call_operand.vmem [shape: bf16[32,32], index: 8, kind: input, shape index: {}]
  %s9 = inlined_call_operand.vmem [shape: f32[1,32], index: 9, kind: input, shape index: {}]
  %s10 = inlined_call_operand.vmem [shape: bf16[32,64], index: 10, kind: input, shape index: {}]
  %s11 = inlined_call_operand.vmem [shape: f32[1,64], index: 11, kind: input, shape index: {}]
  %s12 = inlined_call_operand.vmem [shape: bf16[32,32], index: 12, kind: input, shape index: {}]
  %s13 = inlined_call_operand.vmem [shape: f32[1,32], index: 13, kind: input, shape index: {}]
  %s14 = inlined_call_operand.vmem [shape: f32[1,32], index: 14, kind: input, shape index: {}]
  %s15 = inlined_call_operand.vmem [shape: f32[1,32], index: 15, kind: input, shape index: {}]
  %s16 = inlined_call_operand.vmem [shape: f32[1,32], index: 16, kind: input, shape index: {}]
  %s17 = inlined_call_operand.vmem [shape: f32[1,32], index: 17, kind: input, shape index: {}]
  %s18 = inlined_call_operand.vmem [shape: bf16[32,64], index: 18, kind: input, shape index: {}]
  %s19 = inlined_call_operand.vmem [shape: f32[1,64], index: 19, kind: input, shape index: {}]
  %s20 = inlined_call_operand.vmem [shape: bf16[64,32], index: 20, kind: input, shape index: {}]
  %s21 = inlined_call_operand.vmem [shape: f32[1,32], index: 21, kind: input, shape index: {}]
  %s22 = inlined_call_operand.vmem [shape: f32[1,32], index: 22, kind: input, shape index: {}]
  %s23 = inlined_call_operand.vmem [shape: f32[1,32], index: 23, kind: input, shape index: {}]
  %s24 = inlined_call_operand.hbm [shape: bf16[2,8,32], index: 24, kind: output, shape index: {}]
  %s25 = sld [smem:[#allocation0]]
  $region106: #{transformer_decoder_layer.1} parent=0
    _
  %s27 = ssub.s32 1, %s25
  %s28 = scalar_select 0, %s27, %s25
  $region1: #{transformer_decoder_layer.1} parent=0
    #allocation3 [shape = 'u8[4096]{0}', space=vmem, size = 0x1000, scoped, tag = 'output window, operand 0, single buffered']
    #allocation4 [shape = 's32[1]{0}', space=sflag, size = 0x4, scoped, tag = 'scoped memory for transformer_decoder_layer.1']
    %29 = vsyncpa [#allocation4], 0
    // Predicated region
    $region2: #{transformer_decoder_layer.1} parent=1 // pred_check
      _
    $region3: #{transformer_decoder_layer.1} parent=1 // pred_check_branch
      %31 = sbr.rel (0) target = $region5
    $region4: #{transformer_decoder_layer.1} parent=1 // pred_region
      _
    $region5: #{transformer_decoder_layer.1} parent=1 // pred_fallthru
      _
    // Predicated region
    $region6: #{transformer_decoder_layer.1} parent=1 // pred_check
      _
    $region7: #{transformer_decoder_layer.1} parent=1 // pred_check_branch
      %33 = sbr.rel (0) target = $region9
    $region8: #{transformer_decoder_layer.1} parent=1 // pred_region
      _
    $region9: #{transformer_decoder_layer.1} parent=1 // pred_fallthru
      _
    // Predicated region
    $region10: #{transformer_decoder_layer.1} parent=1 // pred_check
      _
    $region11: #{transformer_decoder_layer.1} parent=1 // pred_check_branch
      %35 = sbr.rel (0) target = $region13
    $region12: #{transformer_decoder_layer.1} parent=1 // pred_region
      _
    $region13: #{transformer_decoder_layer.1} parent=1 // pred_fallthru
      _
    // Predicated region
    $region14: #{transformer_decoder_layer.1} parent=1 // pred_check
      _
    $region15: #{transformer_decoder_layer.1} parent=1 // pred_check_branch
      %37 = sbr.rel (0) target = $region17
    $region16: #{transformer_decoder_layer.1} parent=1 // pred_region
      _
    $region17: #{transformer_decoder_layer.1} parent=1 // pred_fallthru
      _
    // Predicated region
    $region18: #{transformer_decoder_layer.1} parent=1 // pred_check
      _
    $region19: #{transformer_decoder_layer.1} parent=1 // pred_check_branch
      %39 = sbr.rel (0) target = $region21
    $region20: #{transformer_decoder_layer.1} parent=1 // pred_region
      _
    $region21: #{transformer_decoder_layer.1} parent=1 // pred_fallthru
      _
    // Predicated region
    $region22: #{transformer_decoder_layer.1} parent=1 // pred_check
      _
    $region23: #{transformer_decoder_layer.1} parent=1 // pred_check_branch
      %41 = sbr.rel (0) target = $region25
    $region24: #{transformer_decoder_layer.1} parent=1 // pred_region
      _
    $region25: #{transformer_decoder_layer.1} parent=1 // pred_fallthru
      _
    // Predicated region
    $region26: #{transformer_decoder_layer.1} parent=1 // pred_check
      _
    $region27: #{transformer_decoder_layer.1} parent=1 // pred_check_branch
      %43 = sbr.rel (0) target = $region29
    $region28: #{transformer_decoder_layer.1} parent=1 // pred_region
      _
    $region29: #{transformer_decoder_layer.1} parent=1 // pred_fallthru
      _
    // Predicated region
    $region30: #{transformer_decoder_layer.1} parent=1 // pred_check
      _
    $region31: #{transformer_decoder_layer.1} parent=1 // pred_check_branch
      %45 = sbr.rel (0) target = $region33
    $region32: #{transformer_decoder_layer.1} parent=1 // pred_region
      _
    $region33: #{transformer_decoder_layer.1} parent=1 // pred_fallthru
      _
    // Predicated region
    $region34: #{transformer_decoder_layer.1} parent=1 // pred_check
      _
    $region35: #{transformer_decoder_layer.1} parent=1 // pred_check_branch
      %47 = sbr.rel (0) target = $region37
    $region36: #{transformer_decoder_layer.1} parent=1 // pred_region
      _
    $region37: #{transformer_decoder_layer.1} parent=1 // pred_fallthru
      _
    // Predicated region
    $region38: #{transformer_decoder_layer.1} parent=1 // pred_check
      _
    $region39: #{transformer_decoder_layer.1} parent=1 // pred_check_branch
      %49 = sbr.rel (0) target = $region41
    $region40: #{transformer_decoder_layer.1} parent=1 // pred_region
      _
    $region41: #{transformer_decoder_layer.1} parent=1 // pred_fallthru
      _
    // Predicated region
    $region42: #{transformer_decoder_layer.1} parent=1 // pred_check
      _
    $region43: #{transformer_decoder_layer.1} parent=1 // pred_check_branch
      %51 = sbr.rel (0) target = $region45
    $region44: #{transformer_decoder_layer.1} parent=1 // pred_region
      _
    $region45: #{transformer_decoder_layer.1} parent=1 // pred_fallthru
      _
    // Predicated region
    $region46: #{transformer_decoder_layer.1} parent=1 // pred_check
      _
    $region47: #{transformer_decoder_layer.1} parent=1 // pred_check_branch
      %53 = sbr.rel (0) target = $region49
    $region48: #{transformer_decoder_layer.1} parent=1 // pred_region
      _
    $region49: #{transformer_decoder_layer.1} parent=1 // pred_fallthru
      _
    // Predicated region
    $region50: #{transformer_decoder_layer.1} parent=1 // pred_check
      _
    $region51: #{transformer_decoder_layer.1} parent=1 // pred_check_branch
      %55 = sbr.rel (0) target = $region53
    $region52: #{transformer_decoder_layer.1} parent=1 // pred_region
      _
    $region53: #{transformer_decoder_layer.1} parent=1 // pred_fallthru
      _
    // Predicated region
    $region54: #{transformer_decoder_layer.1} parent=1 // pred_check
      _
    $region55: #{transformer_decoder_layer.1} parent=1 // pred_check_branch
      %57 = sbr.rel (0) target = $region57
    $region56: #{transformer_decoder_layer.1} parent=1 // pred_region
      _
    $region57: #{transformer_decoder_layer.1} parent=1 // pred_fallthru
      _
    // Predicated region
    $region58: #{transformer_decoder_layer.1} parent=1 // pred_check
      _
    $region59: #{transformer_decoder_layer.1} parent=1 // pred_check_branch
      %59 = sbr.rel (0) target = $region61
    $region60: #{transformer_decoder_layer.1} parent=1 // pred_region
      _
    $region61: #{transformer_decoder_layer.1} parent=1 // pred_fallthru
      _
    // Predicated region
    $region62: #{transformer_decoder_layer.1} parent=1 // pred_check
      _
    $region63: #{transformer_decoder_layer.1} parent=1 // pred_check_branch
      %61 = sbr.rel (0) target = $region65
    $region64: #{transformer_decoder_layer.1} parent=1 // pred_region
      _
    $region65: #{transformer_decoder_layer.1} parent=1 // pred_fallthru
      _
    // Predicated region
    $region66: #{transformer_decoder_layer.1} parent=1 // pred_check
      _
    $region67: #{transformer_decoder_layer.1} parent=1 // pred_check_branch
      %63 = sbr.rel (0) target = $region69
    $region68: #{transformer_decoder_layer.1} parent=1 // pred_region
      _
    $region69: #{transformer_decoder_layer.1} parent=1 // pred_fallthru
      _
    // Predicated region
    $region70: #{transformer_decoder_layer.1} parent=1 // pred_check
      _
    $region71: #{transformer_decoder_layer.1} parent=1 // pred_check_branch
      %65 = sbr.rel (0) target = $region73
    $region72: #{transformer_decoder_layer.1} parent=1 // pred_region
      _
    $region73: #{transformer_decoder_layer.1} parent=1 // pred_fallthru
      _
    // Predicated region
    $region74: #{transformer_decoder_layer.1} parent=1 // pred_check
      _
    $region75: #{transformer_decoder_layer.1} parent=1 // pred_check_branch
      %67 = sbr.rel (0) target = $region77
    $region76: #{transformer_decoder_layer.1} parent=1 // pred_region
      _
    $region77: #{transformer_decoder_layer.1} parent=1 // pred_fallthru
      _
    // Predicated region
    $region78: #{transformer_decoder_layer.1} parent=1 // pred_check
      _
    $region79: #{transformer_decoder_layer.1} parent=1 // pred_check_branch
      %69 = sbr.rel (0) target = $region81
    $region80: #{transformer_decoder_layer.1} parent=1 // pred_region
      _
    $region81: #{transformer_decoder_layer.1} parent=1 // pred_fallthru
      _
    // Predicated region
    $region82: #{transformer_decoder_layer.1} parent=1 // pred_check
      _
    $region83: #{transformer_decoder_layer.1} parent=1 // pred_check_branch
      %71 = sbr.rel (0) target = $region85
    $region84: #{transformer_decoder_layer.1} parent=1 // pred_region
      _
    $region85: #{transformer_decoder_layer.1} parent=1 // pred_fallthru
      _
    // Predicated region
    $region86: #{transformer_decoder_layer.1} parent=1 // pred_check
      _
    $region87: #{transformer_decoder_layer.1} parent=1 // pred_check_branch
      %73 = sbr.rel (0) target = $region89
    $region88: #{transformer_decoder_layer.1} parent=1 // pred_region
      _
    $region89: #{transformer_decoder_layer.1} parent=1 // pred_fallthru
      _
    // Predicated region
    $region90: #{transformer_decoder_layer.1} parent=1 // pred_check
      _
    $region91: #{transformer_decoder_layer.1} parent=1 // pred_check_branch
      %75 = sbr.rel (0) target = $region93
    $region92: #{transformer_decoder_layer.1} parent=1 // pred_region
      _
    $region93: #{transformer_decoder_layer.1} parent=1 // pred_fallthru
      _
    // Predicated region
    $region94: #{transformer_decoder_layer.1} parent=1 // pred_check
      _
    $region95: #{transformer_decoder_layer.1} parent=1 // pred_check_branch
      %77 = sbr.rel (0) target = $region97
    $region96: #{transformer_decoder_layer.1} parent=1 // pred_region
      _
    $region97: #{transformer_decoder_layer.1} parent=1 // pred_fallthru
      _
    %v79 = vld [vmem:[%s0] sm:$0xf]
    %v80 = vld [vmem:[%s0 + $0x4] sm:$0xf]
    %v81 = vld [vmem:[%s1] sm:$0xf]
    %v82 = vld [vmem:[%s1 + $0x4] sm:$0xf]
    %v83 = vunpack.c.l.bf16 %v79
    %v84 = vunpack.c.l.bf16 %v80
    %v85 = vld [vmem:[%s4] sm:$0xf]
    %v86 = vld [vmem:[%s4 + $0x4] sm:$0xf]
    %v87 = vld [vmem:[%s4 + $0x8] sm:$0xf]
    %v88 = vld [vmem:[%s4 + $0xc] sm:$0xf]
    %v89 = vld [vmem:[%s5] sm:$0x1]
    %v91 = vlaneseq
    %v92 = vshrl.u32 %v91, 7
    %v93 = vsub.s32 0, %v92
    %v94 = vrot.slane %v89, %v93
    %v98 = vunpack.c.l.b16 %v79
    %v99 = vunpack.c.l.b16 %v80
    %v100 = vpack.c.b16 %v99, %v98
    %v105 = vunpack.c.l.b16 %v85
    %v106 = vunpack.c.l.b16 %v86
    %v107 = vunpack.c.l.b16 %v87
    %v108 = vunpack.c.l.b16 %v88
    %v109 = vpack.c.b16 %v106, %v105
    %v110 = vpack.c.b16 %v108, %v107
    %vm113 = vcmask 261120
    %v115 = vsel %vm113, %v100, 0
    %117 = vmatprep.subr.bf16.mxu0 0
    %118 = vmatpush1.bf16.msra.mxu0 %v109
    %119 = vmatprep.subr.bf16.mxu0 0
    %120 = vmatpush1.bf16.msra.mxu0 %v110
    %121 = vmatprep.subr.bf16.mxu0 0
    %122 = vmatpush1.bf16.msra.mxu0 0
    %123 = vmatprep.subr.bf16.mxu0 0
    %124 = vmatpush1.bf16.msra.mxu0 0
    %125 = vmatprep.subr.bf16.mxu0 0
    %126 = vmatpush1.bf16.msra.mxu0 0
    %127 = vmatprep.subr.bf16.mxu0 0
    %128 = vmatpush1.bf16.msra.mxu0 0
    %129 = vmatprep.subr.bf16.mxu0 0
    %130 = vmatpush1.bf16.msra.mxu0 0
    %131 = vmatprep.subr.bf16.mxu0 0
    %132 = vmatpush1.bf16.msra.mxu0 0
    %133 = vmatprep.subr.bf16.mxu0 0
    %134 = vmatpush1.bf16.msra.mxu0 0
    %135 = vmatprep.subr.bf16.mxu0 0
    %136 = vmatpush1.bf16.msra.mxu0 0
    %137 = vmatprep.subr.bf16.mxu0 0
    %138 = vmatpush1.bf16.msra.mxu0 0
    %139 = vmatprep.subr.bf16.mxu0 0
    %140 = vmatpush1.bf16.msra.mxu0 0
    %141 = vmatprep.subr.bf16.mxu0 0
    %142 = vmatpush1.bf16.msra.mxu0 0
    %143 = vmatprep.subr.bf16.mxu0 0
    %144 = vmatpush1.bf16.msra.mxu0 0
    %145 = vmatprep.subr.bf16.mxu0 0
    %146 = vmatpush1.bf16.msra.mxu0 0
    %147 = vmatprep.subr.bf16.mxu0 0
    %148 = vmatpush1.bf16.msra.mxu0 0
    %149 = vmatprep.mubr.bf16.mxu0 0
    %150 = vmatmul.mubr.bf16.gmra.mrb[0].mxu0 %v115
    %v151 = vpop.f32.mrb[0].mxu0
    %v152 = vadd.f32 %v94, %v151
    %v153 = vpop.f32.mrb[0].mxu0
    %v154 = vpop.f32.mrb[0].mxu0
    %v155 = vadd.f32 %v94, %v154
    %v156 = vpop.f32.mrb[0].mxu0
    %157 = vdwg.mxu0
    %v158 = vpack.c.bf16 %v155, %v152
    %v159 = vld [vmem:[%s3] sm:$0xff]
    %161 = vrot.lane.b32.xlu0 %v158, 96
    %v162 = vpop.permute.xlu0 %161
    %vm163 = vcmask 64512
    %v165 = vsel %vm163, %v158, 0
    %v168 = vsel %vm163, %v162, 0
    %170 = vmatprep.subr.bf16.mxu0 0
    %171 = vmatpush1.bf16.xpose.msra.mxu0 %v168
    %172 = vmatprep.subr.bf16.mxu0 0
    %173 = vmatpush1.bf16.xpose.msra.mxu0 0
    %174 = vmatprep.subr.bf16.mxu0 0
    %175 = vmatpush1.bf16.xpose.msra.mxu0 0
    %176 = vmatprep.subr.bf16.mxu0 0
    %177 = vmatpush1.bf16.xpose.msra.mxu0 0
    %178 = vmatprep.subr.bf16.mxu0 0
    %179 = vmatpush1.bf16.xpose.msra.mxu0 0
    %180 = vmatprep.subr.bf16.mxu0 0
    %181 = vmatpush1.bf16.xpose.msra.mxu0 0
    %182 = vmatprep.subr.bf16.mxu0 0
    %183 = vmatpush1.bf16.xpose.msra.mxu0 0
    %184 = vmatprep.subr.bf16.mxu0 0
    %185 = vmatpush1.bf16.xpose.msra.mxu0 0
    %186 = vmatprep.subr.bf16.mxu0 0
    %187 = vmatpush1.bf16.xpose.msra.mxu0 0
    %188 = vmatprep.subr.bf16.mxu0 0
    %189 = vmatpush1.bf16.xpose.msra.mxu0 0
    %190 = vmatprep.subr.bf16.mxu0 0
    %191 = vmatpush1.bf16.xpose.msra.mxu0 0
    %192 = vmatprep.subr.bf16.mxu0 0
    %193 = vmatpush1.bf16.xpose.msra.mxu0 0
    %194 = vmatprep.subr.bf16.mxu0 0
    %195 = vmatpush1.bf16.xpose.msra.mxu0 0
    %196 = vmatprep.subr.bf16.mxu0 0
    %197 = vmatpush1.bf16.xpose.msra.mxu0 0
    %198 = vmatprep.subr.bf16.mxu0 0
    %199 = vmatpush1.bf16.xpose.msra.mxu0 0
    %200 = vmatprep.subr.bf16.mxu0 0
    %201 = vmatpush1.bf16.xpose.msra.mxu0 0
    %202 = vmatprep.mubr.bf16.mxu0 0
    %203 = vmatmul.mubr.bf16.gmra.mrb[0].mxu0 %v165
    %v204 = vpop.f32.mrb[0].mxu0
    %v205 = vadd.f32 %v159, %v204
    %v206 = vpop.f32.mrb[0].mxu0
    %v207 = vpop.f32.mrb[0].mxu0
    %v208 = vpop.f32.mrb[0].mxu0
    %209 = vdwg.mxu0
    %v210 = vsel %vm163, %v205, -inf
    %211 = vmax.xlane.f32.xlu0 %v210
    %v212 = vpop.xlane.xlu0 %211
    %v213 = vsub.f32 -inf, %v212
    %v214 = vmul.f32 %v213, 1.442695
    %v215 = vpow.pop %v214
    %v216 = vsub.f32 %v205, %v212
    %v217 = vmul.f32 %v216, 1.442695
    %v218 = vpow.pop %v217
    %v219 = vmul.f32 %v215, 0.0
    %v220 = vsel %vm163, %v218, 0.0
    %221 = vadd.xlane.f32.xlu0 %v220
    %v222 = vpop.xlane.xlu0 %221
    %v223 = vadd.f32 %v219, %v222
    %v224 = vpack.c.bf16 %v218, %v218
    %225 = vrot.lane.b32.xlu0 %v158, 64
    %v226 = vpop.permute.xlu0 %225
    %v228 = vsel %vm163, %v224, 0
    %vm230 = vcmask 1043456
    %v232 = vsel %vm230, %v226, 0
    %234 = vmatprep.subr.bf16.mxu0 0
    %235 = vmatpush1.bf16.msra.mxu0 %v232
    %236 = vmatprep.subr.bf16.mxu0 0
    %237 = vmatpush1.bf16.msra.mxu0 0
    %238 = vmatprep.subr.bf16.mxu0 0
    %239 = vmatpush1.bf16.msra.mxu0 0
    %240 = vmatprep.subr.bf16.mxu0 0
    %241 = vmatpush1.bf16.msra.mxu0 0
    %242 = vmatprep.subr.bf16.mxu0 0
    %243 = vmatpush1.bf16.msra.mxu0 0
    %244 = vmatprep.subr.bf16.mxu0 0
    %245 = vmatpush1.bf16.msra.mxu0 0
    %246 = vmatprep.subr.bf16.mxu0 0
    %247 = vmatpush1.bf16.msra.mxu0 0
    %248 = vmatprep.subr.bf16.mxu0 0
    %249 = vmatpush1.bf16.msra.mxu0 0
    %250 = vmatprep.subr.bf16.mxu0 0
    %251 = vmatpush1.bf16.msra.mxu0 0
    %252 = vmatprep.subr.bf16.mxu0 0
    %253 = vmatpush1.bf16.msra.mxu0 0
    %254 = vmatprep.subr.bf16.mxu0 0
    %255 = vmatpush1.bf16.msra.mxu0 0
    %256 = vmatprep.subr.bf16.mxu0 0
    %257 = vmatpush1.bf16.msra.mxu0 0
    %258 = vmatprep.subr.bf16.mxu0 0
    %259 = vmatpush1.bf16.msra.mxu0 0
    %260 = vmatprep.subr.bf16.mxu0 0
    %261 = vmatpush1.bf16.msra.mxu0 0
    %262 = vmatprep.subr.bf16.mxu0 0
    %263 = vmatpush1.bf16.msra.mxu0 0
    %264 = vmatprep.subr.bf16.mxu0 0
    %265 = vmatpush1.bf16.msra.mxu0 0
    %266 = vmatprep.mubr.bf16.mxu0 0
    %267 = vmatmul.mubr.bf16.gmra.mrb[0].mxu0 %v228
    %v268 = vpop.f32.mrb[0].mxu0
    %v269 = vadd.f32 0.0, %v268
    %v270 = vpop.f32.mrb[0].mxu0
    %v271 = vpop.f32.mrb[0].mxu0
    %v272 = vpop.f32.mrb[0].mxu0
    %273 = vdwg.mxu0
    %v274 = vadd.f32 %v219, %v269
    %v275 = vrcp.pop %v223
    %v276 = vmul.f32 %v274, %v275
    %277 = vst.msk [vmem:[#allocation2] sm:$0xff] %vm163, %v276
    %278 = vrot.lane.b32.xlu0 %v158, 120
    %v279 = vpop.permute.xlu0 %278
    %280 = vrot.lane.b32.xlu0 %v158, 88
    %v281 = vpop.permute.xlu0 %280
    %v283 = vsel %vm163, %v279, 0
    %v286 = vsel %vm163, %v281, 0
    %288 = vmatprep.subr.bf16.mxu0 0
    %289 = vmatpush1.bf16.xpose.msra.mxu0 %v286
    %290 = vmatprep.subr.bf16.mxu0 0
    %291 = vmatpush1.bf16.xpose.msra.mxu0 0
    %292 = vmatprep.subr.bf16.mxu0 0
    %293 = vmatpush1.bf16.xpose.msra.mxu0 0
    %294 = vmatprep.subr.bf16.mxu0 0
    %295 = vmatpush1.bf16.xpose.msra.mxu0 0
    %296 = vmatprep.subr.bf16.mxu0 0
    %297 = vmatpush1.bf16.xpose.msra.mxu0 0
    %298 = vmatprep.subr.bf16.mxu0 0
    %299 = vmatpush1.bf16.xpose.msra.mxu0 0
    %300 = vmatprep.subr.bf16.mxu0 0
    %301 = vmatpush1.bf16.xpose.msra.mxu0 0
    %302 = vmatprep.subr.bf16.mxu0 0
    %303 = vmatpush1.bf16.xpose.msra.mxu0 0
    %304 = vmatprep.subr.bf16.mxu0 0
    %305 = vmatpush1.bf16.xpose.msra.mxu0 0
    %306 = vmatprep.subr.bf16.mxu0 0
    %307 = vmatpush1.bf16.xpose.msra.mxu0 0
    %308 = vmatprep.subr.bf16.mxu0 0
    %309 = vmatpush1.bf16.xpose.msra.mxu0 0
    %310 = vmatprep.subr.bf16.mxu0 0
    %311 = vmatpush1.bf16.xpose.msra.mxu0 0
    %312 = vmatprep.subr.bf16.mxu0 0
    %313 = vmatpush1.bf16.xpose.msra.mxu0 0
    %314 = vmatprep.subr.bf16.mxu0 0
    %315 = vmatpush1.bf16.xpose.msra.mxu0 0
    %316 = vmatprep.subr.bf16.mxu0 0
    %317 = vmatpush1.bf16.xpose.msra.mxu0 0
    %318 = vmatprep.subr.bf16.mxu0 0
    %319 = vmatpush1.bf16.xpose.msra.mxu0 0
    %320 = vmatprep.mubr.bf16.mxu0 0
    %321 = vmatmul.mubr.bf16.gmra.mrb[0].mxu0 %v283
    %v322 = vpop.f32.mrb[0].mxu0
    %v323 = vadd.f32 %v159, %v322
    %v324 = vpop.f32.mrb[0].mxu0
    %v325 = vpop.f32.mrb[0].mxu0
    %v326 = vpop.f32.mrb[0].mxu0
    %327 = vdwg.mxu0
    %v328 = vsel %vm163, %v323, -inf
    %329 = vmax.xlane.f32.xlu0 %v328
    %v330 = vpop.xlane.xlu0 %329
    %v331 = vsub.f32 -inf, %v330
    %v332 = vmul.f32 %v331, 1.442695
    %v333 = vpow.pop %v332
    %v334 = vsub.f32 %v323, %v330
    %v335 = vmul.f32 %v334, 1.442695
    %v336 = vpow.pop %v335
    %v337 = vmul.f32 %v333, 0.0
    %v338 = vsel %vm163, %v336, 0.0
    %339 = vadd.xlane.f32.xlu0 %v338
    %v340 = vpop.xlane.xlu0 %339
    %v341 = vadd.f32 %v337, %v340
    %v342 = vpack.c.bf16 %v336, %v336
    %343 = vrot.lane.b32.xlu0 %v158, 56
    %v344 = vpop.permute.xlu0 %343
    %v346 = vsel %vm163, %v342, 0
    %v349 = vsel %vm230, %v344, 0
    %351 = vmatprep.subr.bf16.mxu0 0
    %352 = vmatpush1.bf16.msra.mxu0 %v349
    %353 = vmatprep.subr.bf16.mxu0 0
    %354 = vmatpush1.bf16.msra.mxu0 0
    %355 = vmatprep.subr.bf16.mxu0 0
    %356 = vmatpush1.bf16.msra.mxu0 0
    %357 = vmatprep.subr.bf16.mxu0 0
    %358 = vmatpush1.bf16.msra.mxu0 0
    %359 = vmatprep.subr.bf16.mxu0 0
    %360 = vmatpush1.bf16.msra.mxu0 0
    %361 = vmatprep.subr.bf16.mxu0 0
    %362 = vmatpush1.bf16.msra.mxu0 0
    %363 = vmatprep.subr.bf16.mxu0 0
    %364 = vmatpush1.bf16.msra.mxu0 0
    %365 = vmatprep.subr.bf16.mxu0 0
    %366 = vmatpush1.bf16.msra.mxu0 0
    %367 = vmatprep.subr.bf16.mxu0 0
    %368 = vmatpush1.bf16.msra.mxu0 0
    %369 = vmatprep.subr.bf16.mxu0 0
    %370 = vmatpush1.bf16.msra.mxu0 0
    %371 = vmatprep.subr.bf16.mxu0 0
    %372 = vmatpush1.bf16.msra.mxu0 0
    %373 = vmatprep.subr.bf16.mxu0 0
    %374 = vmatpush1.bf16.msra.mxu0 0
    %375 = vmatprep.subr.bf16.mxu0 0
    %376 = vmatpush1.bf16.msra.mxu0 0
    %377 = vmatprep.subr.bf16.mxu0 0
    %378 = vmatpush1.bf16.msra.mxu0 0
    %379 = vmatprep.subr.bf16.mxu0 0
    %380 = vmatpush1.bf16.msra.mxu0 0
    %381 = vmatprep.subr.bf16.mxu0 0
    %382 = vmatpush1.bf16.msra.mxu0 0
    %383 = vmatprep.mubr.bf16.mxu0 0
    %384 = vmatmul.mubr.bf16.gmra.mrb[0].mxu0 %v346
    %v385 = vpop.f32.mrb[0].mxu0
    %v386 = vadd.f32 0.0, %v385
    %v387 = vpop.f32.mrb[0].mxu0
    %v388 = vpop.f32.mrb[0].mxu0
    %v389 = vpop.f32.mrb[0].mxu0
    %390 = vdwg.mxu0
    %v391 = vadd.f32 %v337, %v386
    %v392 = vrcp.pop %v341
    %v393 = vmul.f32 %v391, %v392
    %395 = vrot.lane.b32.xlu0 %v393, 8
    %v396 = vpop.permute.xlu0 %395
    %vm398 = vcmask 130112
    %399 = vst.msk [vmem:[#allocation2] sm:$0xff] %vm398, %v396
    %400 = vrot.lane.b32.xlu0 %v158, 112
    %v401 = vpop.permute.xlu0 %400
    %402 = vrot.lane.b32.xlu0 %v158, 80
    %v403 = vpop.permute.xlu0 %402
    %v405 = vsel %vm163, %v401, 0
    %v408 = vsel %vm163, %v403, 0
    %410 = vmatprep.subr.bf16.mxu0 0
    %411 = vmatpush1.bf16.xpose.msra.mxu0 %v408
    %412 = vmatprep.subr.bf16.mxu0 0
    %413 = vmatpush1.bf16.xpose.msra.mxu0 0
    %414 = vmatprep.subr.bf16.mxu0 0
    %415 = vmatpush1.bf16.xpose.msra.mxu0 0
    %416 = vmatprep.subr.bf16.mxu0 0
    %417 = vmatpush1.bf16.xpose.msra.mxu0 0
    %418 = vmatprep.subr.bf16.mxu0 0
    %419 = vmatpush1.bf16.xpose.msra.mxu0 0
    %420 = vmatprep.subr.bf16.mxu0 0
    %421 = vmatpush1.bf16.xpose.msra.mxu0 0
    %422 = vmatprep.subr.bf16.mxu0 0
    %423 = vmatpush1.bf16.xpose.msra.mxu0 0
    %424 = vmatprep.subr.bf16.mxu0 0
    %425 = vmatpush1.bf16.xpose.msra.mxu0 0
    %426 = vmatprep.subr.bf16.mxu0 0
    %427 = vmatpush1.bf16.xpose.msra.mxu0 0
    %428 = vmatprep.subr.bf16.mxu0 0
    %429 = vmatpush1.bf16.xpose.msra.mxu0 0
    %430 = vmatprep.subr.bf16.mxu0 0
    %431 = vmatpush1.bf16.xpose.msra.mxu0 0
    %432 = vmatprep.subr.bf16.mxu0 0
    %433 = vmatpush1.bf16.xpose.msra.mxu0 0
    %434 = vmatprep.subr.bf16.mxu0 0
    %435 = vmatpush1.bf16.xpose.msra.mxu0 0
    %436 = vmatprep.subr.bf16.mxu0 0
    %437 = vmatpush1.bf16.xpose.msra.mxu0 0
    %438 = vmatprep.subr.bf16.mxu0 0
    %439 = vmatpush1.bf16.xpose.msra.mxu0 0
    %440 = vmatprep.subr.bf16.mxu0 0
    %441 = vmatpush1.bf16.xpose.msra.mxu0 0
    %442 = vmatprep.mubr.bf16.mxu0 0
    %443 = vmatmul.mubr.bf16.gmra.mrb[0].mxu0 %v405
    %v444 = vpop.f32.mrb[0].mxu0
    %v445 = vadd.f32 %v159, %v444
    %v446 = vpop.f32.mrb[0].mxu0
    %v447 = vpop.f32.mrb[0].mxu0
    %v448 = vpop.f32.mrb[0].mxu0
    %449 = vdwg.mxu0
    %v450 = vsel %vm163, %v445, -inf
    %451 = vmax.xlane.f32.xlu0 %v450
    %v452 = vpop.xlane.xlu0 %451
    %v453 = vsub.f32 -inf, %v452
    %v454 = vmul.f32 %v453, 1.442695
    %v455 = vpow.pop %v454
    %v456 = vsub.f32 %v445, %v452
    %v457 = vmul.f32 %v456, 1.442695
    %v458 = vpow.pop %v457
    %v459 = vmul.f32 %v455, 0.0
    %v460 = vsel %vm163, %v458, 0.0
    %461 = vadd.xlane.f32.xlu0 %v460
    %v462 = vpop.xlane.xlu0 %461
    %v463 = vadd.f32 %v459, %v462
    %v464 = vpack.c.bf16 %v458, %v458
    %465 = vrot.lane.b32.xlu0 %v158, 48
    %v466 = vpop.permute.xlu0 %465
    %v468 = vsel %vm163, %v464, 0
    %v471 = vsel %vm230, %v466, 0
    %473 = vmatprep.subr.bf16.mxu0 0
    %474 = vmatpush1.bf16.msra.mxu0 %v471
    %475 = vmatprep.subr.bf16.mxu0 0
    %476 = vmatpush1.bf16.msra.mxu0 0
    %477 = vmatprep.subr.bf16.mxu0 0
    %478 = vmatpush1.bf16.msra.mxu0 0
    %479 = vmatprep.subr.bf16.mxu0 0
    %480 = vmatpush1.bf16.msra.mxu0 0
    %481 = vmatprep.subr.bf16.mxu0 0
    %482 = vmatpush1.bf16.msra.mxu0 0
    %483 = vmatprep.subr.bf16.mxu0 0
    %484 = vmatpush1.bf16.msra.mxu0 0
    %485 = vmatprep.subr.bf16.mxu0 0
    %486 = vmatpush1.bf16.msra.mxu0 0
    %487 = vmatprep.subr.bf16.mxu0 0
    %488 = vmatpush1.bf16.msra.mxu0 0
    %489 = vmatprep.subr.bf16.mxu0 0
    %490 = vmatpush1.bf16.msra.mxu0 0
    %491 = vmatprep.subr.bf16.mxu0 0
    %492 = vmatpush1.bf16.msra.mxu0 0
    %493 = vmatprep.subr.bf16.mxu0 0
    %494 = vmatpush1.bf16.msra.mxu0 0
    %495 = vmatprep.subr.bf16.mxu0 0
    %496 = vmatpush1.bf16.msra.mxu0 0
    %497 = vmatprep.subr.bf16.mxu0 0
    %498 = vmatpush1.bf16.msra.mxu0 0
    %499 = vmatprep.subr.bf16.mxu0 0
    %500 = vmatpush1.bf16.msra.mxu0 0
    %501 = vmatprep.subr.bf16.mxu0 0
    %502 = vmatpush1.bf16.msra.mxu0 0
    %503 = vmatprep.subr.bf16.mxu0 0
    %504 = vmatpush1.bf16.msra.mxu0 0
    %505 = vmatprep.mubr.bf16.mxu0 0
    %506 = vmatmul.mubr.bf16.gmra.mrb[0].mxu0 %v468
    %v507 = vpop.f32.mrb[0].mxu0
    %v508 = vadd.f32 0.0, %v507
    %v509 = vpop.f32.mrb[0].mxu0
    %v510 = vpop.f32.mrb[0].mxu0
    %v511 = vpop.f32.mrb[0].mxu0
    %512 = vdwg.mxu0
    %v513 = vadd.f32 %v459, %v508
    %v514 = vrcp.pop %v463
    %v515 = vmul.f32 %v513, %v514
    %517 = vrot.lane.b32.xlu0 %v515, 16
    %v518 = vpop.permute.xlu0 %517
    %vm520 = vcmask 195712
    %521 = vst.msk [vmem:[#allocation2] sm:$0xff] %vm520, %v518
    %522 = vrot.lane.b32.xlu0 %v158, 104
    %v523 = vpop.permute.xlu0 %522
    %524 = vrot.lane.b32.xlu0 %v158, 72
    %v525 = vpop.permute.xlu0 %524
    %v527 = vsel %vm163, %v523, 0
    %v530 = vsel %vm163, %v525, 0
    %532 = vmatprep.subr.bf16.mxu0 0
    %533 = vmatpush1.bf16.xpose.msra.mxu0 %v530
    %534 = vmatprep.subr.bf16.mxu0 0
    %535 = vmatpush1.bf16.xpose.msra.mxu0 0
    %536 = vmatprep.subr.bf16.mxu0 0
    %537 = vmatpush1.bf16.xpose.msra.mxu0 0
    %538 = vmatprep.subr.bf16.mxu0 0
    %539 = vmatpush1.bf16.xpose.msra.mxu0 0
    %540 = vmatprep.subr.bf16.mxu0 0
    %541 = vmatpush1.bf16.xpose.msra.mxu0 0
    %542 = vmatprep.subr.bf16.mxu0 0
    %543 = vmatpush1.bf16.xpose.msra.mxu0 0
    %544 = vmatprep.subr.bf16.mxu0 0
    %545 = vmatpush1.bf16.xpose.msra.mxu0 0
    %546 = vmatprep.subr.bf16.mxu0 0
    %547 = vmatpush1.bf16.xpose.msra.mxu0 0
    %548 = vmatprep.subr.bf16.mxu0 0
    %549 = vmatpush1.bf16.xpose.msra.mxu0 0
    %550 = vmatprep.subr.bf16.mxu0 0
    %551 = vmatpush1.bf16.xpose.msra.mxu0 0
    %552 = vmatprep.subr.bf16.mxu0 0
    %553 = vmatpush1.bf16.xpose.msra.mxu0 0
    %554 = vmatprep.subr.bf16.mxu0 0
    %555 = vmatpush1.bf16.xpose.msra.mxu0 0
    %556 = vmatprep.subr.bf16.mxu0 0
    %557 = vmatpush1.bf16.xpose.msra.mxu0 0
    %558 = vmatprep.subr.bf16.mxu0 0
    %559 = vmatpush1.bf16.xpose.msra.mxu0 0
    %560 = vmatprep.subr.bf16.mxu0 0
    %561 = vmatpush1.bf16.xpose.msra.mxu0 0
    %562 = vmatprep.subr.bf16.mxu0 0
    %563 = vmatpush1.bf16.xpose.msra.mxu0 0
    %564 = vmatprep.mubr.bf16.mxu0 0
    %565 = vmatmul.mubr.bf16.gmra.mrb[0].mxu0 %v527
    %v566 = vpop.f32.mrb[0].mxu0
    %v567 = vadd.f32 %v159, %v566
    %v568 = vpop.f32.mrb[0].mxu0
    %v569 = vpop.f32.mrb[0].mxu0
    %v570 = vpop.f32.mrb[0].mxu0
    %571 = vdwg.mxu0
    %v572 = vsel %vm163, %v567, -inf
    %573 = vmax.xlane.f32.xlu0 %v572
    %v574 = vpop.xlane.xlu0 %573
    %v575 = vsub.f32 -inf, %v574
    %v576 = vmul.f32 %v575, 1.442695
    %v577 = vpow.pop %v576
    %v578 = vsub.f32 %v567, %v574
    %v579 = vmul.f32 %v578, 1.442695
    %v580 = vpow.pop %v579
    %v581 = vmul.f32 %v577, 0.0
    %v582 = vsel %vm163, %v580, 0.0
    %583 = vadd.xlane.f32.xlu0 %v582
    %v584 = vpop.xlane.xlu0 %583
    %v585 = vadd.f32 %v581, %v584
    %v586 = vpack.c.bf16 %v580, %v580
    %587 = vrot.lane.b32.xlu0 %v158, 40
    %v588 = vpop.permute.xlu0 %587
    %v590 = vsel %vm163, %v586, 0
    %v593 = vsel %vm230, %v588, 0
    %595 = vmatprep.subr.bf16.mxu0 0
    %596 = vmatpush1.bf16.msra.mxu0 %v593
    %597 = vmatprep.subr.bf16.mxu0 0
    %598 = vmatpush1.bf16.msra.mxu0 0
    %599 = vmatprep.subr.bf16.mxu0 0
    %600 = vmatpush1.bf16.msra.mxu0 0
    %601 = vmatprep.subr.bf16.mxu0 0
    %602 = vmatpush1.bf16.msra.mxu0 0
    %603 = vmatprep.subr.bf16.mxu0 0
    %604 = vmatpush1.bf16.msra.mxu0 0
    %605 = vmatprep.subr.bf16.mxu0 0
    %606 = vmatpush1.bf16.msra.mxu0 0
    %607 = vmatprep.subr.bf16.mxu0 0
    %608 = vmatpush1.bf16.msra.mxu0 0
    %609 = vmatprep.subr.bf16.mxu0 0
    %610 = vmatpush1.bf16.msra.mxu0 0
    %611 = vmatprep.subr.bf16.mxu0 0
    %612 = vmatpush1.bf16.msra.mxu0 0
    %613 = vmatprep.subr.bf16.mxu0 0
    %614 = vmatpush1.bf16.msra.mxu0 0
    %615 = vmatprep.subr.bf16.mxu0 0
    %616 = vmatpush1.bf16.msra.mxu0 0
    %617 = vmatprep.subr.bf16.mxu0 0
    %618 = vmatpush1.bf16.msra.mxu0 0
    %619 = vmatprep.subr.bf16.mxu0 0
    %620 = vmatpush1.bf16.msra.mxu0 0
    %621 = vmatprep.subr.bf16.mxu0 0
    %622 = vmatpush1.bf16.msra.mxu0 0
    %623 = vmatprep.subr.bf16.mxu0 0
    %624 = vmatpush1.bf16.msra.mxu0 0
    %625 = vmatprep.subr.bf16.mxu0 0
    %626 = vmatpush1.bf16.msra.mxu0 0
    %627 = vmatprep.mubr.bf16.mxu0 0
    %628 = vmatmul.mubr.bf16.gmra.mrb[0].mxu0 %v590
    %v629 = vpop.f32.mrb[0].mxu0
    %v630 = vadd.f32 0.0, %v629
    %v631 = vpop.f32.mrb[0].mxu0
    %v632 = vpop.f32.mrb[0].mxu0
    %v633 = vpop.f32.mrb[0].mxu0
    %634 = vdwg.mxu0
    %v635 = vadd.f32 %v581, %v630
    %v636 = vrcp.pop %v585
    %v637 = vmul.f32 %v635, %v636
    %639 = vrot.lane.b32.xlu0 %v637, 24
    %v640 = vpop.permute.xlu0 %639
    %vm642 = vcmask 261312
    %643 = vst.msk [vmem:[#allocation2] sm:$0xff] %vm642, %v640
    %v644 = vrot.slane %v158, 4
    %645 = vrot.lane.b32.xlu0 %v644, 96
    %v646 = vpop.permute.xlu0 %645
    %v648 = vsel %vm163, %v644, 0
    %v651 = vsel %vm163, %v646, 0
    %653 = vmatprep.subr.bf16.mxu0 0
    %654 = vmatpush1.bf16.xpose.msra.mxu0 %v651
    %655 = vmatprep.subr.bf16.mxu0 0
    %656 = vmatpush1.bf16.xpose.msra.mxu0 0
    %657 = vmatprep.subr.bf16.mxu0 0
    %658 = vmatpush1.bf16.xpose.msra.mxu0 0
    %659 = vmatprep.subr.bf16.mxu0 0
    %660 = vmatpush1.bf16.xpose.msra.mxu0 0
    %661 = vmatprep.subr.bf16.mxu0 0
    %662 = vmatpush1.bf16.xpose.msra.mxu0 0
    %663 = vmatprep.subr.bf16.mxu0 0
    %664 = vmatpush1.bf16.xpose.msra.mxu0 0
    %665 = vmatprep.subr.bf16.mxu0 0
    %666 = vmatpush1.bf16.xpose.msra.mxu0 0
    %667 = vmatprep.subr.bf16.mxu0 0
    %668 = vmatpush1.bf16.xpose.msra.mxu0 0
    %669 = vmatprep.subr.bf16.mxu0 0
    %670 = vmatpush1.bf16.xpose.msra.mxu0 0
    %671 = vmatprep.subr.bf16.mxu0 0
    %672 = vmatpush1.bf16.xpose.msra.mxu0 0
    %673 = vmatprep.subr.bf16.mxu0 0
    %674 = vmatpush1.bf16.xpose.msra.mxu0 0
    %675 = vmatprep.subr.bf16.mxu0 0
    %676 = vmatpush1.bf16.xpose.msra.mxu0 0
    %677 = vmatprep.subr.bf16.mxu0 0
    %678 = vmatpush1.bf16.xpose.msra.mxu0 0
    %679 = vmatprep.subr.bf16.mxu0 0
    %680 = vmatpush1.bf16.xpose.msra.mxu0 0
    %681 = vmatprep.subr.bf16.mxu0 0
    %682 = vmatpush1.bf16.xpose.msra.mxu0 0
    %683 = vmatprep.subr.bf16.mxu0 0
    %684 = vmatpush1.bf16.xpose.msra.mxu0 0
    %685 = vmatprep.mubr.bf16.mxu0 0
    %686 = vmatmul.mubr.bf16.gmra.mrb[0].mxu0 %v648
    %v687 = vpop.f32.mrb[0].mxu0
    %v688 = vadd.f32 %v159, %v687
    %v689 = vpop.f32.mrb[0].mxu0
    %v690 = vpop.f32.mrb[0].mxu0
    %v691 = vpop.f32.mrb[0].mxu0
    %692 = vdwg.mxu0
    %v693 = vsel %vm163, %v688, -inf
    %694 = vmax.xlane.f32.xlu0 %v693
    %v695 = vpop.xlane.xlu0 %694
    %v696 = vsub.f32 -inf, %v695
    %v697 = vmul.f32 %v696, 1.442695
    %v698 = vpow.pop %v697
    %v699 = vsub.f32 %v688, %v695
    %v700 = vmul.f32 %v699, 1.442695
    %v701 = vpow.pop %v700
    %v702 = vmul.f32 %v698, 0.0
    %v703 = vsel %vm163, %v701, 0.0
    %704 = vadd.xlane.f32.xlu0 %v703
    %v705 = vpop.xlane.xlu0 %704
    %v706 = vadd.f32 %v702, %v705
    %v707 = vpack.c.bf16 %v701, %v701
    %708 = vrot.lane.b32.xlu0 %v644, 64
    %v709 = vpop.permute.xlu0 %708
    %v711 = vsel %vm163, %v707, 0
    %v714 = vsel %vm230, %v709, 0
    %716 = vmatprep.subr.bf16.mxu0 0
    %717 = vmatpush1.bf16.msra.mxu0 %v714
    %718 = vmatprep.subr.bf16.mxu0 0
    %719 = vmatpush1.bf16.msra.mxu0 0
    %720 = vmatprep.subr.bf16.mxu0 0
    %721 = vmatpush1.bf16.msra.mxu0 0
    %722 = vmatprep.subr.bf16.mxu0 0
    %723 = vmatpush1.bf16.msra.mxu0 0
    %724 = vmatprep.subr.bf16.mxu0 0
    %725 = vmatpush1.bf16.msra.mxu0 0
    %726 = vmatprep.subr.bf16.mxu0 0
    %727 = vmatpush1.bf16.msra.mxu0 0
    %728 = vmatprep.subr.bf16.mxu0 0
    %729 = vmatpush1.bf16.msra.mxu0 0
    %730 = vmatprep.subr.bf16.mxu0 0
    %731 = vmatpush1.bf16.msra.mxu0 0
    %732 = vmatprep.subr.bf16.mxu0 0
    %733 = vmatpush1.bf16.msra.mxu0 0
    %734 = vmatprep.subr.bf16.mxu0 0
    %735 = vmatpush1.bf16.msra.mxu0 0
    %736 = vmatprep.subr.bf16.mxu0 0
    %737 = vmatpush1.bf16.msra.mxu0 0
    %738 = vmatprep.subr.bf16.mxu0 0
    %739 = vmatpush1.bf16.msra.mxu0 0
    %740 = vmatprep.subr.bf16.mxu0 0
    %741 = vmatpush1.bf16.msra.mxu0 0
    %742 = vmatprep.subr.bf16.mxu0 0
    %743 = vmatpush1.bf16.msra.mxu0 0
    %744 = vmatprep.subr.bf16.mxu0 0
    %745 = vmatpush1.bf16.msra.mxu0 0
    %746 = vmatprep.subr.bf16.mxu0 0
    %747 = vmatpush1.bf16.msra.mxu0 0
    %748 = vmatprep.mubr.bf16.mxu0 0
    %749 = vmatmul.mubr.bf16.gmra.mrb[0].mxu0 %v711
    %v750 = vpop.f32.mrb[0].mxu0
    %v751 = vadd.f32 0.0, %v750
    %v752 = vpop.f32.mrb[0].mxu0
    %v753 = vpop.f32.mrb[0].mxu0
    %v754 = vpop.f32.mrb[0].mxu0
    %755 = vdwg.mxu0
    %v756 = vadd.f32 %v702, %v751
    %v757 = vrcp.pop %v706
    %v758 = vmul.f32 %v756, %v757
    %759 = vst.msk [vmem:[#allocation2 + $0x8] sm:$0xff] %vm163, %v758
    %760 = vrot.lane.b32.xlu0 %v644, 120
    %v761 = vpop.permute.xlu0 %760
    %762 = vrot.lane.b32.xlu0 %v644, 88
    %v763 = vpop.permute.xlu0 %762
    %v765 = vsel %vm163, %v761, 0
    %v768 = vsel %vm163, %v763, 0
    %770 = vmatprep.subr.bf16.mxu0 0
    %771 = vmatpush1.bf16.xpose.msra.mxu0 %v768
    %772 = vmatprep.subr.bf16.mxu0 0
    %773 = vmatpush1.bf16.xpose.msra.mxu0 0
    %774 = vmatprep.subr.bf16.mxu0 0
    %775 = vmatpush1.bf16.xpose.msra.mxu0 0
    %776 = vmatprep.subr.bf16.mxu0 0
    %777 = vmatpush1.bf16.xpose.msra.mxu0 0
    %778 = vmatprep.subr.bf16.mxu0 0
    %779 = vmatpush1.bf16.xpose.msra.mxu0 0
    %780 = vmatprep.subr.bf16.mxu0 0
    %781 = vmatpush1.bf16.xpose.msra.mxu0 0
    %782 = vmatprep.subr.bf16.mxu0 0
    %783 = vmatpush1.bf16.xpose.msra.mxu0 0
    %784 = vmatprep.subr.bf16.mxu0 0
    %785 = vmatpush1.bf16.xpose.msra.mxu0 0
    %786 = vmatprep.subr.bf16.mxu0 0
    %787 = vmatpush1.bf16.xpose.msra.mxu0 0
    %788 = vmatprep.subr.bf16.mxu0 0
    %789 = vmatpush1.bf16.xpose.msra.mxu0 0
    %790 = vmatprep.subr.bf16.mxu0 0
    %791 = vmatpush1.bf16.xpose.msra.mxu0 0
    %792 = vmatprep.subr.bf16.mxu0 0
    %793 = vmatpush1.bf16.xpose.msra.mxu0 0
    %794 = vmatprep.subr.bf16.mxu0 0
    %795 = vmatpush1.bf16.xpose.msra.mxu0 0
    %796 = vmatprep.subr.bf16.mxu0 0
    %797 = vmatpush1.bf16.xpose.msra.mxu0 0
    %798 = vmatprep.subr.bf16.mxu0 0
    %799 = vmatpush1.bf16.xpose.msra.mxu0 0
    %800 = vmatprep.subr.bf16.mxu0 0
    %801 = vmatpush1.bf16.xpose.msra.mxu0 0
    %802 = vmatprep.mubr.bf16.mxu0 0
    %803 = vmatmul.mubr.bf16.gmra.mrb[0].mxu0 %v765
    %v804 = vpop.f32.mrb[0].mxu0
    %v805 = vadd.f32 %v159, %v804
    %v806 = vpop.f32.mrb[0].mxu0
    %v807 = vpop.f32.mrb[0].mxu0
    %v808 = vpop.f32.mrb[0].mxu0
    %809 = vdwg.mxu0
    %v810 = vsel %vm163, %v805, -inf
    %811 = vmax.xlane.f32.xlu0 %v810
    %v812 = vpop.xlane.xlu0 %811
    %v813 = vsub.f32 -inf, %v812
    %v814 = vmul.f32 %v813, 1.442695
    %v815 = vpow.pop %v814
    %v816 = vsub.f32 %v805, %v812
    %v817 = vmul.f32 %v816, 1.442695
    %v818 = vpow.pop %v817
    %v819 = vmul.f32 %v815, 0.0
    %v820 = vsel %vm163, %v818, 0.0
    %821 = vadd.xlane.f32.xlu0 %v820
    %v822 = vpop.xlane.xlu0 %821
    %v823 = vadd.f32 %v819, %v822
    %v824 = vpack.c.bf16 %v818, %v818
    %825 = vrot.lane.b32.xlu0 %v644, 56
    %v826 = vpop.permute.xlu0 %825
    %v828 = vsel %vm163, %v824, 0
    %v831 = vsel %vm230, %v826, 0
    %833 = vmatprep.subr.bf16.mxu0 0
    %834 = vmatpush1.bf16.msra.mxu0 %v831
    %835 = vmatprep.subr.bf16.mxu0 0
    %836 = vmatpush1.bf16.msra.mxu0 0
    %837 = vmatprep.subr.bf16.mxu0 0
    %838 = vmatpush1.bf16.msra.mxu0 0
    %839 = vmatprep.subr.bf16.mxu0 0
    %840 = vmatpush1.bf16.msra.mxu0 0
    %841 = vmatprep.subr.bf16.mxu0 0
    %842 = vmatpush1.bf16.msra.mxu0 0
    %843 = vmatprep.subr.bf16.mxu0 0
    %844 = vmatpush1.bf16.msra.mxu0 0
    %845 = vmatprep.subr.bf16.mxu0 0
    %846 = vmatpush1.bf16.msra.mxu0 0
    %847 = vmatprep.subr.bf16.mxu0 0
    %848 = vmatpush1.bf16.msra.mxu0 0
    %849 = vmatprep.subr.bf16.mxu0 0
    %850 = vmatpush1.bf16.msra.mxu0 0
    %851 = vmatprep.subr.bf16.mxu0 0
    %852 = vmatpush1.bf16.msra.mxu0 0
    %853 = vmatprep.subr.bf16.mxu0 0
    %854 = vmatpush1.bf16.msra.mxu0 0
    %855 = vmatprep.subr.bf16.mxu0 0
    %856 = vmatpush1.bf16.msra.mxu0 0
    %857 = vmatprep.subr.bf16.mxu0 0
    %858 = vmatpush1.bf16.msra.mxu0 0
    %859 = vmatprep.subr.bf16.mxu0 0
    %860 = vmatpush1.bf16.msra.mxu0 0
    %861 = vmatprep.subr.bf16.mxu0 0
    %862 = vmatpush1.bf16.msra.mxu0 0
    %863 = vmatprep.subr.bf16.mxu0 0
    %864 = vmatpush1.bf16.msra.mxu0 0
    %865 = vmatprep.mubr.bf16.mxu0 0
    %866 = vmatmul.mubr.bf16.gmra.mrb[0].mxu0 %v828
    %v867 = vpop.f32.mrb[0].mxu0
    %v868 = vadd.f32 0.0, %v867
    %v869 = vpop.f32.mrb[0].mxu0
    %v870 = vpop.f32.mrb[0].mxu0
    %v871 = vpop.f32.mrb[0].mxu0
    %872 = vdwg.mxu0
    %v873 = vadd.f32 %v819, %v868
    %v874 = vrcp.pop %v823
    %v875 = vmul.f32 %v873, %v874
    %877 = vrot.lane.b32.xlu0 %v875, 8
    %v878 = vpop.permute.xlu0 %877
    %880 = vst.msk [vmem:[#allocation2 + $0x8] sm:$0xff] %vm398, %v878
    %881 = vrot.lane.b32.xlu0 %v644, 112
    %v882 = vpop.permute.xlu0 %881
    %883 = vrot.lane.b32.xlu0 %v644, 80
    %v884 = vpop.permute.xlu0 %883
    %v886 = vsel %vm163, %v882, 0
    %v889 = vsel %vm163, %v884, 0
    %891 = vmatprep.subr.bf16.mxu0 0
    %892 = vmatpush1.bf16.xpose.msra.mxu0 %v889
    %893 = vmatprep.subr.bf16.mxu0 0
    %894 = vmatpush1.bf16.xpose.msra.mxu0 0
    %895 = vmatprep.subr.bf16.mxu0 0
    %896 = vmatpush1.bf16.xpose.msra.mxu0 0
    %897 = vmatprep.subr.bf16.mxu0 0
    %898 = vmatpush1.bf16.xpose.msra.mxu0 0
    %899 = vmatprep.subr.bf16.mxu0 0
    %900 = vmatpush1.bf16.xpose.msra.mxu0 0
    %901 = vmatprep.subr.bf16.mxu0 0
    %902 = vmatpush1.bf16.xpose.msra.mxu0 0
    %903 = vmatprep.subr.bf16.mxu0 0
    %904 = vmatpush1.bf16.xpose.msra.mxu0 0
    %905 = vmatprep.subr.bf16.mxu0 0
    %906 = vmatpush1.bf16.xpose.msra.mxu0 0
    %907 = vmatprep.subr.bf16.mxu0 0
    %908 = vmatpush1.bf16.xpose.msra.mxu0 0
    %909 = vmatprep.subr.bf16.mxu0 0
    %910 = vmatpush1.bf16.xpose.msra.mxu0 0
    %911 = vmatprep.subr.bf16.mxu0 0
    %912 = vmatpush1.bf16.xpose.msra.mxu0 0
    %913 = vmatprep.subr.bf16.mxu0 0
    %914 = vmatpush1.bf16.xpose.msra.mxu0 0
    %915 = vmatprep.subr.bf16.mxu0 0
    %916 = vmatpush1.bf16.xpose.msra.mxu0 0
    %917 = vmatprep.subr.bf16.mxu0 0
    %918 = vmatpush1.bf16.xpose.msra.mxu0 0
    %919 = vmatprep.subr.bf16.mxu0 0
    %920 = vmatpush1.bf16.xpose.msra.mxu0 0
    %921 = vmatprep.subr.bf16.mxu0 0
    %922 = vmatpush1.bf16.xpose.msra.mxu0 0
    %923 = vmatprep.mubr.bf16.mxu0 0
    %924 = vmatmul.mubr.bf16.gmra.mrb[0].mxu0 %v886
    %v925 = vpop.f32.mrb[0].mxu0
    %v926 = vadd.f32 %v159, %v925
    %v927 = vpop.f32.mrb[0].mxu0
    %v928 = vpop.f32.mrb[0].mxu0
    %v929 = vpop.f32.mrb[0].mxu0
    %930 = vdwg.mxu0
    %v931 = vsel %vm163, %v926, -inf
    %932 = vmax.xlane.f32.xlu0 %v931
    %v933 = vpop.xlane.xlu0 %932
    %v934 = vsub.f32 -inf, %v933
    %v935 = vmul.f32 %v934, 1.442695
    %v936 = vpow.pop %v935
    %v937 = vsub.f32 %v926, %v933
    %v938 = vmul.f32 %v937, 1.442695
    %v939 = vpow.pop %v938
    %v940 = vmul.f32 %v936, 0.0
    %v941 = vsel %vm163, %v939, 0.0
    %942 = vadd.xlane.f32.xlu0 %v941
    %v943 = vpop.xlane.xlu0 %942
    %v944 = vadd.f32 %v940, %v943
    %v945 = vpack.c.bf16 %v939, %v939
    %946 = vrot.lane.b32.xlu0 %v644, 48
    %v947 = vpop.permute.xlu0 %946
    %v949 = vsel %vm163, %v945, 0
    %v952 = vsel %vm230, %v947, 0
    %954 = vmatprep.subr.bf16.mxu0 0
    %955 = vmatpush1.bf16.msra.mxu0 %v952
    %956 = vmatprep.subr.bf16.mxu0 0
    %957 = vmatpush1.bf16.msra.mxu0 0
    %958 = vmatprep.subr.bf16.mxu0 0
    %959 = vmatpush1.bf16.msra.mxu0 0
    %960 = vmatprep.subr.bf16.mxu0 0
    %961 = vmatpush1.bf16.msra.mxu0 0
    %962 = vmatprep.subr.bf16.mxu0 0
    %963 = vmatpush1.bf16.msra.mxu0 0
    %964 = vmatprep.subr.bf16.mxu0 0
    %965 = vmatpush1.bf16.msra.mxu0 0
    %966 = vmatprep.subr.bf16.mxu0 0
    %967 = vmatpush1.bf16.msra.mxu0 0
    %968 = vmatprep.subr.bf16.mxu0 0
    %969 = vmatpush1.bf16.msra.mxu0 0
    %970 = vmatprep.subr.bf16.mxu0 0
    %971 = vmatpush1.bf16.msra.mxu0 0
    %972 = vmatprep.subr.bf16.mxu0 0
    %973 = vmatpush1.bf16.msra.mxu0 0
    %974 = vmatprep.subr.bf16.mxu0 0
    %975 = vmatpush1.bf16.msra.mxu0 0
    %976 = vmatprep.subr.bf16.mxu0 0
    %977 = vmatpush1.bf16.msra.mxu0 0
    %978 = vmatprep.subr.bf16.mxu0 0
    %979 = vmatpush1.bf16.msra.mxu0 0
    %980 = vmatprep.subr.bf16.mxu0 0
    %981 = vmatpush1.bf16.msra.mxu0 0
    %982 = vmatprep.subr.bf16.mxu0 0
    %983 = vmatpush1.bf16.msra.mxu0 0
    %984 = vmatprep.subr.bf16.mxu0 0
    %985 = vmatpush1.bf16.msra.mxu0 0
    %986 = vmatprep.mubr.bf16.mxu0 0
    %987 = vmatmul.mubr.bf16.gmra.mrb[0].mxu0 %v949
    %v988 = vpop.f32.mrb[0].mxu0
    %v989 = vadd.f32 0.0, %v988
    %v990 = vpop.f32.mrb[0].mxu0
    %v991 = vpop.f32.mrb[0].mxu0
    %v992 = vpop.f32.mrb[0].mxu0
    %993 = vdwg.mxu0
    %v994 = vadd.f32 %v940, %v989
    %v995 = vrcp.pop %v944
    %v996 = vmul.f32 %v994, %v995
    %998 = vrot.lane.b32.xlu0 %v996, 16
    %v999 = vpop.permute.xlu0 %998
    %1001 = vst.msk [vmem:[#allocation2 + $0x8] sm:$0xff] %vm520, %v999
    %1002 = vrot.lane.b32.xlu0 %v644, 104
    %v1003 = vpop.permute.xlu0 %1002
    %1004 = vrot.lane.b32.xlu0 %v644, 72
    %v1005 = vpop.permute.xlu0 %1004
    %v1007 = vsel %vm163, %v1003, 0
    %v1010 = vsel %vm163, %v1005, 0
    %1012 = vmatprep.subr.bf16.mxu0 0
    %1013 = vmatpush1.bf16.xpose.msra.mxu0 %v1010
    %1014 = vmatprep.subr.bf16.mxu0 0
    %1015 = vmatpush1.bf16.xpose.msra.mxu0 0
    %1016 = vmatprep.subr.bf16.mxu0 0
    %1017 = vmatpush1.bf16.xpose.msra.mxu0 0
    %1018 = vmatprep.subr.bf16.mxu0 0
    %1019 = vmatpush1.bf16.xpose.msra.mxu0 0
    %1020 = vmatprep.subr.bf16.mxu0 0
    %1021 = vmatpush1.bf16.xpose.msra.mxu0 0
    %1022 = vmatprep.subr.bf16.mxu0 0
    %1023 = vmatpush1.bf16.xpose.msra.mxu0 0
    %1024 = vmatprep.subr.bf16.mxu0 0
    %1025 = vmatpush1.bf16.xpose.msra.mxu0 0
    %1026 = vmatprep.subr.bf16.mxu0 0
    %1027 = vmatpush1.bf16.xpose.msra.mxu0 0
    %1028 = vmatprep.subr.bf16.mxu0 0
    %1029 = vmatpush1.bf16.xpose.msra.mxu0 0
    %1030 = vmatprep.subr.bf16.mxu0 0
    %1031 = vmatpush1.bf16.xpose.msra.mxu0 0
    %1032 = vmatprep.subr.bf16.mxu0 0
    %1033 = vmatpush1.bf16.xpose.msra.mxu0 0
    %1034 = vmatprep.subr.bf16.mxu0 0
    %1035 = vmatpush1.bf16.xpose.msra.mxu0 0
    %1036 = vmatprep.subr.bf16.mxu0 0
    %1037 = vmatpush1.bf16.xpose.msra.mxu0 0
    %1038 = vmatprep.subr.bf16.mxu0 0
    %1039 = vmatpush1.bf16.xpose.msra.mxu0 0
    %1040 = vmatprep.subr.bf16.mxu0 0
    %1041 = vmatpush1.bf16.xpose.msra.mxu0 0
    %1042 = vmatprep.subr.bf16.mxu0 0
    %1043 = vmatpush1.bf16.xpose.msra.mxu0 0
    %1044 = vmatprep.mubr.bf16.mxu0 0
    %1045 = vmatmul.mubr.bf16.gmra.mrb[0].mxu0 %v1007
    %v1046 = vpop.f32.mrb[0].mxu0
    %v1047 = vadd.f32 %v159, %v1046
    %v1048 = vpop.f32.mrb[0].mxu0
    %v1049 = vpop.f32.mrb[0].mxu0
    %v1050 = vpop.f32.mrb[0].mxu0
    %1051 = vdwg.mxu0
    %v1052 = vsel %vm163, %v1047, -inf
    %1053 = vmax.xlane.f32.xlu0 %v1052
    %v1054 = vpop.xlane.xlu0 %1053
    %v1055 = vsub.f32 -inf, %v1054
    %v1056 = vmul.f32 %v1055, 1.442695
    %v1057 = vpow.pop %v1056
    %v1058 = vsub.f32 %v1047, %v1054
    %v1059 = vmul.f32 %v1058, 1.442695
    %v1060 = vpow.pop %v1059
    %v1061 = vmul.f32 %v1057, 0.0
    %v1062 = vsel %vm163, %v1060, 0.0
    %1063 = vadd.xlane.f32.xlu0 %v1062
    %v1064 = vpop.xlane.xlu0 %1063
    %v1065 = vadd.f32 %v1061, %v1064
    %v1066 = vpack.c.bf16 %v1060, %v1060
    %1067 = vrot.lane.b32.xlu0 %v644, 40
    %v1068 = vpop.permute.xlu0 %1067
    %v1070 = vsel %vm163, %v1066, 0
    %v1073 = vsel %vm230, %v1068, 0
    %1075 = vmatprep.subr.bf16.mxu0 0
    %1076 = vmatpush1.bf16.msra.mxu0 %v1073
    %1077 = vmatprep.subr.bf16.mxu0 0
    %1078 = vmatpush1.bf16.msra.mxu0 0
    %1079 = vmatprep.subr.bf16.mxu0 0
    %1080 = vmatpush1.bf16.msra.mxu0 0
    %1081 = vmatprep.subr.bf16.mxu0 0
    %1082 = vmatpush1.bf16.msra.mxu0 0
    %1083 = vmatprep.subr.bf16.mxu0 0
    %1084 = vmatpush1.bf16.msra.mxu0 0
    %1085 = vmatprep.subr.bf16.mxu0 0
    %1086 = vmatpush1.bf16.msra.mxu0 0
    %1087 = vmatprep.subr.bf16.mxu0 0
    %1088 = vmatpush1.bf16.msra.mxu0 0
    %1089 = vmatprep.subr.bf16.mxu0 0
    %1090 = vmatpush1.bf16.msra.mxu0 0
    %1091 = vmatprep.subr.bf16.mxu0 0
    %1092 = vmatpush1.bf16.msra.mxu0 0
    %1093 = vmatprep.subr.bf16.mxu0 0
    %1094 = vmatpush1.bf16.msra.mxu0 0
    %1095 = vmatprep.subr.bf16.mxu0 0
    %1096 = vmatpush1.bf16.msra.mxu0 0
    %1097 = vmatprep.subr.bf16.mxu0 0
    %1098 = vmatpush1.bf16.msra.mxu0 0
    %1099 = vmatprep.subr.bf16.mxu0 0
    %1100 = vmatpush1.bf16.msra.mxu0 0
    %1101 = vmatprep.subr.bf16.mxu0 0
    %1102 = vmatpush1.bf16.msra.mxu0 0
    %1103 = vmatprep.subr.bf16.mxu0 0
    %1104 = vmatpush1.bf16.msra.mxu0 0
    %1105 = vmatprep.subr.bf16.mxu0 0
    %1106 = vmatpush1.bf16.msra.mxu0 0
    %1107 = vmatprep.mubr.bf16.mxu0 0
    %1108 = vmatmul.mubr.bf16.gmra.mrb[0].mxu0 %v1070
    %v1109 = vpop.f32.mrb[0].mxu0
    %v1110 = vadd.f32 0.0, %v1109
    %v1111 = vpop.f32.mrb[0].mxu0
    %v1112 = vpop.f32.mrb[0].mxu0
    %v1113 = vpop.f32.mrb[0].mxu0
    %1114 = vdwg.mxu0
    %v1115 = vadd.f32 %v1061, %v1110
    %v1116 = vrcp.pop %v1065
    %v1117 = vmul.f32 %v1115, %v1116
    %1119 = vrot.lane.b32.xlu0 %v1117, 24
    %v1120 = vpop.permute.xlu0 %1119
    %1122 = vst.msk [vmem:[#allocation2 + $0x8] sm:$0xff] %vm642, %v1120
    %v1123 = vld [vmem:[#allocation2] sm:$0xff]
    %v1124 = vld [vmem:[#allocation2 + $0x8] sm:$0xff]
    %v1125 = vpack.c.bf16 %v1124, %v1123
    %v1126 = vld [vmem:[%s6] sm:$0xf]
    %v1127 = vld [vmem:[%s6 + $0x4] sm:$0xf]
    %v1128 = vld [vmem:[%s6 + $0x8] sm:$0xf]
    %v1129 = vld [vmem:[%s6 + $0xc] sm:$0xf]
    %v1130 = vld [vmem:[%s7] sm:$0x1]
    %v1132 = vlaneseq
    %v1133 = vshrl.u32 %v1132, 7
    %v1134 = vsub.s32 0, %v1133
    %v1135 = vrot.slane %v1130, %v1134
    %v1141 = vunpack.c.l.b16 %v1126
    %v1142 = vunpack.c.l.b16 %v1127
    %v1143 = vunpack.c.l.b16 %v1128
    %v1144 = vunpack.c.l.b16 %v1129
    %v1145 = vpack.c.b16 %v1142, %v1141
    %v1146 = vpack.c.b16 %v1144, %v1143
    %v1150 = vsel %vm113, %v1125, 0
    %1152 = vmatprep.subr.bf16.mxu0 0
    %1153 = vmatpush1.bf16.msra.mxu0 %v1145
    %1154 = vmatprep.subr.bf16.mxu0 0
    %1155 = vmatpush1.bf16.msra.mxu0 %v1146
    %1156 = vmatprep.subr.bf16.mxu0 0
    %1157 = vmatpush1.bf16.msra.mxu0 0
    %1158 = vmatprep.subr.bf16.mxu0 0
    %1159 = vmatpush1.bf16.msra.mxu0 0
    %1160 = vmatprep.subr.bf16.mxu0 0
    %1161 = vmatpush1.bf16.msra.mxu0 0
    %1162 = vmatprep.subr.bf16.mxu0 0
    %1163 = vmatpush1.bf16.msra.mxu0 0
    %1164 = vmatprep.subr.bf16.mxu0 0
    %1165 = vmatpush1.bf16.msra.mxu0 0
    %1166 = vmatprep.subr.bf16.mxu0 0
    %1167 = vmatpush1.bf16.msra.mxu0 0
    %1168 = vmatprep.subr.bf16.mxu0 0
    %1169 = vmatpush1.bf16.msra.mxu0 0
    %1170 = vmatprep.subr.bf16.mxu0 0
    %1171 = vmatpush1.bf16.msra.mxu0 0
    %1172 = vmatprep.subr.bf16.mxu0 0
    %1173 = vmatpush1.bf16.msra.mxu0 0
    %1174 = vmatprep.subr.bf16.mxu0 0
    %1175 = vmatpush1.bf16.msra.mxu0 0
    %1176 = vmatprep.subr.bf16.mxu0 0
    %1177 = vmatpush1.bf16.msra.mxu0 0
    %1178 = vmatprep.subr.bf16.mxu0 0
    %1179 = vmatpush1.bf16.msra.mxu0 0
    %1180 = vmatprep.subr.bf16.mxu0 0
    %1181 = vmatpush1.bf16.msra.mxu0 0
    %1182 = vmatprep.subr.bf16.mxu0 0
    %1183 = vmatpush1.bf16.msra.mxu0 0
    %1184 = vmatprep.mubr.bf16.mxu0 0
    %1185 = vmatmul.mubr.bf16.gmra.mrb[0].mxu0 %v1150
    %v1186 = vpop.f32.mrb[0].mxu0
    %v1187 = vadd.f32 %v1135, %v1186
    %v1188 = vpop.f32.mrb[0].mxu0
    %v1189 = vpop.f32.mrb[0].mxu0
    %v1190 = vadd.f32 %v1135, %v1189
    %v1191 = vpop.f32.mrb[0].mxu0
    %1192 = vdwg.mxu0
    %v1193 = vadd.f32 %v83, %v1187
    %v1194 = vadd.f32 %v84, %v1190
    %v1195 = vsel %vm113, %v1193, 0.0
    %1196 = vadd.xlane.f32.xlu0 %v1195
    %v1197 = vpop.xlane.xlu0 %1196
    %v1198 = vsel %vm113, %v1194, 0.0
    %1199 = vadd.xlane.f32.xlu0 %v1198
    %v1200 = vpop.xlane.xlu0 %1199
    %v1201 = vrcp.pop 32.0
    %v1202 = vmul.f32 %v1197, %v1201
    %v1203 = vmul.f32 %v1200, %v1201
    %v1204 = vmul.f32 %v1193, %v1193
    %v1205 = vmul.f32 %v1194, %v1194
    %v1206 = vsel %vm113, %v1204, 0.0
    %1207 = vadd.xlane.f32.xlu0 %v1206
    %v1208 = vpop.xlane.xlu0 %1207
    %v1209 = vsel %vm113, %v1205, 0.0
    %1210 = vadd.xlane.f32.xlu0 %v1209
    %v1211 = vpop.xlane.xlu0 %1210
    %v1212 = vmul.f32 %v1208, %v1201
    %v1213 = vmul.f32 %v1211, %v1201
    %v1214 = vmul.f32 %v1202, %v1202
    %v1215 = vmul.f32 %v1203, %v1203
    %v1216 = vsub.f32 %v1212, %v1214
    %v1217 = vsub.f32 %v1213, %v1215
    %v1218 = vsub.f32 %v1193, %v1202
    %v1219 = vsub.f32 %v1194, %v1203
    %v1220 = vadd.f32 %v1216, 1e-05
    %v1221 = vadd.f32 %v1217, 1e-05
    %v1222 = vrsqrt.pop %v1220
    %v1223 = vrsqrt.pop %v1221
    %v1224 = vmul.f32 %v1218, %v1222
    %v1225 = vmul.f32 %v1219, %v1223
    %v1226 = vld [vmem:[%s14] sm:$0x1]
    %v1228 = vlaneseq
    %v1229 = vshrl.u32 %v1228, 7
    %v1230 = vsub.s32 0, %v1229
    %v1231 = vrot.slane %v1226, %v1230
    %v1233 = vmul.f32 %v1224, %v1231
    %v1234 = vmul.f32 %v1225, %v1231
    %v1235 = vld [vmem:[%s15] sm:$0x1]
    %v1237 = vlaneseq
    %v1238 = vshrl.u32 %v1237, 7
    %v1239 = vsub.s32 0, %v1238
    %v1240 = vrot.slane %v1235, %v1239
    %v1242 = vadd.f32 %v1233, %v1240
    %v1243 = vadd.f32 %v1234, %v1240
    %v1244 = vpack.c.bf16 %v1243, %v1242
    %v1245 = vld [vmem:[%s8] sm:$0xf]
    %v1246 = vld [vmem:[%s8 + $0x4] sm:$0xf]
    %v1247 = vld [vmem:[%s8 + $0x8] sm:$0xf]
    %v1248 = vld [vmem:[%s8 + $0xc] sm:$0xf]
    %v1249 = vld [vmem:[%s9] sm:$0x1]
    %v1251 = vlaneseq
    %v1252 = vshrl.u32 %v1251, 7
    %v1253 = vsub.s32 0, %v1252
    %v1254 = vrot.slane %v1249, %v1253
    %v1260 = vunpack.c.l.b16 %v1245
    %v1261 = vunpack.c.l.b16 %v1246
    %v1262 = vunpack.c.l.b16 %v1247
    %v1263 = vunpack.c.l.b16 %v1248
    %v1264 = vpack.c.b16 %v1261, %v1260
    %v1265 = vpack.c.b16 %v1263, %v1262
    %v1269 = vsel %vm113, %v1244, 0
    %1271 = vmatprep.subr.bf16.mxu0 0
    %1272 = vmatpush1.bf16.msra.mxu0 %v1264
    %1273 = vmatprep.subr.bf16.mxu0 0
    %1274 = vmatpush1.bf16.msra.mxu0 %v1265
    %1275 = vmatprep.subr.bf16.mxu0 0
    %1276 = vmatpush1.bf16.msra.mxu0 0
    %1277 = vmatprep.subr.bf16.mxu0 0
    %1278 = vmatpush1.bf16.msra.mxu0 0
    %1279 = vmatprep.subr.bf16.mxu0 0
    %1280 = vmatpush1.bf16.msra.mxu0 0
    %1281 = vmatprep.subr.bf16.mxu0 0
    %1282 = vmatpush1.bf16.msra.mxu0 0
    %1283 = vmatprep.subr.bf16.mxu0 0
    %1284 = vmatpush1.bf16.msra.mxu0 0
    %1285 = vmatprep.subr.bf16.mxu0 0
    %1286 = vmatpush1.bf16.msra.mxu0 0
    %1287 = vmatprep.subr.bf16.mxu0 0
    %1288 = vmatpush1.bf16.msra.mxu0 0
    %1289 = vmatprep.subr.bf16.mxu0 0
    %1290 = vmatpush1.bf16.msra.mxu0 0
    %1291 = vmatprep.subr.bf16.mxu0 0
    %1292 = vmatpush1.bf16.msra.mxu0 0
    %1293 = vmatprep.subr.bf16.mxu0 0
    %1294 = vmatpush1.bf16.msra.mxu0 0
    %1295 = vmatprep.subr.bf16.mxu0 0
    %1296 = vmatpush1.bf16.msra.mxu0 0
    %1297 = vmatprep.subr.bf16.mxu0 0
    %1298 = vmatpush1.bf16.msra.mxu0 0
    %1299 = vmatprep.subr.bf16.mxu0 0
    %1300 = vmatpush1.bf16.msra.mxu0 0
    %1301 = vmatprep.subr.bf16.mxu0 0
    %1302 = vmatpush1.bf16.msra.mxu0 0
    %1303 = vmatprep.mubr.bf16.mxu0 0
    %1304 = vmatmul.mubr.bf16.gmra.mrb[0].mxu0 %v1269
    %v1305 = vpop.f32.mrb[0].mxu0
    %v1306 = vadd.f32 %v1254, %v1305
    %v1307 = vpop.f32.mrb[0].mxu0
    %v1308 = vpop.f32.mrb[0].mxu0
    %v1309 = vadd.f32 %v1254, %v1308
    %v1310 = vpop.f32.mrb[0].mxu0
    %1311 = vdwg.mxu0
    %v1312 = vpack.c.bf16 %v1309, %v1306
    %v1313 = vld [vmem:[%s10] sm:$0xf]
    %v1314 = vld [vmem:[%s10 + $0x4] sm:$0xf]
    %v1315 = vld [vmem:[%s10 + $0x8] sm:$0xf]
    %v1316 = vld [vmem:[%s10 + $0xc] sm:$0xf]
    %v1317 = vld [vmem:[%s11] sm:$0x1]
    %v1319 = vlaneseq
    %v1320 = vshrl.u32 %v1319, 7
    %v1321 = vsub.s32 0, %v1320
    %v1322 = vrot.slane %v1317, %v1321
    %v1326 = vunpack.c.l.b16 %v81
    %v1327 = vunpack.c.l.b16 %v82
    %v1328 = vpack.c.b16 %v1327, %v1326
    %v1333 = vunpack.c.l.b16 %v1313
    %v1334 = vunpack.c.l.b16 %v1314
    %v1335 = vunpack.c.l.b16 %v1315
    %v1336 = vunpack.c.l.b16 %v1316
    %v1337 = vpack.c.b16 %v1334, %v1333
    %v1338 = vpack.c.b16 %v1336, %v1335
    %v1342 = vsel %vm113, %v1328, 0
    %1344 = vmatprep.subr.bf16.mxu0 0
    %1345 = vmatpush1.bf16.msra.mxu0 %v1337
    %1346 = vmatprep.subr.bf16.mxu0 0
    %1347 = vmatpush1.bf16.msra.mxu0 %v1338
    %1348 = vmatprep.subr.bf16.mxu0 0
    %1349 = vmatpush1.bf16.msra.mxu0 0
    %1350 = vmatprep.subr.bf16.mxu0 0
    %1351 = vmatpush1.bf16.msra.mxu0 0
    %1352 = vmatprep.subr.bf16.mxu0 0
    %1353 = vmatpush1.bf16.msra.mxu0 0
    %1354 = vmatprep.subr.bf16.mxu0 0
    %1355 = vmatpush1.bf16.msra.mxu0 0
    %1356 = vmatprep.subr.bf16.mxu0 0
    %1357 = vmatpush1.bf16.msra.mxu0 0
    %1358 = vmatprep.subr.bf16.mxu0 0
    %1359 = vmatpush1.bf16.msra.mxu0 0
    %1360 = vmatprep.subr.bf16.mxu0 0
    %1361 = vmatpush1.bf16.msra.mxu0 0
    %1362 = vmatprep.subr.bf16.mxu0 0
    %1363 = vmatpush1.bf16.msra.mxu0 0
    %1364 = vmatprep.subr.bf16.mxu0 0
    %1365 = vmatpush1.bf16.msra.mxu0 0
    %1366 = vmatprep.subr.bf16.mxu0 0
    %1367 = vmatpush1.bf16.msra.mxu0 0
    %1368 = vmatprep.subr.bf16.mxu0 0
    %1369 = vmatpush1.bf16.msra.mxu0 0
    %1370 = vmatprep.subr.bf16.mxu0 0
    %1371 = vmatpush1.bf16.msra.mxu0 0
    %1372 = vmatprep.subr.bf16.mxu0 0
    %1373 = vmatpush1.bf16.msra.mxu0 0
    %1374 = vmatprep.subr.bf16.mxu0 0
    %1375 = vmatpush1.bf16.msra.mxu0 0
    %1376 = vmatprep.mubr.bf16.mxu0 0
    %1377 = vmatmul.mubr.bf16.gmra.mrb[0].mxu0 %v1342
    %v1378 = vpop.f32.mrb[0].mxu0
    %v1379 = vadd.f32 %v1322, %v1378
    %v1380 = vpop.f32.mrb[0].mxu0
    %v1381 = vpop.f32.mrb[0].mxu0
    %v1382 = vadd.f32 %v1322, %v1381
    %v1383 = vpop.f32.mrb[0].mxu0
    %1384 = vdwg.mxu0
    %v1385 = vpack.c.bf16 %v1382, %v1379
    %v1386 = vld [vmem:[%s2] sm:$0x1]
    %v1388 = vlaneseq
    %v1389 = vshrl.u32 %v1388, 7
    %v1390 = vsub.s32 0, %v1389
    %v1391 = vrot.slane %v1386, %v1390
    %v1394 = vsel %vm163, %v1312, 0
    %v1397 = vsel %vm163, %v1385, 0
    %1399 = vmatprep.subr.bf16.mxu0 0
    %1400 = vmatpush1.bf16.xpose.msra.mxu0 %v1397
    %1401 = vmatprep.subr.bf16.mxu0 0
    %1402 = vmatpush1.bf16.xpose.msra.mxu0 0
    %1403 = vmatprep.subr.bf16.mxu0 0
    %1404 = vmatpush1.bf16.xpose.msra.mxu0 0
    %1405 = vmatprep.subr.bf16.mxu0 0
    %1406 = vmatpush1.bf16.xpose.msra.mxu0 0
    %1407 = vmatprep.subr.bf16.mxu0 0
    %1408 = vmatpush1.bf16.xpose.msra.mxu0 0
    %1409 = vmatprep.subr.bf16.mxu0 0
    %1410 = vmatpush1.bf16.xpose.msra.mxu0 0
    %1411 = vmatprep.subr.bf16.mxu0 0
    %1412 = vmatpush1.bf16.xpose.msra.mxu0 0
    %1413 = vmatprep.subr.bf16.mxu0 0
    %1414 = vmatpush1.bf16.xpose.msra.mxu0 0
    %1415 = vmatprep.subr.bf16.mxu0 0
    %1416 = vmatpush1.bf16.xpose.msra.mxu0 0
    %1417 = vmatprep.subr.bf16.mxu0 0
    %1418 = vmatpush1.bf16.xpose.msra.mxu0 0
    %1419 = vmatprep.subr.bf16.mxu0 0
    %1420 = vmatpush1.bf16.xpose.msra.mxu0 0
    %1421 = vmatprep.subr.bf16.mxu0 0
    %1422 = vmatpush1.bf16.xpose.msra.mxu0 0
    %1423 = vmatprep.subr.bf16.mxu0 0
    %1424 = vmatpush1.bf16.xpose.msra.mxu0 0
    %1425 = vmatprep.subr.bf16.mxu0 0
    %1426 = vmatpush1.bf16.xpose.msra.mxu0 0
    %1427 = vmatprep.subr.bf16.mxu0 0
    %1428 = vmatpush1.bf16.xpose.msra.mxu0 0
    %1429 = vmatprep.subr.bf16.mxu0 0
    %1430 = vmatpush1.bf16.xpose.msra.mxu0 0
    %1431 = vmatprep.mubr.bf16.mxu0 0
    %1432 = vmatmul.mubr.bf16.gmra.mrb[0].mxu0 %v1394
    %v1433 = vpop.f32.mrb[0].mxu0
    %v1434 = vadd.f32 %v1391, %v1433
    %v1435 = vpop.f32.mrb[0].mxu0
    %v1436 = vpop.f32.mrb[0].mxu0
    %v1437 = vpop.f32.mrb[0].mxu0
    %1438 = vdwg.mxu0
    %v1439 = vsel %vm163, %v1434, -inf
    %1440 = vmax.xlane.f32.xlu0 %v1439
    %v1441 = vpop.xlane.xlu0 %1440
    %v1442 = vsub.f32 -inf, %v1441
    %v1443 = vmul.f32 %v1442, 1.442695
    %v1444 = vpow.pop %v1443
    %v1445 = vsub.f32 %v1434, %v1441
    %v1446 = vmul.f32 %v1445, 1.442695
    %v1447 = vpow.pop %v1446
    %v1448 = vmul.f32 %v1444, 0.0
    %v1449 = vsel %vm163, %v1447, 0.0
    %1450 = vadd.xlane.f32.xlu0 %v1449
    %v1451 = vpop.xlane.xlu0 %1450
    %v1452 = vadd.f32 %v1448, %v1451
    %v1453 = vpack.c.bf16 %v1447, %v1447
    %1455 = vrot.lane.b32.xlu0 %v1385, 96
    %v1456 = vpop.permute.xlu0 %1455
    %v1458 = vsel %vm163, %v1453, 0
    %v1461 = vsel %vm230, %v1456, 0
    %1463 = vmatprep.subr.bf16.mxu0 0
    %1464 = vmatpush1.bf16.msra.mxu0 %v1461
    %1465 = vmatprep.subr.bf16.mxu0 0
    %1466 = vmatpush1.bf16.msra.mxu0 0
    %1467 = vmatprep.subr.bf16.mxu0 0
    %1468 = vmatpush1.bf16.msra.mxu0 0
    %1469 = vmatprep.subr.bf16.mxu0 0
    %1470 = vmatpush1.bf16.msra.mxu0 0
    %1471 = vmatprep.subr.bf16.mxu0 0
    %1472 = vmatpush1.bf16.msra.mxu0 0
    %1473 = vmatprep.subr.bf16.mxu0 0
    %1474 = vmatpush1.bf16.msra.mxu0 0
    %1475 = vmatprep.subr.bf16.mxu0 0
    %1476 = vmatpush1.bf16.msra.mxu0 0
    %1477 = vmatprep.subr.bf16.mxu0 0
    %1478 = vmatpush1.bf16.msra.mxu0 0
    %1479 = vmatprep.subr.bf16.mxu0 0
    %1480 = vmatpush1.bf16.msra.mxu0 0
    %1481 = vmatprep.subr.bf16.mxu0 0
    %1482 = vmatpush1.bf16.msra.mxu0 0
    %1483 = vmatprep.subr.bf16.mxu0 0
    %1484 = vmatpush1.bf16.msra.mxu0 0
    %1485 = vmatprep.subr.bf16.mxu0 0
    %1486 = vmatpush1.bf16.msra.mxu0 0
    %1487 = vmatprep.subr.bf16.mxu0 0
    %1488 = vmatpush1.bf16.msra.mxu0 0
    %1489 = vmatprep.subr.bf16.mxu0 0
    %1490 = vmatpush1.bf16.msra.mxu0 0
    %1491 = vmatprep.subr.bf16.mxu0 0
    %1492 = vmatpush1.bf16.msra.mxu0 0
    %1493 = vmatprep.subr.bf16.mxu0 0
    %1494 = vmatpush1.bf16.msra.mxu0 0
    %1495 = vmatprep.mubr.bf16.mxu0 0
    %1496 = vmatmul.mubr.bf16.gmra.mrb[0].mxu0 %v1458
    %v1497 = vpop.f32.mrb[0].mxu0
    %v1498 = vadd.f32 0.0, %v1497
    %v1499 = vpop.f32.mrb[0].mxu0
    %v1500 = vpop.f32.mrb[0].mxu0
    %v1501 = vpop.f32.mrb[0].mxu0
    %1502 = vdwg.mxu0
    %v1503 = vadd.f32 %v1448, %v1498
    %v1504 = vrcp.pop %v1452
    %v1505 = vmul.f32 %v1503, %v1504
    %1506 = vst.msk [vmem:[#allocation2] sm:$0xff] %vm163, %v1505
    %1508 = vrot.lane.b32.xlu0 %v1312, 120
    %v1509 = vpop.permute.xlu0 %1508
    %1510 = vrot.lane.b32.xlu0 %v1385, 120
    %v1511 = vpop.permute.xlu0 %1510
    %v1513 = vsel %vm163, %v1509, 0
    %v1516 = vsel %vm163, %v1511, 0
    %1518 = vmatprep.subr.bf16.mxu0 0
    %1519 = vmatpush1.bf16.xpose.msra.mxu0 %v1516
    %1520 = vmatprep.subr.bf16.mxu0 0
    %1521 = vmatpush1.bf16.xpose.msra.mxu0 0
    %1522 = vmatprep.subr.bf16.mxu0 0
    %1523 = vmatpush1.bf16.xpose.msra.mxu0 0
    %1524 = vmatprep.subr.bf16.mxu0 0
    %1525 = vmatpush1.bf16.xpose.msra.mxu0 0
    %1526 = vmatprep.subr.bf16.mxu0 0
    %1527 = vmatpush1.bf16.xpose.msra.mxu0 0
    %1528 = vmatprep.subr.bf16.mxu0 0
    %1529 = vmatpush1.bf16.xpose.msra.mxu0 0
    %1530 = vmatprep.subr.bf16.mxu0 0
    %1531 = vmatpush1.bf16.xpose.msra.mxu0 0
    %1532 = vmatprep.subr.bf16.mxu0 0
    %1533 = vmatpush1.bf16.xpose.msra.mxu0 0
    %1534 = vmatprep.subr.bf16.mxu0 0
    %1535 = vmatpush1.bf16.xpose.msra.mxu0 0
    %1536 = vmatprep.subr.bf16.mxu0 0
    %1537 = vmatpush1.bf16.xpose.msra.mxu0 0
    %1538 = vmatprep.subr.bf16.mxu0 0
    %1539 = vmatpush1.bf16.xpose.msra.mxu0 0
    %1540 = vmatprep.subr.bf16.mxu0 0
    %1541 = vmatpush1.bf16.xpose.msra.mxu0 0
    %1542 = vmatprep.subr.bf16.mxu0 0
    %1543 = vmatpush1.bf16.xpose.msra.mxu0 0
    %1544 = vmatprep.subr.bf16.mxu0 0
    %1545 = vmatpush1.bf16.xpose.msra.mxu0 0
    %1546 = vmatprep.subr.bf16.mxu0 0
    %1547 = vmatpush1.bf16.xpose.msra.mxu0 0
    %1548 = vmatprep.subr.bf16.mxu0 0
    %1549 = vmatpush1.bf16.xpose.msra.mxu0 0
    %1550 = vmatprep.mubr.bf16.mxu0 0
    %1551 = vmatmul.mubr.bf16.gmra.mrb[0].mxu0 %v1513
    %v1552 = vpop.f32.mrb[0].mxu0
    %v1553 = vadd.f32 %v1391, %v1552
    %v1554 = vpop.f32.mrb[0].mxu0
    %v1555 = vpop.f32.mrb[0].mxu0
    %v1556 = vpop.f32.mrb[0].mxu0
    %1557 = vdwg.mxu0
    %v1558 = vsel %vm163, %v1553, -inf
    %1559 = vmax.xlane.f32.xlu0 %v1558
    %v1560 = vpop.xlane.xlu0 %1559
    %v1561 = vsub.f32 -inf, %v1560
    %v1562 = vmul.f32 %v1561, 1.442695
    %v1563 = vpow.pop %v1562
    %v1564 = vsub.f32 %v1553, %v1560
    %v1565 = vmul.f32 %v1564, 1.442695
    %v1566 = vpow.pop %v1565
    %v1567 = vmul.f32 %v1563, 0.0
    %v1568 = vsel %vm163, %v1566, 0.0
    %1569 = vadd.xlane.f32.xlu0 %v1568
    %v1570 = vpop.xlane.xlu0 %1569
    %v1571 = vadd.f32 %v1567, %v1570
    %v1572 = vpack.c.bf16 %v1566, %v1566
    %1573 = vrot.lane.b32.xlu0 %v1385, 88
    %v1574 = vpop.permute.xlu0 %1573
    %v1576 = vsel %vm163, %v1572, 0
    %v1579 = vsel %vm230, %v1574, 0
    %1581 = vmatprep.subr.bf16.mxu0 0
    %1582 = vmatpush1.bf16.msra.mxu0 %v1579
    %1583 = vmatprep.subr.bf16.mxu0 0
    %1584 = vmatpush1.bf16.msra.mxu0 0
    %1585 = vmatprep.subr.bf16.mxu0 0
    %1586 = vmatpush1.bf16.msra.mxu0 0
    %1587 = vmatprep.subr.bf16.mxu0 0
    %1588 = vmatpush1.bf16.msra.mxu0 0
    %1589 = vmatprep.subr.bf16.mxu0 0
    %1590 = vmatpush1.bf16.msra.mxu0 0
    %1591 = vmatprep.subr.bf16.mxu0 0
    %1592 = vmatpush1.bf16.msra.mxu0 0
    %1593 = vmatprep.subr.bf16.mxu0 0
    %1594 = vmatpush1.bf16.msra.mxu0 0
    %1595 = vmatprep.subr.bf16.mxu0 0
    %1596 = vmatpush1.bf16.msra.mxu0 0
    %1597 = vmatprep.subr.bf16.mxu0 0
    %1598 = vmatpush1.bf16.msra.mxu0 0
    %1599 = vmatprep.subr.bf16.mxu0 0
    %1600 = vmatpush1.bf16.msra.mxu0 0
    %1601 = vmatprep.subr.bf16.mxu0 0
    %1602 = vmatpush1.bf16.msra.mxu0 0
    %1603 = vmatprep.subr.bf16.mxu0 0
    %1604 = vmatpush1.bf16.msra.mxu0 0
    %1605 = vmatprep.subr.bf16.mxu0 0
    %1606 = vmatpush1.bf16.msra.mxu0 0
    %1607 = vmatprep.subr.bf16.mxu0 0
    %1608 = vmatpush1.bf16.msra.mxu0 0
    %1609 = vmatprep.subr.bf16.mxu0 0
    %1610 = vmatpush1.bf16.msra.mxu0 0
    %1611 = vmatprep.subr.bf16.mxu0 0
    %1612 = vmatpush1.bf16.msra.mxu0 0
    %1613 = vmatprep.mubr.bf16.mxu0 0
    %1614 = vmatmul.mubr.bf16.gmra.mrb[0].mxu0 %v1576
    %v1615 = vpop.f32.mrb[0].mxu0
    %v1616 = vadd.f32 0.0, %v1615
    %v1617 = vpop.f32.mrb[0].mxu0
    %v1618 = vpop.f32.mrb[0].mxu0
    %v1619 = vpop.f32.mrb[0].mxu0
    %1620 = vdwg.mxu0
    %v1621 = vadd.f32 %v1567, %v1616
    %v1622 = vrcp.pop %v1571
    %v1623 = vmul.f32 %v1621, %v1622
    %1625 = vrot.lane.b32.xlu0 %v1623, 8
    %v1626 = vpop.permute.xlu0 %1625
    %1628 = vst.msk [vmem:[#allocation2] sm:$0xff] %vm398, %v1626
    %1629 = vrot.lane.b32.xlu0 %v1312, 112
    %v1630 = vpop.permute.xlu0 %1629
    %1631 = vrot.lane.b32.xlu0 %v1385, 112
    %v1632 = vpop.permute.xlu0 %1631
    %v1634 = vsel %vm163, %v1630, 0
    %v1637 = vsel %vm163, %v1632, 0
    %1639 = vmatprep.subr.bf16.mxu0 0
    %1640 = vmatpush1.bf16.xpose.msra.mxu0 %v1637
    %1641 = vmatprep.subr.bf16.mxu0 0
    %1642 = vmatpush1.bf16.xpose.msra.mxu0 0
    %1643 = vmatprep.subr.bf16.mxu0 0
    %1644 = vmatpush1.bf16.xpose.msra.mxu0 0
    %1645 = vmatprep.subr.bf16.mxu0 0
    %1646 = vmatpush1.bf16.xpose.msra.mxu0 0
    %1647 = vmatprep.subr.bf16.mxu0 0
    %1648 = vmatpush1.bf16.xpose.msra.mxu0 0
    %1649 = vmatprep.subr.bf16.mxu0 0
    %1650 = vmatpush1.bf16.xpose.msra.mxu0 0
    %1651 = vmatprep.subr.bf16.mxu0 0
    %1652 = vmatpush1.bf16.xpose.msra.mxu0 0
    %1653 = vmatprep.subr.bf16.mxu0 0
    %1654 = vmatpush1.bf16.xpose.msra.mxu0 0
    %1655 = vmatprep.subr.bf16.mxu0 0
    %1656 = vmatpush1.bf16.xpose.msra.mxu0 0
    %1657 = vmatprep.subr.bf16.mxu0 0
    %1658 = vmatpush1.bf16.xpose.msra.mxu0 0
    %1659 = vmatprep.subr.bf16.mxu0 0
    %1660 = vmatpush1.bf16.xpose.msra.mxu0 0
    %1661 = vmatprep.subr.bf16.mxu0 0
    %1662 = vmatpush1.bf16.xpose.msra.mxu0 0
    %1663 = vmatprep.subr.bf16.mxu0 0
    %1664 = vmatpush1.bf16.xpose.msra.mxu0 0
    %1665 = vmatprep.subr.bf16.mxu0 0
    %1666 = vmatpush1.bf16.xpose.msra.mxu0 0
    %1667 = vmatprep.subr.bf16.mxu0 0
    %1668 = vmatpush1.bf16.xpose.msra.mxu0 0
    %1669 = vmatprep.subr.bf16.mxu0 0
    %1670 = vmatpush1.bf16.xpose.msra.mxu0 0
    %1671 = vmatprep.mubr.bf16.mxu0 0
    %1672 = vmatmul.mubr.bf16.gmra.mrb[0].mxu0 %v1634
    %v1673 = vpop.f32.mrb[0].mxu0
    %v1674 = vadd.f32 %v1391, %v1673
    %v1675 = vpop.f32.mrb[0].mxu0
    %v1676 = vpop.f32.mrb[0].mxu0
    %v1677 = vpop.f32.mrb[0].mxu0
    %1678 = vdwg.mxu0
    %v1679 = vsel %vm163, %v1674, -inf
    %1680 = vmax.xlane.f32.xlu0 %v1679
    %v1681 = vpop.xlane.xlu0 %1680
    %v1682 = vsub.f32 -inf, %v1681
    %v1683 = vmul.f32 %v1682, 1.442695
    %v1684 = vpow.pop %v1683
    %v1685 = vsub.f32 %v1674, %v1681
    %v1686 = vmul.f32 %v1685, 1.442695
    %v1687 = vpow.pop %v1686
    %v1688 = vmul.f32 %v1684, 0.0
    %v1689 = vsel %vm163, %v1687, 0.0
    %1690 = vadd.xlane.f32.xlu0 %v1689
    %v1691 = vpop.xlane.xlu0 %1690
    %v1692 = vadd.f32 %v1688, %v1691
    %v1693 = vpack.c.bf16 %v1687, %v1687
    %1694 = vrot.lane.b32.xlu0 %v1385, 80
    %v1695 = vpop.permute.xlu0 %1694
    %v1697 = vsel %vm163, %v1693, 0
    %v1700 = vsel %vm230, %v1695, 0
    %1702 = vmatprep.subr.bf16.mxu0 0
    %1703 = vmatpush1.bf16.msra.mxu0 %v1700
    %1704 = vmatprep.subr.bf16.mxu0 0
    %1705 = vmatpush1.bf16.msra.mxu0 0
    %1706 = vmatprep.subr.bf16.mxu0 0
    %1707 = vmatpush1.bf16.msra.mxu0 0
    %1708 = vmatprep.subr.bf16.mxu0 0
    %1709 = vmatpush1.bf16.msra.mxu0 0
    %1710 = vmatprep.subr.bf16.mxu0 0
    %1711 = vmatpush1.bf16.msra.mxu0 0
    %1712 = vmatprep.subr.bf16.mxu0 0
    %1713 = vmatpush1.bf16.msra.mxu0 0
    %1714 = vmatprep.subr.bf16.mxu0 0
    %1715 = vmatpush1.bf16.msra.mxu0 0
    %1716 = vmatprep.subr.bf16.mxu0 0
    %1717 = vmatpush1.bf16.msra.mxu0 0
    %1718 = vmatprep.subr.bf16.mxu0 0
    %1719 = vmatpush1.bf16.msra.mxu0 0
    %1720 = vmatprep.subr.bf16.mxu0 0
    %1721 = vmatpush1.bf16.msra.mxu0 0
    %1722 = vmatprep.subr.bf16.mxu0 0
    %1723 = vmatpush1.bf16.msra.mxu0 0
    %1724 = vmatprep.subr.bf16.mxu0 0
    %1725 = vmatpush1.bf16.msra.mxu0 0
    %1726 = vmatprep.subr.bf16.mxu0 0
    %1727 = vmatpush1.bf16.msra.mxu0 0
    %1728 = vmatprep.subr.bf16.mxu0 0
    %1729 = vmatpush1.bf16.msra.mxu0 0
    %1730 = vmatprep.subr.bf16.mxu0 0
    %1731 = vmatpush1.bf16.msra.mxu0 0
    %1732 = vmatprep.subr.bf16.mxu0 0
    %1733 = vmatpush1.bf16.msra.mxu0 0
    %1734 = vmatprep.mubr.bf16.mxu0 0
    %1735 = vmatmul.mubr.bf16.gmra.mrb[0].mxu0 %v1697
    %v1736 = vpop.f32.mrb[0].mxu0
    %v1737 = vadd.f32 0.0, %v1736
    %v1738 = vpop.f32.mrb[0].mxu0
    %v1739 = vpop.f32.mrb[0].mxu0
    %v1740 = vpop.f32.mrb[0].mxu0
    %1741 = vdwg.mxu0
    %v1742 = vadd.f32 %v1688, %v1737
    %v1743 = vrcp.pop %v1692
    %v1744 = vmul.f32 %v1742, %v1743
    %1746 = vrot.lane.b32.xlu0 %v1744, 16
    %v1747 = vpop.permute.xlu0 %1746
    %1749 = vst.msk [vmem:[#allocation2] sm:$0xff] %vm520, %v1747
    %1750 = vrot.lane.b32.xlu0 %v1312, 104
    %v1751 = vpop.permute.xlu0 %1750
    %1752 = vrot.lane.b32.xlu0 %v1385, 104
    %v1753 = vpop.permute.xlu0 %1752
    %v1755 = vsel %vm163, %v1751, 0
    %v1758 = vsel %vm163, %v1753, 0
    %1760 = vmatprep.subr.bf16.mxu0 0
    %1761 = vmatpush1.bf16.xpose.msra.mxu0 %v1758
    %1762 = vmatprep.subr.bf16.mxu0 0
    %1763 = vmatpush1.bf16.xpose.msra.mxu0 0
    %1764 = vmatprep.subr.bf16.mxu0 0
    %1765 = vmatpush1.bf16.xpose.msra.mxu0 0
    %1766 = vmatprep.subr.bf16.mxu0 0
    %1767 = vmatpush1.bf16.xpose.msra.mxu0 0
    %1768 = vmatprep.subr.bf16.mxu0 0
    %1769 = vmatpush1.bf16.xpose.msra.mxu0 0
    %1770 = vmatprep.subr.bf16.mxu0 0
    %1771 = vmatpush1.bf16.xpose.msra.mxu0 0
    %1772 = vmatprep.subr.bf16.mxu0 0
    %1773 = vmatpush1.bf16.xpose.msra.mxu0 0
    %1774 = vmatprep.subr.bf16.mxu0 0
    %1775 = vmatpush1.bf16.xpose.msra.mxu0 0
    %1776 = vmatprep.subr.bf16.mxu0 0
    %1777 = vmatpush1.bf16.xpose.msra.mxu0 0
    %1778 = vmatprep.subr.bf16.mxu0 0
    %1779 = vmatpush1.bf16.xpose.msra.mxu0 0
    %1780 = vmatprep.subr.bf16.mxu0 0
    %1781 = vmatpush1.bf16.xpose.msra.mxu0 0
    %1782 = vmatprep.subr.bf16.mxu0 0
    %1783 = vmatpush1.bf16.xpose.msra.mxu0 0
    %1784 = vmatprep.subr.bf16.mxu0 0
    %1785 = vmatpush1.bf16.xpose.msra.mxu0 0
    %1786 = vmatprep.subr.bf16.mxu0 0
    %1787 = vmatpush1.bf16.xpose.msra.mxu0 0
    %1788 = vmatprep.subr.bf16.mxu0 0
    %1789 = vmatpush1.bf16.xpose.msra.mxu0 0
    %1790 = vmatprep.subr.bf16.mxu0 0
    %1791 = vmatpush1.bf16.xpose.msra.mxu0 0
    %1792 = vmatprep.mubr.bf16.mxu0 0
    %1793 = vmatmul.mubr.bf16.gmra.mrb[0].mxu0 %v1755
    %v1794 = vpop.f32.mrb[0].mxu0
    %v1795 = vadd.f32 %v1391, %v1794
    %v1796 = vpop.f32.mrb[0].mxu0
    %v1797 = vpop.f32.mrb[0].mxu0
    %v1798 = vpop.f32.mrb[0].mxu0
    %1799 = vdwg.mxu0
    %v1800 = vsel %vm163, %v1795, -inf
    %1801 = vmax.xlane.f32.xlu0 %v1800
    %v1802 = vpop.xlane.xlu0 %1801
    %v1803 = vsub.f32 -inf, %v1802
    %v1804 = vmul.f32 %v1803, 1.442695
    %v1805 = vpow.pop %v1804
    %v1806 = vsub.f32 %v1795, %v1802
    %v1807 = vmul.f32 %v1806, 1.442695
    %v1808 = vpow.pop %v1807
    %v1809 = vmul.f32 %v1805, 0.0
    %v1810 = vsel %vm163, %v1808, 0.0
    %1811 = vadd.xlane.f32.xlu0 %v1810
    %v1812 = vpop.xlane.xlu0 %1811
    %v1813 = vadd.f32 %v1809, %v1812
    %v1814 = vpack.c.bf16 %v1808, %v1808
    %1815 = vrot.lane.b32.xlu0 %v1385, 72
    %v1816 = vpop.permute.xlu0 %1815
    %v1818 = vsel %vm163, %v1814, 0
    %v1821 = vsel %vm230, %v1816, 0
    %1823 = vmatprep.subr.bf16.mxu0 0
    %1824 = vmatpush1.bf16.msra.mxu0 %v1821
    %1825 = vmatprep.subr.bf16.mxu0 0
    %1826 = vmatpush1.bf16.msra.mxu0 0
    %1827 = vmatprep.subr.bf16.mxu0 0
    %1828 = vmatpush1.bf16.msra.mxu0 0
    %1829 = vmatprep.subr.bf16.mxu0 0
    %1830 = vmatpush1.bf16.msra.mxu0 0
    %1831 = vmatprep.subr.bf16.mxu0 0
    %1832 = vmatpush1.bf16.msra.mxu0 0
    %1833 = vmatprep.subr.bf16.mxu0 0
    %1834 = vmatpush1.bf16.msra.mxu0 0
    %1835 = vmatprep.subr.bf16.mxu0 0
    %1836 = vmatpush1.bf16.msra.mxu0 0
    %1837 = vmatprep.subr.bf16.mxu0 0
    %1838 = vmatpush1.bf16.msra.mxu0 0
    %1839 = vmatprep.subr.bf16.mxu0 0
    %1840 = vmatpush1.bf16.msra.mxu0 0
    %1841 = vmatprep.subr.bf16.mxu0 0
    %1842 = vmatpush1.bf16.msra.mxu0 0
    %1843 = vmatprep.subr.bf16.mxu0 0
    %1844 = vmatpush1.bf16.msra.mxu0 0
    %1845 = vmatprep.subr.bf16.mxu0 0
    %1846 = vmatpush1.bf16.msra.mxu0 0
    %1847 = vmatprep.subr.bf16.mxu0 0
    %1848 = vmatpush1.bf16.msra.mxu0 0
    %1849 = vmatprep.subr.bf16.mxu0 0
    %1850 = vmatpush1.bf16.msra.mxu0 0
    %1851 = vmatprep.subr.bf16.mxu0 0
    %1852 = vmatpush1.bf16.msra.mxu0 0
    %1853 = vmatprep.subr.bf16.mxu0 0
    %1854 = vmatpush1.bf16.msra.mxu0 0
    %1855 = vmatprep.mubr.bf16.mxu0 0
    %1856 = vmatmul.mubr.bf16.gmra.mrb[0].mxu0 %v1818
    %v1857 = vpop.f32.mrb[0].mxu0
    %v1858 = vadd.f32 0.0, %v1857
    %v1859 = vpop.f32.mrb[0].mxu0
    %v1860 = vpop.f32.mrb[0].mxu0
    %v1861 = vpop.f32.mrb[0].mxu0
    %1862 = vdwg.mxu0
    %v1863 = vadd.f32 %v1809, %v1858
    %v1864 = vrcp.pop %v1813
    %v1865 = vmul.f32 %v1863, %v1864
    %1867 = vrot.lane.b32.xlu0 %v1865, 24
    %v1868 = vpop.permute.xlu0 %1867
    %1870 = vst.msk [vmem:[#allocation2] sm:$0xff] %vm642, %v1868
    %s1871 = scalar_lea.vmem %s2, 1
    %v1872 = vld [vmem:[%s1871] sm:$0x1]
    %v1874 = vlaneseq
    %v1875 = vshrl.u32 %v1874, 7
    %v1876 = vsub.s32 0, %v1875
    %v1877 = vrot.slane %v1872, %v1876
    %v1879 = vrot.slane %v1312, 4
    %v1880 = vrot.slane %v1385, 4
    %v1882 = vsel %vm163, %v1879, 0
    %v1885 = vsel %vm163, %v1880, 0
    %1887 = vmatprep.subr.bf16.mxu0 0
    %1888 = vmatpush1.bf16.xpose.msra.mxu0 %v1885
    %1889 = vmatprep.subr.bf16.mxu0 0
    %1890 = vmatpush1.bf16.xpose.msra.mxu0 0
    %1891 = vmatprep.subr.bf16.mxu0 0
    %1892 = vmatpush1.bf16.xpose.msra.mxu0 0
    %1893 = vmatprep.subr.bf16.mxu0 0
    %1894 = vmatpush1.bf16.xpose.msra.mxu0 0
    %1895 = vmatprep.subr.bf16.mxu0 0
    %1896 = vmatpush1.bf16.xpose.msra.mxu0 0
    %1897 = vmatprep.subr.bf16.mxu0 0
    %1898 = vmatpush1.bf16.xpose.msra.mxu0 0
    %1899 = vmatprep.subr.bf16.mxu0 0
    %1900 = vmatpush1.bf16.xpose.msra.mxu0 0
    %1901 = vmatprep.subr.bf16.mxu0 0
    %1902 = vmatpush1.bf16.xpose.msra.mxu0 0
    %1903 = vmatprep.subr.bf16.mxu0 0
    %1904 = vmatpush1.bf16.xpose.msra.mxu0 0
    %1905 = vmatprep.subr.bf16.mxu0 0
    %1906 = vmatpush1.bf16.xpose.msra.mxu0 0
    %1907 = vmatprep.subr.bf16.mxu0 0
    %1908 = vmatpush1.bf16.xpose.msra.mxu0 0
    %1909 = vmatprep.subr.bf16.mxu0 0
    %1910 = vmatpush1.bf16.xpose.msra.mxu0 0
    %1911 = vmatprep.subr.bf16.mxu0 0
    %1912 = vmatpush1.bf16.xpose.msra.mxu0 0
    %1913 = vmatprep.subr.bf16.mxu0 0
    %1914 = vmatpush1.bf16.xpose.msra.mxu0 0
    %1915 = vmatprep.subr.bf16.mxu0 0
    %1916 = vmatpush1.bf16.xpose.msra.mxu0 0
    %1917 = vmatprep.subr.bf16.mxu0 0
    %1918 = vmatpush1.bf16.xpose.msra.mxu0 0
    %1919 = vmatprep.mubr.bf16.mxu0 0
    %1920 = vmatmul.mubr.bf16.gmra.mrb[0].mxu0 %v1882
    %v1921 = vpop.f32.mrb[0].mxu0
    %v1922 = vadd.f32 %v1877, %v1921
    %v1923 = vpop.f32.mrb[0].mxu0
    %v1924 = vpop.f32.mrb[0].mxu0
    %v1925 = vpop.f32.mrb[0].mxu0
    %1926 = vdwg.mxu0
    %v1927 = vsel %vm163, %v1922, -inf
    %1928 = vmax.xlane.f32.xlu0 %v1927
    %v1929 = vpop.xlane.xlu0 %1928
    %v1930 = vsub.f32 -inf, %v1929
    %v1931 = vmul.f32 %v1930, 1.442695
    %v1932 = vpow.pop %v1931
    %v1933 = vsub.f32 %v1922, %v1929
    %v1934 = vmul.f32 %v1933, 1.442695
    %v1935 = vpow.pop %v1934
    %v1936 = vmul.f32 %v1932, 0.0
    %v1937 = vsel %vm163, %v1935, 0.0
    %1938 = vadd.xlane.f32.xlu0 %v1937
    %v1939 = vpop.xlane.xlu0 %1938
    %v1940 = vadd.f32 %v1936, %v1939
    %v1941 = vpack.c.bf16 %v1935, %v1935
    %1942 = vrot.lane.b32.xlu0 %v1880, 96
    %v1943 = vpop.permute.xlu0 %1942
    %v1945 = vsel %vm163, %v1941, 0
    %v1948 = vsel %vm230, %v1943, 0
    %1950 = vmatprep.subr.bf16.mxu0 0
    %1951 = vmatpush1.bf16.msra.mxu0 %v1948
    %1952 = vmatprep.subr.bf16.mxu0 0
    %1953 = vmatpush1.bf16.msra.mxu0 0
    %1954 = vmatprep.subr.bf16.mxu0 0
    %1955 = vmatpush1.bf16.msra.mxu0 0
    %1956 = vmatprep.subr.bf16.mxu0 0
    %1957 = vmatpush1.bf16.msra.mxu0 0
    %1958 = vmatprep.subr.bf16.mxu0 0
    %1959 = vmatpush1.bf16.msra.mxu0 0
    %1960 = vmatprep.subr.bf16.mxu0 0
    %1961 = vmatpush1.bf16.msra.mxu0 0
    %1962 = vmatprep.subr.bf16.mxu0 0
    %1963 = vmatpush1.bf16.msra.mxu0 0
    %1964 = vmatprep.subr.bf16.mxu0 0
    %1965 = vmatpush1.bf16.msra.mxu0 0
    %1966 = vmatprep.subr.bf16.mxu0 0
    %1967 = vmatpush1.bf16.msra.mxu0 0
    %1968 = vmatprep.subr.bf16.mxu0 0
    %1969 = vmatpush1.bf16.msra.mxu0 0
    %1970 = vmatprep.subr.bf16.mxu0 0
    %1971 = vmatpush1.bf16.msra.mxu0 0
    %1972 = vmatprep.subr.bf16.mxu0 0
    %1973 = vmatpush1.bf16.msra.mxu0 0
    %1974 = vmatprep.subr.bf16.mxu0 0
    %1975 = vmatpush1.bf16.msra.mxu0 0
    %1976 = vmatprep.subr.bf16.mxu0 0
    %1977 = vmatpush1.bf16.msra.mxu0 0
    %1978 = vmatprep.subr.bf16.mxu0 0
    %1979 = vmatpush1.bf16.msra.mxu0 0
    %1980 = vmatprep.subr.bf16.mxu0 0
    %1981 = vmatpush1.bf16.msra.mxu0 0
    %1982 = vmatprep.mubr.bf16.mxu0 0
    %1983 = vmatmul.mubr.bf16.gmra.mrb[0].mxu0 %v1945
    %v1984 = vpop.f32.mrb[0].mxu0
    %v1985 = vadd.f32 0.0, %v1984
    %v1986 = vpop.f32.mrb[0].mxu0
    %v1987 = vpop.f32.mrb[0].mxu0
    %v1988 = vpop.f32.mrb[0].mxu0
    %1989 = vdwg.mxu0
    %v1990 = vadd.f32 %v1936, %v1985
    %v1991 = vrcp.pop %v1940
    %v1992 = vmul.f32 %v1990, %v1991
    %1993 = vst.msk [vmem:[#allocation2 + $0x8] sm:$0xff] %vm163, %v1992
    %1994 = vrot.lane.b32.xlu0 %v1879, 120
    %v1995 = vpop.permute.xlu0 %1994
    %1996 = vrot.lane.b32.xlu0 %v1880, 120
    %v1997 = vpop.permute.xlu0 %1996
    %v1999 = vsel %vm163, %v1995, 0
    %v2002 = vsel %vm163, %v1997, 0
    %2004 = vmatprep.subr.bf16.mxu0 0
    %2005 = vmatpush1.bf16.xpose.msra.mxu0 %v2002
    %2006 = vmatprep.subr.bf16.mxu0 0
    %2007 = vmatpush1.bf16.xpose.msra.mxu0 0
    %2008 = vmatprep.subr.bf16.mxu0 0
    %2009 = vmatpush1.bf16.xpose.msra.mxu0 0
    %2010 = vmatprep.subr.bf16.mxu0 0
    %2011 = vmatpush1.bf16.xpose.msra.mxu0 0
    %2012 = vmatprep.subr.bf16.mxu0 0
    %2013 = vmatpush1.bf16.xpose.msra.mxu0 0
    %2014 = vmatprep.subr.bf16.mxu0 0
    %2015 = vmatpush1.bf16.xpose.msra.mxu0 0
    %2016 = vmatprep.subr.bf16.mxu0 0
    %2017 = vmatpush1.bf16.xpose.msra.mxu0 0
    %2018 = vmatprep.subr.bf16.mxu0 0
    %2019 = vmatpush1.bf16.xpose.msra.mxu0 0
    %2020 = vmatprep.subr.bf16.mxu0 0
    %2021 = vmatpush1.bf16.xpose.msra.mxu0 0
    %2022 = vmatprep.subr.bf16.mxu0 0
    %2023 = vmatpush1.bf16.xpose.msra.mxu0 0
    %2024 = vmatprep.subr.bf16.mxu0 0
    %2025 = vmatpush1.bf16.xpose.msra.mxu0 0
    %2026 = vmatprep.subr.bf16.mxu0 0
    %2027 = vmatpush1.bf16.xpose.msra.mxu0 0
    %2028 = vmatprep.subr.bf16.mxu0 0
    %2029 = vmatpush1.bf16.xpose.msra.mxu0 0
    %2030 = vmatprep.subr.bf16.mxu0 0
    %2031 = vmatpush1.bf16.xpose.msra.mxu0 0
    %2032 = vmatprep.subr.bf16.mxu0 0
    %2033 = vmatpush1.bf16.xpose.msra.mxu0 0
    %2034 = vmatprep.subr.bf16.mxu0 0
    %2035 = vmatpush1.bf16.xpose.msra.mxu0 0
    %2036 = vmatprep.mubr.bf16.mxu0 0
    %2037 = vmatmul.mubr.bf16.gmra.mrb[0].mxu0 %v1999
    %v2038 = vpop.f32.mrb[0].mxu0
    %v2039 = vadd.f32 %v1877, %v2038
    %v2040 = vpop.f32.mrb[0].mxu0
    %v2041 = vpop.f32.mrb[0].mxu0
    %v2042 = vpop.f32.mrb[0].mxu0
    %2043 = vdwg.mxu0
    %v2044 = vsel %vm163, %v2039, -inf
    %2045 = vmax.xlane.f32.xlu0 %v2044
    %v2046 = vpop.xlane.xlu0 %2045
    %v2047 = vsub.f32 -inf, %v2046
    %v2048 = vmul.f32 %v2047, 1.442695
    %v2049 = vpow.pop %v2048
    %v2050 = vsub.f32 %v2039, %v2046
    %v2051 = vmul.f32 %v2050, 1.442695
    %v2052 = vpow.pop %v2051
    %v2053 = vmul.f32 %v2049, 0.0
    %v2054 = vsel %vm163, %v2052, 0.0
    %2055 = vadd.xlane.f32.xlu0 %v2054
    %v2056 = vpop.xlane.xlu0 %2055
    %v2057 = vadd.f32 %v2053, %v2056
    %v2058 = vpack.c.bf16 %v2052, %v2052
    %2059 = vrot.lane.b32.xlu0 %v1880, 88
    %v2060 = vpop.permute.xlu0 %2059
    %v2062 = vsel %vm163, %v2058, 0
    %v2065 = vsel %vm230, %v2060, 0
    %2067 = vmatprep.subr.bf16.mxu0 0
    %2068 = vmatpush1.bf16.msra.mxu0 %v2065
    %2069 = vmatprep.subr.bf16.mxu0 0
    %2070 = vmatpush1.bf16.msra.mxu0 0
    %2071 = vmatprep.subr.bf16.mxu0 0
    %2072 = vmatpush1.bf16.msra.mxu0 0
    %2073 = vmatprep.subr.bf16.mxu0 0
    %2074 = vmatpush1.bf16.msra.mxu0 0
    %2075 = vmatprep.subr.bf16.mxu0 0
    %2076 = vmatpush1.bf16.msra.mxu0 0
    %2077 = vmatprep.subr.bf16.mxu0 0
    %2078 = vmatpush1.bf16.msra.mxu0 0
    %2079 = vmatprep.subr.bf16.mxu0 0
    %2080 = vmatpush1.bf16.msra.mxu0 0
    %2081 = vmatprep.subr.bf16.mxu0 0
    %2082 = vmatpush1.bf16.msra.mxu0 0
    %2083 = vmatprep.subr.bf16.mxu0 0
    %2084 = vmatpush1.bf16.msra.mxu0 0
    %2085 = vmatprep.subr.bf16.mxu0 0
    %2086 = vmatpush1.bf16.msra.mxu0 0
    %2087 = vmatprep.subr.bf16.mxu0 0
    %2088 = vmatpush1.bf16.msra.mxu0 0
    %2089 = vmatprep.subr.bf16.mxu0 0
    %2090 = vmatpush1.bf16.msra.mxu0 0
    %2091 = vmatprep.subr.bf16.mxu0 0
    %2092 = vmatpush1.bf16.msra.mxu0 0
    %2093 = vmatprep.subr.bf16.mxu0 0
    %2094 = vmatpush1.bf16.msra.mxu0 0
    %2095 = vmatprep.subr.bf16.mxu0 0
    %2096 = vmatpush1.bf16.msra.mxu0 0
    %2097 = vmatprep.subr.bf16.mxu0 0
    %2098 = vmatpush1.bf16.msra.mxu0 0
    %2099 = vmatprep.mubr.bf16.mxu0 0
    %2100 = vmatmul.mubr.bf16.gmra.mrb[0].mxu0 %v2062
    %v2101 = vpop.f32.mrb[0].mxu0
    %v2102 = vadd.f32 0.0, %v2101
    %v2103 = vpop.f32.mrb[0].mxu0
    %v2104 = vpop.f32.mrb[0].mxu0
    %v2105 = vpop.f32.mrb[0].mxu0
    %2106 = vdwg.mxu0
    %v2107 = vadd.f32 %v2053, %v2102
    %v2108 = vrcp.pop %v2057
    %v2109 = vmul.f32 %v2107, %v2108
    %2111 = vrot.lane.b32.xlu0 %v2109, 8
    %v2112 = vpop.permute.xlu0 %2111
    %2114 = vst.msk [vmem:[#allocation2 + $0x8] sm:$0xff] %vm398, %v2112
    %2115 = vrot.lane.b32.xlu0 %v1879, 112
    %v2116 = vpop.permute.xlu0 %2115
    %2117 = vrot.lane.b32.xlu0 %v1880, 112
    %v2118 = vpop.permute.xlu0 %2117
    %v2120 = vsel %vm163, %v2116, 0
    %v2123 = vsel %vm163, %v2118, 0
    %2125 = vmatprep.subr.bf16.mxu0 0
    %2126 = vmatpush1.bf16.xpose.msra.mxu0 %v2123
    %2127 = vmatprep.subr.bf16.mxu0 0
    %2128 = vmatpush1.bf16.xpose.msra.mxu0 0
    %2129 = vmatprep.subr.bf16.mxu0 0
    %2130 = vmatpush1.bf16.xpose.msra.mxu0 0
    %2131 = vmatprep.subr.bf16.mxu0 0
    %2132 = vmatpush1.bf16.xpose.msra.mxu0 0
    %2133 = vmatprep.subr.bf16.mxu0 0
    %2134 = vmatpush1.bf16.xpose.msra.mxu0 0
    %2135 = vmatprep.subr.bf16.mxu0 0
    %2136 = vmatpush1.bf16.xpose.msra.mxu0 0
    %2137 = vmatprep.subr.bf16.mxu0 0
    %2138 = vmatpush1.bf16.xpose.msra.mxu0 0
    %2139 = vmatprep.subr.bf16.mxu0 0
    %2140 = vmatpush1.bf16.xpose.msra.mxu0 0
    %2141 = vmatprep.subr.bf16.mxu0 0
    %2142 = vmatpush1.bf16.xpose.msra.mxu0 0
    %2143 = vmatprep.subr.bf16.mxu0 0
    %2144 = vmatpush1.bf16.xpose.msra.mxu0 0
    %2145 = vmatprep.subr.bf16.mxu0 0
    %2146 = vmatpush1.bf16.xpose.msra.mxu0 0
    %2147 = vmatprep.subr.bf16.mxu0 0
    %2148 = vmatpush1.bf16.xpose.msra.mxu0 0
    %2149 = vmatprep.subr.bf16.mxu0 0
    %2150 = vmatpush1.bf16.xpose.msra.mxu0 0
    %2151 = vmatprep.subr.bf16.mxu0 0
    %2152 = vmatpush1.bf16.xpose.msra.mxu0 0
    %2153 = vmatprep.subr.bf16.mxu0 0
    %2154 = vmatpush1.bf16.xpose.msra.mxu0 0
    %2155 = vmatprep.subr.bf16.mxu0 0
    %2156 = vmatpush1.bf16.xpose.msra.mxu0 0
    %2157 = vmatprep.mubr.bf16.mxu0 0
    %2158 = vmatmul.mubr.bf16.gmra.mrb[0].mxu0 %v2120
    %v2159 = vpop.f32.mrb[0].mxu0
    %v2160 = vadd.f32 %v1877, %v2159
    %v2161 = vpop.f32.mrb[0].mxu0
    %v2162 = vpop.f32.mrb[0].mxu0
    %v2163 = vpop.f32.mrb[0].mxu0
    %2164 = vdwg.mxu0
    %v2165 = vsel %vm163, %v2160, -inf
    %2166 = vmax.xlane.f32.xlu0 %v2165
    %v2167 = vpop.xlane.xlu0 %2166
    %v2168 = vsub.f32 -inf, %v2167
    %v2169 = vmul.f32 %v2168, 1.442695
    %v2170 = vpow.pop %v2169
    %v2171 = vsub.f32 %v2160, %v2167
    %v2172 = vmul.f32 %v2171, 1.442695
    %v2173 = vpow.pop %v2172
    %v2174 = vmul.f32 %v2170, 0.0
    %v2175 = vsel %vm163, %v2173, 0.0
    %2176 = vadd.xlane.f32.xlu0 %v2175
    %v2177 = vpop.xlane.xlu0 %2176
    %v2178 = vadd.f32 %v2174, %v2177
    %v2179 = vpack.c.bf16 %v2173, %v2173
    %2180 = vrot.lane.b32.xlu0 %v1880, 80
    %v2181 = vpop.permute.xlu0 %2180
    %v2183 = vsel %vm163, %v2179, 0
    %v2186 = vsel %vm230, %v2181, 0
    %2188 = vmatprep.subr.bf16.mxu0 0
    %2189 = vmatpush1.bf16.msra.mxu0 %v2186
    %2190 = vmatprep.subr.bf16.mxu0 0
    %2191 = vmatpush1.bf16.msra.mxu0 0
    %2192 = vmatprep.subr.bf16.mxu0 0
    %2193 = vmatpush1.bf16.msra.mxu0 0
    %2194 = vmatprep.subr.bf16.mxu0 0
    %2195 = vmatpush1.bf16.msra.mxu0 0
    %2196 = vmatprep.subr.bf16.mxu0 0
    %2197 = vmatpush1.bf16.msra.mxu0 0
    %2198 = vmatprep.subr.bf16.mxu0 0
    %2199 = vmatpush1.bf16.msra.mxu0 0
    %2200 = vmatprep.subr.bf16.mxu0 0
    %2201 = vmatpush1.bf16.msra.mxu0 0
    %2202 = vmatprep.subr.bf16.mxu0 0
    %2203 = vmatpush1.bf16.msra.mxu0 0
    %2204 = vmatprep.subr.bf16.mxu0 0
    %2205 = vmatpush1.bf16.msra.mxu0 0
    %2206 = vmatprep.subr.bf16.mxu0 0
    %2207 = vmatpush1.bf16.msra.mxu0 0
    %2208 = vmatprep.subr.bf16.mxu0 0
    %2209 = vmatpush1.bf16.msra.mxu0 0
    %2210 = vmatprep.subr.bf16.mxu0 0
    %2211 = vmatpush1.bf16.msra.mxu0 0
    %2212 = vmatprep.subr.bf16.mxu0 0
    %2213 = vmatpush1.bf16.msra.mxu0 0
    %2214 = vmatprep.subr.bf16.mxu0 0
    %2215 = vmatpush1.bf16.msra.mxu0 0
    %2216 = vmatprep.subr.bf16.mxu0 0
    %2217 = vmatpush1.bf16.msra.mxu0 0
    %2218 = vmatprep.subr.bf16.mxu0 0
    %2219 = vmatpush1.bf16.msra.mxu0 0
    %2220 = vmatprep.mubr.bf16.mxu0 0
    %2221 = vmatmul.mubr.bf16.gmra.mrb[0].mxu0 %v2183
    %v2222 = vpop.f32.mrb[0].mxu0
    %v2223 = vadd.f32 0.0, %v2222
    %v2224 = vpop.f32.mrb[0].mxu0
    %v2225 = vpop.f32.mrb[0].mxu0
    %v2226 = vpop.f32.mrb[0].mxu0
    %2227 = vdwg.mxu0
    %v2228 = vadd.f32 %v2174, %v2223
    %v2229 = vrcp.pop %v2178
    %v2230 = vmul.f32 %v2228, %v2229
    %2232 = vrot.lane.b32.xlu0 %v2230, 16
    %v2233 = vpop.permute.xlu0 %2232
    %2235 = vst.msk [vmem:[#allocation2 + $0x8] sm:$0xff] %vm520, %v2233
    %2236 = vrot.lane.b32.xlu0 %v1879, 104
    %v2237 = vpop.permute.xlu0 %2236
    %2238 = vrot.lane.b32.xlu0 %v1880, 104
    %v2239 = vpop.permute.xlu0 %2238
    %v2241 = vsel %vm163, %v2237, 0
    %v2244 = vsel %vm163, %v2239, 0
    %2246 = vmatprep.subr.bf16.mxu0 0
    %2247 = vmatpush1.bf16.xpose.msra.mxu0 %v2244
    %2248 = vmatprep.subr.bf16.mxu0 0
    %2249 = vmatpush1.bf16.xpose.msra.mxu0 0
    %2250 = vmatprep.subr.bf16.mxu0 0
    %2251 = vmatpush1.bf16.xpose.msra.mxu0 0
    %2252 = vmatprep.subr.bf16.mxu0 0
    %2253 = vmatpush1.bf16.xpose.msra.mxu0 0
    %2254 = vmatprep.subr.bf16.mxu0 0
    %2255 = vmatpush1.bf16.xpose.msra.mxu0 0
    %2256 = vmatprep.subr.bf16.mxu0 0
    %2257 = vmatpush1.bf16.xpose.msra.mxu0 0
    %2258 = vmatprep.subr.bf16.mxu0 0
    %2259 = vmatpush1.bf16.xpose.msra.mxu0 0
    %2260 = vmatprep.subr.bf16.mxu0 0
    %2261 = vmatpush1.bf16.xpose.msra.mxu0 0
    %2262 = vmatprep.subr.bf16.mxu0 0
    %2263 = vmatpush1.bf16.xpose.msra.mxu0 0
    %2264 = vmatprep.subr.bf16.mxu0 0
    %2265 = vmatpush1.bf16.xpose.msra.mxu0 0
    %2266 = vmatprep.subr.bf16.mxu0 0
    %2267 = vmatpush1.bf16.xpose.msra.mxu0 0
    %2268 = vmatprep.subr.bf16.mxu0 0
    %2269 = vmatpush1.bf16.xpose.msra.mxu0 0
    %2270 = vmatprep.subr.bf16.mxu0 0
    %2271 = vmatpush1.bf16.xpose.msra.mxu0 0
    %2272 = vmatprep.subr.bf16.mxu0 0
    %2273 = vmatpush1.bf16.xpose.msra.mxu0 0
    %2274 = vmatprep.subr.bf16.mxu0 0
    %2275 = vmatpush1.bf16.xpose.msra.mxu0 0
    %2276 = vmatprep.subr.bf16.mxu0 0
    %2277 = vmatpush1.bf16.xpose.msra.mxu0 0
    %2278 = vmatprep.mubr.bf16.mxu0 0
    %2279 = vmatmul.mubr.bf16.gmra.mrb[0].mxu0 %v2241
    %v2280 = vpop.f32.mrb[0].mxu0
    %v2281 = vadd.f32 %v1877, %v2280
    %v2282 = vpop.f32.mrb[0].mxu0
    %v2283 = vpop.f32.mrb[0].mxu0
    %v2284 = vpop.f32.mrb[0].mxu0
    %2285 = vdwg.mxu0
    %v2286 = vsel %vm163, %v2281, -inf
    %2287 = vmax.xlane.f32.xlu0 %v2286
    %v2288 = vpop.xlane.xlu0 %2287
    %v2289 = vsub.f32 -inf, %v2288
    %v2290 = vmul.f32 %v2289, 1.442695
    %v2291 = vpow.pop %v2290
    %v2292 = vsub.f32 %v2281, %v2288
    %v2293 = vmul.f32 %v2292, 1.442695
    %v2294 = vpow.pop %v2293
    %v2295 = vmul.f32 %v2291, 0.0
    %v2296 = vsel %vm163, %v2294, 0.0
    %2297 = vadd.xlane.f32.xlu0 %v2296
    %v2298 = vpop.xlane.xlu0 %2297
    %v2299 = vadd.f32 %v2295, %v2298
    %v2300 = vpack.c.bf16 %v2294, %v2294
    %2301 = vrot.lane.b32.xlu0 %v1880, 72
    %v2302 = vpop.permute.xlu0 %2301
    %v2304 = vsel %vm163, %v2300, 0
    %v2307 = vsel %vm230, %v2302, 0
    %2309 = vmatprep.subr.bf16.mxu0 0
    %2310 = vmatpush1.bf16.msra.mxu0 %v2307
    %2311 = vmatprep.subr.bf16.mxu0 0
    %2312 = vmatpush1.bf16.msra.mxu0 0
    %2313 = vmatprep.subr.bf16.mxu0 0
    %2314 = vmatpush1.bf16.msra.mxu0 0
    %2315 = vmatprep.subr.bf16.mxu0 0
    %2316 = vmatpush1.bf16.msra.mxu0 0
    %2317 = vmatprep.subr.bf16.mxu0 0
    %2318 = vmatpush1.bf16.msra.mxu0 0
    %2319 = vmatprep.subr.bf16.mxu0 0
    %2320 = vmatpush1.bf16.msra.mxu0 0
    %2321 = vmatprep.subr.bf16.mxu0 0
    %2322 = vmatpush1.bf16.msra.mxu0 0
    %2323 = vmatprep.subr.bf16.mxu0 0
    %2324 = vmatpush1.bf16.msra.mxu0 0
    %2325 = vmatprep.subr.bf16.mxu0 0
    %2326 = vmatpush1.bf16.msra.mxu0 0
    %2327 = vmatprep.subr.bf16.mxu0 0
    %2328 = vmatpush1.bf16.msra.mxu0 0
    %2329 = vmatprep.subr.bf16.mxu0 0
    %2330 = vmatpush1.bf16.msra.mxu0 0
    %2331 = vmatprep.subr.bf16.mxu0 0
    %2332 = vmatpush1.bf16.msra.mxu0 0
    %2333 = vmatprep.subr.bf16.mxu0 0
    %2334 = vmatpush1.bf16.msra.mxu0 0
    %2335 = vmatprep.subr.bf16.mxu0 0
    %2336 = vmatpush1.bf16.msra.mxu0 0
    %2337 = vmatprep.subr.bf16.mxu0 0
    %2338 = vmatpush1.bf16.msra.mxu0 0
    %2339 = vmatprep.subr.bf16.mxu0 0
    %2340 = vmatpush1.bf16.msra.mxu0 0
    %2341 = vmatprep.mubr.bf16.mxu0 0
    %2342 = vmatmul.mubr.bf16.gmra.mrb[0].mxu0 %v2304
    %v2343 = vpop.f32.mrb[0].mxu0
    %v2344 = vadd.f32 0.0, %v2343
    %v2345 = vpop.f32.mrb[0].mxu0
    %v2346 = vpop.f32.mrb[0].mxu0
    %v2347 = vpop.f32.mrb[0].mxu0
    %2348 = vdwg.mxu0
    %v2349 = vadd.f32 %v2295, %v2344
    %v2350 = vrcp.pop %v2299
    %v2351 = vmul.f32 %v2349, %v2350
    %2353 = vrot.lane.b32.xlu0 %v2351, 24
    %v2354 = vpop.permute.xlu0 %2353
    %2356 = vst.msk [vmem:[#allocation2 + $0x8] sm:$0xff] %vm642, %v2354
    %v2357 = vld [vmem:[#allocation2] sm:$0xff]
    %v2358 = vld [vmem:[#allocation2 + $0x8] sm:$0xff]
    %v2359 = vpack.c.bf16 %v2358, %v2357
    %v2360 = vld [vmem:[%s12] sm:$0xf]
    %v2361 = vld [vmem:[%s12 + $0x4] sm:$0xf]
    %v2362 = vld [vmem:[%s12 + $0x8] sm:$0xf]
    %v2363 = vld [vmem:[%s12 + $0xc] sm:$0xf]
    %v2364 = vld [vmem:[%s13] sm:$0x1]
    %v2366 = vlaneseq
    %v2367 = vshrl.u32 %v2366, 7
    %v2368 = vsub.s32 0, %v2367
    %v2369 = vrot.slane %v2364, %v2368
    %v2375 = vunpack.c.l.b16 %v2360
    %v2376 = vunpack.c.l.b16 %v2361
    %v2377 = vunpack.c.l.b16 %v2362
    %v2378 = vunpack.c.l.b16 %v2363
    %v2379 = vpack.c.b16 %v2376, %v2375
    %v2380 = vpack.c.b16 %v2378, %v2377
    %v2384 = vsel %vm113, %v2359, 0
    %2386 = vmatprep.subr.bf16.mxu0 0
    %2387 = vmatpush1.bf16.msra.mxu0 %v2379
    %2388 = vmatprep.subr.bf16.mxu0 0
    %2389 = vmatpush1.bf16.msra.mxu0 %v2380
    %2390 = vmatprep.subr.bf16.mxu0 0
    %2391 = vmatpush1.bf16.msra.mxu0 0
    %2392 = vmatprep.subr.bf16.mxu0 0
    %2393 = vmatpush1.bf16.msra.mxu0 0
    %2394 = vmatprep.subr.bf16.mxu0 0
    %2395 = vmatpush1.bf16.msra.mxu0 0
    %2396 = vmatprep.subr.bf16.mxu0 0
    %2397 = vmatpush1.bf16.msra.mxu0 0
    %2398 = vmatprep.subr.bf16.mxu0 0
    %2399 = vmatpush1.bf16.msra.mxu0 0
    %2400 = vmatprep.subr.bf16.mxu0 0
    %2401 = vmatpush1.bf16.msra.mxu0 0
    %2402 = vmatprep.subr.bf16.mxu0 0
    %2403 = vmatpush1.bf16.msra.mxu0 0
    %2404 = vmatprep.subr.bf16.mxu0 0
    %2405 = vmatpush1.bf16.msra.mxu0 0
    %2406 = vmatprep.subr.bf16.mxu0 0
    %2407 = vmatpush1.bf16.msra.mxu0 0
    %2408 = vmatprep.subr.bf16.mxu0 0
    %2409 = vmatpush1.bf16.msra.mxu0 0
    %2410 = vmatprep.subr.bf16.mxu0 0
    %2411 = vmatpush1.bf16.msra.mxu0 0
    %2412 = vmatprep.subr.bf16.mxu0 0
    %2413 = vmatpush1.bf16.msra.mxu0 0
    %2414 = vmatprep.subr.bf16.mxu0 0
    %2415 = vmatpush1.bf16.msra.mxu0 0
    %2416 = vmatprep.subr.bf16.mxu0 0
    %2417 = vmatpush1.bf16.msra.mxu0 0
    %2418 = vmatprep.mubr.bf16.mxu0 0
    %2419 = vmatmul.mubr.bf16.gmra.mrb[0].mxu0 %v2384
    %v2420 = vpop.f32.mrb[0].mxu0
    %v2421 = vadd.f32 %v2369, %v2420
    %v2422 = vpop.f32.mrb[0].mxu0
    %v2423 = vpop.f32.mrb[0].mxu0
    %v2424 = vadd.f32 %v2369, %v2423
    %v2425 = vpop.f32.mrb[0].mxu0
    %2426 = vdwg.mxu0
    %v2427 = vadd.f32 %v1242, %v2421
    %v2428 = vadd.f32 %v1243, %v2424
    %v2429 = vsel %vm113, %v2427, 0.0
    %2430 = vadd.xlane.f32.xlu0 %v2429
    %v2431 = vpop.xlane.xlu0 %2430
    %v2432 = vsel %vm113, %v2428, 0.0
    %2433 = vadd.xlane.f32.xlu0 %v2432
    %v2434 = vpop.xlane.xlu0 %2433
    %v2435 = vmul.f32 %v2431, %v1201
    %v2436 = vmul.f32 %v2434, %v1201
    %v2437 = vmul.f32 %v2427, %v2427
    %v2438 = vmul.f32 %v2428, %v2428
    %v2439 = vsel %vm113, %v2437, 0.0
    %2440 = vadd.xlane.f32.xlu0 %v2439
    %v2441 = vpop.xlane.xlu0 %2440
    %v2442 = vsel %vm113, %v2438, 0.0
    %2443 = vadd.xlane.f32.xlu0 %v2442
    %v2444 = vpop.xlane.xlu0 %2443
    %v2445 = vmul.f32 %v2441, %v1201
    %v2446 = vmul.f32 %v2444, %v1201
    %v2447 = vmul.f32 %v2435, %v2435
    %v2448 = vmul.f32 %v2436, %v2436
    %v2449 = vsub.f32 %v2445, %v2447
    %v2450 = vsub.f32 %v2446, %v2448
    %v2451 = vsub.f32 %v2427, %v2435
    %v2452 = vsub.f32 %v2428, %v2436
    %v2453 = vadd.f32 %v2449, 1e-05
    %v2454 = vadd.f32 %v2450, 1e-05
    %v2455 = vrsqrt.pop %v2453
    %v2456 = vrsqrt.pop %v2454
    %v2457 = vmul.f32 %v2451, %v2455
    %v2458 = vmul.f32 %v2452, %v2456
    %v2459 = vld [vmem:[%s16] sm:$0x1]
    %v2461 = vlaneseq
    %v2462 = vshrl.u32 %v2461, 7
    %v2463 = vsub.s32 0, %v2462
    %v2464 = vrot.slane %v2459, %v2463
    %v2466 = vmul.f32 %v2457, %v2464
    %v2467 = vmul.f32 %v2458, %v2464
    %v2468 = vld [vmem:[%s17] sm:$0x1]
    %v2470 = vlaneseq
    %v2471 = vshrl.u32 %v2470, 7
    %v2472 = vsub.s32 0, %v2471
    %v2473 = vrot.slane %v2468, %v2472
    %v2475 = vadd.f32 %v2466, %v2473
    %v2476 = vadd.f32 %v2467, %v2473
    %v2477 = vpack.c.bf16 %v2476, %v2475
    %v2478 = vld [vmem:[%s18] sm:$0xf]
    %v2479 = vld [vmem:[%s18 + $0x4] sm:$0xf]
    %v2480 = vld [vmem:[%s18 + $0x8] sm:$0xf]
    %v2481 = vld [vmem:[%s18 + $0xc] sm:$0xf]
    %v2482 = vld [vmem:[%s19] sm:$0x1]
    %v2484 = vlaneseq
    %v2485 = vshrl.u32 %v2484, 7
    %v2486 = vsub.s32 0, %v2485
    %v2487 = vrot.slane %v2482, %v2486
    %v2493 = vunpack.c.l.b16 %v2478
    %v2494 = vunpack.c.l.b16 %v2479
    %v2495 = vunpack.c.l.b16 %v2480
    %v2496 = vunpack.c.l.b16 %v2481
    %v2497 = vpack.c.b16 %v2494, %v2493
    %v2498 = vpack.c.b16 %v2496, %v2495
    %v2502 = vsel %vm113, %v2477, 0
    %2504 = vmatprep.subr.bf16.mxu0 0
    %2505 = vmatpush1.bf16.msra.mxu0 %v2497
    %2506 = vmatprep.subr.bf16.mxu0 0
    %2507 = vmatpush1.bf16.msra.mxu0 %v2498
    %2508 = vmatprep.subr.bf16.mxu0 0
    %2509 = vmatpush1.bf16.msra.mxu0 0
    %2510 = vmatprep.subr.bf16.mxu0 0
    %2511 = vmatpush1.bf16.msra.mxu0 0
    %2512 = vmatprep.subr.bf16.mxu0 0
    %2513 = vmatpush1.bf16.msra.mxu0 0
    %2514 = vmatprep.subr.bf16.mxu0 0
    %2515 = vmatpush1.bf16.msra.mxu0 0
    %2516 = vmatprep.subr.bf16.mxu0 0
    %2517 = vmatpush1.bf16.msra.mxu0 0
    %2518 = vmatprep.subr.bf16.mxu0 0
    %2519 = vmatpush1.bf16.msra.mxu0 0
    %2520 = vmatprep.subr.bf16.mxu0 0
    %2521 = vmatpush1.bf16.msra.mxu0 0
    %2522 = vmatprep.subr.bf16.mxu0 0
    %2523 = vmatpush1.bf16.msra.mxu0 0
    %2524 = vmatprep.subr.bf16.mxu0 0
    %2525 = vmatpush1.bf16.msra.mxu0 0
    %2526 = vmatprep.subr.bf16.mxu0 0
    %2527 = vmatpush1.bf16.msra.mxu0 0
    %2528 = vmatprep.subr.bf16.mxu0 0
    %2529 = vmatpush1.bf16.msra.mxu0 0
    %2530 = vmatprep.subr.bf16.mxu0 0
    %2531 = vmatpush1.bf16.msra.mxu0 0
    %2532 = vmatprep.subr.bf16.mxu0 0
    %2533 = vmatpush1.bf16.msra.mxu0 0
    %2534 = vmatprep.subr.bf16.mxu0 0
    %2535 = vmatpush1.bf16.msra.mxu0 0
    %2536 = vmatprep.mubr.bf16.mxu0 0
    %2537 = vmatmul.mubr.bf16.gmra.mrb[0].mxu0 %v2502
    %v2538 = vpop.f32.mrb[0].mxu0
    %v2539 = vadd.f32 %v2487, %v2538
    %v2540 = vpop.f32.mrb[0].mxu0
    %v2541 = vpop.f32.mrb[0].mxu0
    %v2542 = vadd.f32 %v2487, %v2541
    %v2543 = vpop.f32.mrb[0].mxu0
    %2544 = vdwg.mxu0
    %v2545 = vmax.f32 %v2539, 0.0
    %v2546 = vmax.f32 %v2542, 0.0
    %v2547 = vpack.c.bf16 %v2546, %v2545
    %v2548 = vld [vmem:[%s20] sm:$0xf]
    %v2549 = vld [vmem:[%s20 + $0x4] sm:$0xf]
    %v2550 = vld [vmem:[%s20 + $0x8] sm:$0xf]
    %v2551 = vld [vmem:[%s20 + $0xc] sm:$0xf]
    %v2552 = vld [vmem:[%s20 + $0x10] sm:$0xf]
    %v2553 = vld [vmem:[%s20 + $0x14] sm:$0xf]
    %v2554 = vld [vmem:[%s20 + $0x18] sm:$0xf]
    %v2555 = vld [vmem:[%s20 + $0x1c] sm:$0xf]
    %v2556 = vld [vmem:[%s21] sm:$0x1]
    %v2558 = vlaneseq
    %v2559 = vshrl.u32 %v2558, 7
    %v2560 = vsub.s32 0, %v2559
    %v2561 = vrot.slane %v2556, %v2560
    %v2571 = vunpack.c.l.b16 %v2548
    %v2572 = vunpack.c.l.b16 %v2549
    %v2573 = vunpack.c.l.b16 %v2550
    %v2574 = vunpack.c.l.b16 %v2551
    %v2575 = vunpack.c.l.b16 %v2552
    %v2576 = vunpack.c.l.b16 %v2553
    %v2577 = vunpack.c.l.b16 %v2554
    %v2578 = vunpack.c.l.b16 %v2555
    %v2579 = vpack.c.b16 %v2572, %v2571
    %v2580 = vpack.c.b16 %v2574, %v2573
    %v2581 = vpack.c.b16 %v2576, %v2575
    %v2582 = vpack.c.b16 %v2578, %v2577
    %vm2587 = vcmask 523264
    %v2589 = vsel %vm2587, %v2547, 0
    %2591 = vmatprep.subr.bf16.mxu0 0
    %2592 = vmatpush1.bf16.msra.mxu0 %v2579
    %2593 = vmatprep.subr.bf16.mxu0 0
    %2594 = vmatpush1.bf16.msra.mxu0 %v2580
    %2595 = vmatprep.subr.bf16.mxu0 0
    %2596 = vmatpush1.bf16.msra.mxu0 %v2581
    %2597 = vmatprep.subr.bf16.mxu0 0
    %2598 = vmatpush1.bf16.msra.mxu0 %v2582
    %2599 = vmatprep.subr.bf16.mxu0 0
    %2600 = vmatpush1.bf16.msra.mxu0 0
    %2601 = vmatprep.subr.bf16.mxu0 0
    %2602 = vmatpush1.bf16.msra.mxu0 0
    %2603 = vmatprep.subr.bf16.mxu0 0
    %2604 = vmatpush1.bf16.msra.mxu0 0
    %2605 = vmatprep.subr.bf16.mxu0 0
    %2606 = vmatpush1.bf16.msra.mxu0 0
    %2607 = vmatprep.subr.bf16.mxu0 0
    %2608 = vmatpush1.bf16.msra.mxu0 0
    %2609 = vmatprep.subr.bf16.mxu0 0
    %2610 = vmatpush1.bf16.msra.mxu0 0
    %2611 = vmatprep.subr.bf16.mxu0 0
    %2612 = vmatpush1.bf16.msra.mxu0 0
    %2613 = vmatprep.subr.bf16.mxu0 0
    %2614 = vmatpush1.bf16.msra.mxu0 0
    %2615 = vmatprep.subr.bf16.mxu0 0
    %2616 = vmatpush1.bf16.msra.mxu0 0
    %2617 = vmatprep.subr.bf16.mxu0 0
    %2618 = vmatpush1.bf16.msra.mxu0 0
    %2619 = vmatprep.subr.bf16.mxu0 0
    %2620 = vmatpush1.bf16.msra.mxu0 0
    %2621 = vmatprep.subr.bf16.mxu0 0
    %2622 = vmatpush1.bf16.msra.mxu0 0
    %2623 = vmatprep.mubr.bf16.mxu0 0
    %2624 = vmatmul.mubr.bf16.gmra.mrb[0].mxu0 %v2589
    %v2625 = vpop.f32.mrb[0].mxu0
    %v2626 = vadd.f32 %v2561, %v2625
    %v2627 = vpop.f32.mrb[0].mxu0
    %v2628 = vpop.f32.mrb[0].mxu0
    %v2629 = vadd.f32 %v2561, %v2628
    %v2630 = vpop.f32.mrb[0].mxu0
    %2631 = vdwg.mxu0
    %v2632 = vadd.f32 %v2626, %v2626
    %v2633 = vadd.f32 %v2629, %v2629
    %v2634 = vsel %vm113, %v2632, 0.0
    %2635 = vadd.xlane.f32.xlu0 %v2634
    %v2636 = vpop.xlane.xlu0 %2635
    %v2637 = vsel %vm113, %v2633, 0.0
    %2638 = vadd.xlane.f32.xlu0 %v2637
    %v2639 = vpop.xlane.xlu0 %2638
    %v2640 = vmul.f32 %v2636, %v1201
    %v2641 = vmul.f32 %v2639, %v1201
    %v2642 = vmul.f32 %v2632, %v2632
    %v2643 = vmul.f32 %v2633, %v2633
    %v2644 = vsel %vm113, %v2642, 0.0
    %2645 = vadd.xlane.f32.xlu0 %v2644
    %v2646 = vpop.xlane.xlu0 %2645
    %v2647 = vsel %vm113, %v2643, 0.0
    %2648 = vadd.xlane.f32.xlu0 %v2647
    %v2649 = vpop.xlane.xlu0 %2648
    %v2650 = vmul.f32 %v2646, %v1201
    %v2651 = vmul.f32 %v2649, %v1201
    %v2652 = vmul.f32 %v2640, %v2640
    %v2653 = vmul.f32 %v2641, %v2641
    %v2654 = vsub.f32 %v2650, %v2652
    %v2655 = vsub.f32 %v2651, %v2653
    %v2656 = vsub.f32 %v2632, %v2640
    %v2657 = vsub.f32 %v2633, %v2641
    %v2658 = vadd.f32 %v2654, 1e-05
    %v2659 = vadd.f32 %v2655, 1e-05
    %v2660 = vrsqrt.pop %v2658
    %v2661 = vrsqrt.pop %v2659
    %v2662 = vmul.f32 %v2656, %v2660
    %v2663 = vmul.f32 %v2657, %v2661
    %v2664 = vld [vmem:[%s22] sm:$0x1]
    %v2666 = vlaneseq
    %v2667 = vshrl.u32 %v2666, 7
    %v2668 = vsub.s32 0, %v2667
    %v2669 = vrot.slane %v2664, %v2668
    %v2671 = vmul.f32 %v2662, %v2669
    %v2672 = vmul.f32 %v2663, %v2669
    %v2673 = vld [vmem:[%s23] sm:$0x1]
    %v2675 = vlaneseq
    %v2676 = vshrl.u32 %v2675, 7
    %v2677 = vsub.s32 0, %v2676
    %v2678 = vrot.slane %v2673, %v2677
    %v2680 = vadd.f32 %v2671, %v2678
    %v2681 = vadd.f32 %v2672, %v2678
    %v2682 = vpack.c.bf16 %v2681, %v2680
    %v2684 = vunpack.c.l.b16 %v2682
    %v2685 = vunpack.c.h.b16 %v2682
    %v2686 = vpack.c.b16 %v2684, %v2684
    %v2687 = vpack.c.b16 %v2685, %v2685
    %vm2690 = vcmask 257024
    %2691 = vst.msk [vmem:[#allocation3] sm:$0xf] %vm2690, %v2686
    %2692 = vst.msk [vmem:[#allocation3 + $0x4] sm:$0xf] %vm2690, %v2687
    // Predicated region
    $region98: #{transformer_decoder_layer.1} parent=1 // pred_check
      _
    $region99: #{transformer_decoder_layer.1} parent=1 // pred_check_branch
      %2694 = sbr.rel (0) target = $region101
    $region100: #{transformer_decoder_layer.1} parent=1 // pred_region
      %s2696 = ssub.s32 128, 128
      %2697 = vsyncadd [#allocation4], %s2696
      %s2698 = sshll.u32 [#allocation3], 4
      %s2699 = int_to_ptr.vmem [resolvable:$true] %s2698
      %2704 = dma.vmem_to_hbm [thread:$0]  %s2699, 128, %s24, [#allocation4], 64, 64, 4
    $region101: #{transformer_decoder_layer.1} parent=1 // pred_fallthru
      _
    // Predicated region
    $region102: #{transformer_decoder_layer.1} parent=1 // pred_check
      _
    $region103: #{transformer_decoder_layer.1} parent=1 // pred_check_branch
      %2706 = sbr.rel (0) target = $region105
    $region104: #{transformer_decoder_layer.1} parent=1 // pred_region
      %2707 = dma.done [#allocation4], 128
    $region105: #{transformer_decoder_layer.1} parent=1 // pred_fallthru
      _
    %2708 = vsyncpa [#allocation4], 1

</llo_original>
